<compile_context>
chip_gen: v6e
topology: v6e:2x2x1
jax: 0.10.0
libtpu: 0.0.40
codegen_flags: <defaults>
</compile_context>

<pallas_src>
import functools

import jax
import jax.numpy as jnp
from jax.experimental import pallas as pl
from jax.experimental.pallas import tpu as pltpu

INPUT_DIM = 808          # fixed by the module (self.input_dim = 808)
LANE = 128
D_PAD = 896              # 808 rounded up to 7*128; host encoder emits this width
LATENT_DIM = 256         # module default latent_dim


def _round_up(x, m):
    return (x + m - 1) // m * m


def _nnue_kernel(x_ref, w1_ref, b1_ref, w2_ref, b2_ref, latent_ref, value_ref):
    """Fused fc1 + ReLU + value_head for one batch tile.

    x_ref:      [TB, Dp]  int8   (0/1 bits & small counts, zero-padded cols)
    w1_ref:     [Dp, L]   bf16   (fc1.weight.T, zero-padded K rows; VMEM-resident)
    b1_ref:     [1, L]    f32    (fc1.bias; resident)
    w2_ref:     [1, L]    f32    (value_head.weight as lane-dense row; resident)
    b2_ref:     [1, 1]    f32    (value_head.bias; SMEM scalar)
    latent_ref: [TB, L]   bf16   (post-ReLU activations)
    value_ref:  [TB, 1]   f32    (pre-squeeze value)
    """
    # int8 -> bf16 upcast in-kernel: exact for NNUE features (bits / counts),
    # and the VPU cast is free filler because HBM DMA is the binding resource.
    x = x_ref[...].astype(jnp.bfloat16)
    h = jnp.dot(x, w1_ref[...], preferred_element_type=jnp.float32)
    h = jnp.maximum(h + b1_ref[...], 0.0)                  # ReLU (f32)
    latent_ref[...] = h.astype(latent_ref.dtype)           # bf16 write stream
    # Value head (N=1): VPU multiply + lane reduction on the f32 accumulator.
    value_ref[...] = (
        jnp.sum(h * w2_ref[...], axis=-1, keepdims=True) + b2_ref[0, 0]
    )


def prepare_params(fc1_w, fc1_b, vh_w, vh_b, *, matmul_dtype=jnp.bfloat16):
    """One-time host-side weight prep: pad K 808 -> 896, cast, reshape.

    fc1_w: [808, L] (PyTorch fc1.weight transposed), fc1_b: [L]
    vh_w:  [L, 1]   (PyTorch value_head.weight transposed), vh_b: [1]
    """
    d, l = fc1_w.shape
    dp = _round_up(d, LANE)                                      # 808 -> 896
    w1 = jnp.pad(fc1_w.astype(jnp.float32), ((0, dp - d), (0, 0))).astype(matmul_dtype)
    b1 = fc1_b.reshape(1, l).astype(jnp.float32)
    w2 = vh_w.reshape(1, l).astype(jnp.float32)                  # lane-dense row
    b2 = vh_b.reshape(1, 1).astype(jnp.float32)
    return w1, b1, w2, b2


@functools.partial(jax.jit, static_argnames=("tb",))
def king_relative_nnue_forward(feats_i8, w1, b1, w2, b2, *, tb=512):
    """feats_i8: [B, 896] int8 (encoder output; columns 808..895 are zero).

    Returns (latent [B, L] bf16, value [B] f32).
    """
    b, dp = feats_i8.shape
    dp_w, l = w1.shape
    assert dp == dp_w, (dp, dp_w)
    tb = min(tb, b)                       # tiny batches: one (ragged) tile
    n_tiles = pl.cdiv(b, tb)              # ragged grid; Pallas masks last tile

    cost = pl.CostEstimate(
        flops=2 * b * dp * l + 4 * b * l,
        transcendentals=0,
        bytes_accessed=(b * dp * 1                    # int8 features in
                        + dp * l * 2                  # bf16 fc1 weights
                        + (2 * l + 1) * 4             # f32 biases + value row
                        + b * l * 2                   # bf16 latent out
                        + b * 4),                     # f32 value out
    )

    latent, value = pl.pallas_call(
        _nnue_kernel,
        grid=(n_tiles,),
        in_specs=[
            pl.BlockSpec((tb, dp), lambda i: (i, 0)),            # feature tile
            pl.BlockSpec((dp, l), lambda i: (0, 0)),             # w1 resident
            pl.BlockSpec((1, l), lambda i: (0, 0)),              # b1 resident
            pl.BlockSpec((1, l), lambda i: (0, 0)),              # w2 row resident
            pl.BlockSpec(memory_space=pltpu.MemorySpace.SMEM),   # b2 scalar
        ],
        out_specs=[
            pl.BlockSpec((tb, l), lambda i: (i, 0)),             # latent tile
            pl.BlockSpec((tb, 1), lambda i: (i, 0)),             # value tile
        ],
        out_shape=(
            jax.ShapeDtypeStruct((b, l), jnp.bfloat16),          # exact shapes:
            jax.ShapeDtypeStruct((b, 1), jnp.float32),           # no pad/slice
        ),
        compiler_params=pltpu.CompilerParams(
            dimension_semantics=("parallel",),   # batch tiles split across TCs
        ),
        cost_estimate=cost,
    )(feats_i8, w1, b1, w2, b2)

    return latent, value[:, 0]                                    # squeeze(-1)


def _init_params(key, latent_dim=LATENT_DIM, input_dim=INPUT_DIM):
    """Deterministic PyTorch-nn.Linear-style (uniform +/- 1/sqrt(fan_in)) init."""
    k1, k2, k3, k4 = jax.random.split(key, 4)
    lim1 = 1.0 / (input_dim ** 0.5)
    lim2 = 1.0 / (latent_dim ** 0.5)
    fc1_w = jax.random.uniform(k1, (input_dim, latent_dim), jnp.float32, -lim1, lim1)
    fc1_b = jax.random.uniform(k2, (latent_dim,), jnp.float32, -lim1, lim1)
    vh_w = jax.random.uniform(k3, (latent_dim, 1), jnp.float32, -lim2, lim2)
    vh_b = jax.random.uniform(k4, (1,), jnp.float32, -lim2, lim2)
    return fc1_w, fc1_b, vh_w, vh_b


if __name__ == "__main__":
    key = jax.random.PRNGKey(0)
    kp, kb, km = jax.random.split(key, 3)
    fc1_w, fc1_b, vh_w, vh_b = _init_params(kp)
    w1, b1, w2, b2 = prepare_params(fc1_w, fc1_b, vh_w, vh_b)    # one-time prep

    # Synthetic int8 feature batch standing in for encode_board() output:
    # 792 binary bits (768 piece-square + 1 stm + 4 castling + 8 ep + 3
    # halfmove + 8 phase) followed by 16 small material counts, padded to 896.
    # TODO(synk): the board -> 808-dim encoding (python-chess loops) and the
    # zobrist-hash latent cache have no Pallas equivalent; the host encoder is
    # expected to emit int8 rows already padded to 896 columns.
    B = 1040                                  # 3 grid tiles of 512, last ragged
    bits = jax.random.bernoulli(kb, p=0.05, shape=(B, 792)).astype(jnp.int8)
    material = jax.random.randint(km, (B, 16), 0, 9, dtype=jnp.int32).astype(jnp.int8)
    feats = jnp.zeros((B, D_PAD), jnp.int8)
    feats = feats.at[:, :792].set(bits).at[:, 792:INPUT_DIM].set(material)

    latent, value = king_relative_nnue_forward(feats, w1, b1, w2, b2, tb=512)
    jax.block_until_ready((latent, value))

    # Pure-JAX reference against the same bf16-rounded fc1 weights (the kernel
    # accumulates in f32; latent is bf16-rounded only on output).
    feats_f32 = feats.astype(jnp.float32)
    ref_latent = jnp.maximum(
        jnp.dot(feats_f32, w1.astype(jnp.float32),
                precision=jax.lax.Precision.HIGHEST) + fc1_b, 0.0)
    ref_value = jnp.dot(ref_latent, vh_w[:, 0],
                        precision=jax.lax.Precision.HIGHEST) + vh_b[0]

    assert latent.shape == (B, LATENT_DIM) and latent.dtype == jnp.bfloat16
    assert value.shape == (B,) and value.dtype == jnp.float32
    assert jnp.allclose(latent.astype(jnp.float32), ref_latent, atol=2e-2, rtol=2e-2)
    assert jnp.allclose(value, ref_value, atol=2e-3, rtol=1e-3)

    print("KERNEL_OK")
</pallas_src>

<mosaic_0001>
module attributes {stable_mosaic.version = 11 : i64} {
  func.func @_nnue_kernel(%arg0: i32, %arg1: memref<512x896xi8, #tpu.memory_space<vmem>>, %arg2: memref<896x256xbf16, #tpu.memory_space<vmem>>, %arg3: memref<1x256xf32, #tpu.memory_space<vmem>>, %arg4: memref<1x256xf32, #tpu.memory_space<vmem>>, %arg5: memref<1x1xf32, #tpu.memory_space<smem>>, %arg6: memref<512x256xbf16, #tpu.memory_space<vmem>>, %arg7: memref<512x1xf32, #tpu.memory_space<vmem>>) attributes {dimension_semantics = [#tpu.dimension_semantics<parallel>], iteration_bounds = array<i64: 3>, scalar_prefetch = 0 : i64, scratch_operands = 0 : i64, tpu.core_type = #tpu.core_type<tc>, window_params = [{transform_indices = @transform_0, window_bounds = array<i64: 512, 896>}, {pipeline_mode = #tpu.pipeline_mode<synchronous>, transform_indices = @transform_1, window_bounds = array<i64: 896, 256>}, {pipeline_mode = #tpu.pipeline_mode<synchronous>, transform_indices = @transform_2, window_bounds = array<i64: 1, 256>}, {pipeline_mode = #tpu.pipeline_mode<synchronous>, transform_indices = @transform_3, window_bounds = array<i64: 1, 256>}, {transform_indices = @transform_4, window_bounds = array<i64: 1, 1>}, {transform_indices = @transform_5, window_bounds = array<i64: 512, 256>}, {transform_indices = @transform_6, window_bounds = array<i64: 512, 1>}]} {
    %c0 = arith.constant 0 : index
    %c0_0 = arith.constant 0 : index
    %0 = vector.load %arg1[%c0, %c0_0] : memref<512x896xi8, #tpu.memory_space<vmem>>, vector<512x896xi8>
    %1 = arith.sitofp %0 : vector<512x896xi8> to vector<512x896xbf16>
    %c0_1 = arith.constant 0 : index
    %c0_2 = arith.constant 0 : index
    %2 = vector.load %arg2[%c0_1, %c0_2] : memref<896x256xbf16, #tpu.memory_space<vmem>>, vector<896x256xbf16>
    %cst = arith.constant dense<0.000000e+00> : vector<512x256xf32>
    %3 = tpu.matmul %1, %2, %cst {dimension_numbers = #tpu.dot_dimension_numbers<[1], [0], [0], [1], [0, 0, 1, 1], [], []>} : vector<512x896xbf16>, vector<896x256xbf16>, vector<512x256xf32> -> vector<512x256xf32>
    %c0_3 = arith.constant 0 : index
    %c0_4 = arith.constant 0 : index
    %4 = vector.load %arg3[%c0_3, %c0_4] : memref<1x256xf32, #tpu.memory_space<vmem>>, vector<1x256xf32>
    %5 = vector.broadcast %4 : vector<1x256xf32> to vector<512x256xf32>
    %6 = arith.addf %3, %5 : vector<512x256xf32>
    %cst_5 = arith.constant 0.000000e+00 : f32
    %7 = vector.broadcast %cst_5 : f32 to vector<512x256xf32>
    %8 = arith.maximumf %6, %7 : vector<512x256xf32>
    %9 = arith.truncf %8 : vector<512x256xf32> to vector<512x256xbf16>
    %c0_6 = arith.constant 0 : index
    %c0_7 = arith.constant 0 : index
    %10 = vector.load %arg6[%c0_6, %c0_7] : memref<512x256xbf16, #tpu.memory_space<vmem>>, vector<512x256xbf16>
    tpu.vector_store %arg6[%c0_6, %c0_7], %9 {strides = array<i32>} : memref<512x256xbf16, #tpu.memory_space<vmem>>, vector<512x256xbf16>,
    %c0_8 = arith.constant 0 : index
    %c0_9 = arith.constant 0 : index
    %11 = vector.load %arg4[%c0_8, %c0_9] : memref<1x256xf32, #tpu.memory_space<vmem>>, vector<1x256xf32>
    %12 = vector.broadcast %11 : vector<1x256xf32> to vector<512x256xf32>
    %13 = arith.mulf %8, %12 : vector<512x256xf32>
    %cst_10 = arith.constant dense<0.000000e+00> : vector<512xf32>
    %14 = vector.multi_reduction <add>, %13, %cst_10 [1] : vector<512x256xf32> to vector<512xf32>
    %15 = vector.shape_cast %14 : vector<512xf32> to vector<512x1xf32>
    %c0_11 = arith.constant 0 : index
    %c0_12 = arith.constant 0 : index
    %16 = memref.load %arg5[%c0_11, %c0_12] : memref<1x1xf32, #tpu.memory_space<smem>>
    %17 = vector.broadcast %16 : f32 to vector<512x1xf32>
    %18 = arith.addf %15, %17 : vector<512x1xf32>
    %c0_13 = arith.constant 0 : index
    %c0_14 = arith.constant 0 : index
    %19 = vector.load %arg7[%c0_13, %c0_14] : memref<512x1xf32, #tpu.memory_space<vmem>>, vector<512x1xf32>
    tpu.vector_store %arg7[%c0_13, %c0_14], %18 {strides = array<i32>} : memref<512x1xf32, #tpu.memory_space<vmem>>, vector<512x1xf32>,
    return
  }
  func.func @transform_0(%arg0: i32) -> (i32, i32) {
    %c0_i32 = arith.constant 0 : i32
    %c0_i32_0 = arith.constant 0 : i32
    return %arg0, %c0_i32 : i32, i32
  }
  func.func @transform_1(%arg0: i32) -> (i32, i32) {
    %c0_i32 = arith.constant 0 : i32
    %c0_i32_0 = arith.constant 0 : i32
    %c0_i32_1 = arith.constant 0 : i32
    return %c0_i32, %c0_i32_0 : i32, i32
  }
  func.func @transform_2(%arg0: i32) -> (i32, i32) {
    %c0_i32 = arith.constant 0 : i32
    %c0_i32_0 = arith.constant 0 : i32
    %c0_i32_1 = arith.constant 0 : i32
    return %c0_i32, %c0_i32_0 : i32, i32
  }
  func.func @transform_3(%arg0: i32) -> (i32, i32) {
    %c0_i32 = arith.constant 0 : i32
    %c0_i32_0 = arith.constant 0 : i32
    %c0_i32_1 = arith.constant 0 : i32
    return %c0_i32, %c0_i32_0 : i32, i32
  }
  func.func @transform_4(%arg0: i32) -> (i32, i32) {
    %c0_i32 = arith.constant 0 : i32
    %c0_i32_0 = arith.constant 0 : i32
    %c0_i32_1 = arith.constant 0 : i32
    return %c0_i32, %c0_i32_0 : i32, i32
  }
  func.func @transform_5(%arg0: i32) -> (i32, i32) {
    %c0_i32 = arith.constant 0 : i32
    %c0_i32_0 = arith.constant 0 : i32
    return %arg0, %c0_i32 : i32, i32
  }
  func.func @transform_6(%arg0: i32) -> (i32, i32) {
    %c0_i32 = arith.constant 0 : i32
    %c0_i32_0 = arith.constant 0 : i32
    return %arg0, %c0_i32 : i32, i32
  }
}

</mosaic_0001>

<llo_original>
// kernel: king_relative_nnue_forward.1
$region0: #{king_relative_nnue_forward.1}
  #allocation0 [shape = 'u32[]', space=smem, size = 0x4, offset = 0x4, fixed_abs, tag = 'smem constant byte address 0x4 - core index']
  #allocation1 [shape = 'u32[144,128]{1,0:T(1,128)}', space=vmem, size = 0x12000, scoped, tag = 'internal scratch']
  #allocation2 [shape = 'f32[1,1]{1,0:T(1,128)S(6)}', space=smem, size = 0x200, scoped, tag = 'scoped memory for king_relative_nnue_forward.1']
  %s0 = inlined_call_operand.hbm [shape: s8[1040,896], index: 0, kind: input, shape index: {}]
  %s1 = inlined_call_operand.hbm [shape: bf16[896,256], index: 1, kind: input, shape index: {}]
  %s2 = inlined_call_operand.vmem [shape: f32[1,256], index: 2, kind: input, shape index: {}]
  %s3 = inlined_call_operand.vmem [shape: f32[1,256], index: 3, kind: input, shape index: {}]
  %s4 = inlined_call_operand.<no memory space> [shape: f32[1,1], index: 4, kind: input, shape index: {}]
  %s5 = inlined_call_operand.hbm [shape: bf16[1040,256], index: 5, kind: output, shape index: {0}]
  %s6 = inlined_call_operand.vmem [shape: f32[1040,1], index: 6, kind: output, shape index: {1}]
  %7 = xla_tuple %s5, %s6
  %s8 = sld [smem:[#allocation0]]
  $region117: #{king_relative_nnue_forward.1} parent=0
    _
  %s10 = ssub.s32 1, %s8
  %s11 = scalar_select 0, %s10, %s8
  %12 = sst [smem:[#allocation2]] %s4
  $region1: #{king_relative_nnue_forward.1} parent=0
    #allocation3 [shape = 'u8[917504]{0}', space=vmem, size = 0xe0000, scoped, tag = 'input window, operand 0']
    #allocation4 [shape = 's32[2]{0}', space=sflag, size = 0x8, scoped, tag = 'scoped memory for king_relative_nnue_forward.1']
    #allocation5 [shape = 's32[2]{0}', space=sflag, size = 0x8, scoped, tag = 'scoped memory for king_relative_nnue_forward.1']
    #allocation6 [shape = 'u8[458752]{0}', space=vmem, size = 0x70000, scoped, tag = 'input window, operand 1, single buffered']
    #allocation7 [shape = 's32[1]{0}', space=sflag, size = 0x4, scoped, tag = 'scoped memory for king_relative_nnue_forward.1']
    #allocation8 [shape = 'u8[524288]{0}', space=vmem, size = 0x80000, scoped, tag = 'output window, operand 0']
    #allocation9 [shape = 'u8[524288]{0}', space=vmem, size = 0x80000, scoped, tag = 'output window, operand 1']
    %13 = vsyncpa [#allocation4], 0
    %s14 = scalar_lea.sflag [#allocation4], 1
    %15 = vsyncpa %s14, 0
    %16 = vsyncpa [#allocation7], 0
    %17 = vsyncpa [#allocation5], 0
    %s18 = scalar_lea.sflag [#allocation5], 1
    %19 = vsyncpa %s18, 0
    loop: start=0, step=1, limit=5
    $region2: #{king_relative_nnue_forward.1} parent=1 // loop_pre_header
      _
    $region3: #{king_relative_nnue_forward.1} parent=1 // loop_header
      %s21 = sphi 0, %s25
      %p22 = scmp.ge.s32.totalorder %s21, 5
      %s31 = sphi 0, %s33
      %s34 = sphi 0, %s31
      %s35 = sphi 0, %s34
      %s51 = sphi 0, %s35
      %s55 = sphi 0, %s55
      %s57 = sphi 0, %s55
      %s58 = sphi 0, %s57
      %s72 = sphi 0, %s58
      %s76 = sphi 0, %s76
      %s78 = sphi 0, %s76
      %s79 = sphi 0, %s78
      %s93 = sphi 0, %s79
      %s97 = sphi 0, %s97
      %s99 = sphi 0, %s97
      %s100 = sphi 0, %s99
      %s114 = sphi 0, %s100
      %s118 = sphi 0, %s118
      %s120 = sphi 0, %s118
      %s121 = sphi 0, %s120
      %s135 = sphi 0, %s121
      %s141 = sphi 0, %s143
      %s144 = sphi 0, %s141
      %s145 = sphi 0, %s144
      %s161 = sphi 0, %s145
      %s167 = sphi 0, %s169
      %s170 = sphi 0, %s167
      %s171 = sphi 0, %s170
      %s187 = sphi 0, %s171
    $region4: #{king_relative_nnue_forward.1} parent=1 // loop_header_branch
      %24 = sbr.rel (%p22) target = $region8
    $region5: #{king_relative_nnue_forward.1} parent=1 // loop_body
      %s26 = ssub.s32 %s21, 1
      %s27 = ssub.s32 %s21, 2
      %s28 = sadd.s32 %s21, 1
      %s29 = ssub.s32 %s21, %s28
      %p30 = scmp.eq.s32.totalorder %s29, 0
      %s32 = sadd.s32 %s31, 1
      %s33 = scalar_select %p30, %s31, %s32
      %p36 = pneg %p30
      %p37 = scmp.eq.s32.totalorder %s21, 2
      %p38 = por %p36, %p37
      %p39 = scmp.ne.s32.totalorder %s31, %s34
      %p40 = scmp.eq.s32.totalorder %s21, 0
      %p41 = por %p39, %p40
      %p42 = scmp.ne.s32.totalorder %s31, %s34
      %p43 = scmp.eq.s32.totalorder %s26, 2
      %p44 = por %p42, %p43
      %p45 = scmp.ne.s32.totalorder %s34, %s35
      %p46 = scmp.eq.s32.totalorder %s26, 0
      %p47 = por %p45, %p46
      %p48 = scmp.ne.s32.totalorder %s34, %s35
      %p49 = scmp.eq.s32.totalorder %s27, 2
      %p50 = por %p48, %p49
      %p52 = scmp.ne.s32.totalorder %s35, %s51
      %p53 = scmp.eq.s32.totalorder %s27, 0
      %p54 = por %p52, %p53
      %s56 = sadd.s32 %s55, 1
      %p59 = scmp.eq.s32.totalorder %s21, 2
      %p60 = scmp.ne.s32.totalorder %s55, %s57
      %p61 = scmp.eq.s32.totalorder %s21, 0
      %p62 = por %p60, %p61
      %p63 = scmp.ne.s32.totalorder %s55, %s57
      %p64 = scmp.eq.s32.totalorder %s26, 2
      %p65 = por %p63, %p64
      %p66 = scmp.ne.s32.totalorder %s57, %s58
      %p67 = scmp.eq.s32.totalorder %s26, 0
      %p68 = por %p66, %p67
      %p69 = scmp.ne.s32.totalorder %s57, %s58
      %p70 = scmp.eq.s32.totalorder %s27, 2
      %p71 = por %p69, %p70
      %p73 = scmp.ne.s32.totalorder %s58, %s72
      %p74 = scmp.eq.s32.totalorder %s27, 0
      %p75 = por %p73, %p74
      %s77 = sadd.s32 %s76, 1
      %p80 = scmp.eq.s32.totalorder %s21, 2
      %p81 = scmp.ne.s32.totalorder %s76, %s78
      %p82 = scmp.eq.s32.totalorder %s21, 0
      %p83 = por %p81, %p82
      %p84 = scmp.ne.s32.totalorder %s76, %s78
      %p85 = scmp.eq.s32.totalorder %s26, 2
      %p86 = por %p84, %p85
      %p87 = scmp.ne.s32.totalorder %s78, %s79
      %p88 = scmp.eq.s32.totalorder %s26, 0
      %p89 = por %p87, %p88
      %p90 = scmp.ne.s32.totalorder %s78, %s79
      %p91 = scmp.eq.s32.totalorder %s27, 2
      %p92 = por %p90, %p91
      %p94 = scmp.ne.s32.totalorder %s79, %s93
      %p95 = scmp.eq.s32.totalorder %s27, 0
      %p96 = por %p94, %p95
      %s98 = sadd.s32 %s97, 1
      %p101 = scmp.eq.s32.totalorder %s21, 2
      %p102 = scmp.ne.s32.totalorder %s97, %s99
      %p103 = scmp.eq.s32.totalorder %s21, 0
      %p104 = por %p102, %p103
      %p105 = scmp.ne.s32.totalorder %s97, %s99
      %p106 = scmp.eq.s32.totalorder %s26, 2
      %p107 = por %p105, %p106
      %p108 = scmp.ne.s32.totalorder %s99, %s100
      %p109 = scmp.eq.s32.totalorder %s26, 0
      %p110 = por %p108, %p109
      %p111 = scmp.ne.s32.totalorder %s99, %s100
      %p112 = scmp.eq.s32.totalorder %s27, 2
      %p113 = por %p111, %p112
      %p115 = scmp.ne.s32.totalorder %s100, %s114
      %p116 = scmp.eq.s32.totalorder %s27, 0
      %p117 = por %p115, %p116
      %s119 = sadd.s32 %s118, 1
      %p122 = scmp.eq.s32.totalorder %s21, 2
      %p123 = scmp.ne.s32.totalorder %s118, %s120
      %p124 = scmp.eq.s32.totalorder %s21, 0
      %p125 = por %p123, %p124
      %p126 = scmp.ne.s32.totalorder %s118, %s120
      %p127 = scmp.eq.s32.totalorder %s26, 2
      %p128 = por %p126, %p127
      %p129 = scmp.ne.s32.totalorder %s120, %s121
      %p130 = scmp.eq.s32.totalorder %s26, 0
      %p131 = por %p129, %p130
      %p132 = scmp.ne.s32.totalorder %s120, %s121
      %p133 = scmp.eq.s32.totalorder %s27, 2
      %p134 = por %p132, %p133
      %p136 = scmp.ne.s32.totalorder %s121, %s135
      %p137 = scmp.eq.s32.totalorder %s27, 0
      %p138 = por %p136, %p137
      %s139 = ssub.s32 %s21, %s28
      %p140 = scmp.eq.s32.totalorder %s139, 0
      %s142 = sadd.s32 %s141, 1
      %s143 = scalar_select %p140, %s141, %s142
      %p146 = pneg %p140
      %p147 = scmp.eq.s32.totalorder %s21, 2
      %p148 = por %p146, %p147
      %p149 = scmp.ne.s32.totalorder %s141, %s144
      %p150 = scmp.eq.s32.totalorder %s21, 0
      %p151 = por %p149, %p150
      %p152 = scmp.ne.s32.totalorder %s141, %s144
      %p153 = scmp.eq.s32.totalorder %s26, 2
      %p154 = por %p152, %p153
      %p155 = scmp.ne.s32.totalorder %s144, %s145
      %p156 = scmp.eq.s32.totalorder %s26, 0
      %p157 = por %p155, %p156
      %p158 = scmp.ne.s32.totalorder %s144, %s145
      %p159 = scmp.eq.s32.totalorder %s27, 2
      %p160 = por %p158, %p159
      %p162 = scmp.ne.s32.totalorder %s145, %s161
      %p163 = scmp.eq.s32.totalorder %s27, 0
      %p164 = por %p162, %p163
      %s165 = ssub.s32 %s21, %s28
      %p166 = scmp.eq.s32.totalorder %s165, 0
      %s168 = sadd.s32 %s167, 1
      %s169 = scalar_select %p166, %s167, %s168
      %p172 = pneg %p166
      %p173 = scmp.eq.s32.totalorder %s21, 2
      %p174 = por %p172, %p173
      %p175 = scmp.ne.s32.totalorder %s167, %s170
      %p176 = scmp.eq.s32.totalorder %s21, 0
      %p177 = por %p175, %p176
      %p178 = scmp.ne.s32.totalorder %s167, %s170
      %p179 = scmp.eq.s32.totalorder %s26, 2
      %p180 = por %p178, %p179
      %p181 = scmp.ne.s32.totalorder %s170, %s171
      %p182 = scmp.eq.s32.totalorder %s26, 0
      %p183 = por %p181, %p182
      %p184 = scmp.ne.s32.totalorder %s170, %s171
      %p185 = scmp.eq.s32.totalorder %s27, 2
      %p186 = por %p184, %p185
      %p188 = scmp.ne.s32.totalorder %s171, %s187
      %p189 = scmp.eq.s32.totalorder %s27, 0
      %p190 = por %p188, %p189
      %p191 = scmp.le.s32.totalorder 1, %s21
      %p192 = scmp.lt.s32.totalorder %s21, 4
      %p193 = pnand %p191, %p192
      %p194 = pneg %p193
      // Predicated region
      $region9: #{king_relative_nnue_forward.1} parent=5 // pred_check
        _
      $region10: #{king_relative_nnue_forward.1} parent=5 // pred_check_branch
        %196 = sbr.rel (%p193) target = $region12
      $region11: #{king_relative_nnue_forward.1} parent=5 // pred_region
        %s197 = ssub.s32 %s21, 1
        // Predicated region
        $region13: #{king_relative_nnue_forward.1} parent=11 // pred_check
          %p198 = pneg %p68
        $region14: #{king_relative_nnue_forward.1} parent=11 // pred_check_branch
          %200 = sbr.rel (%p198) target = $region16
        $region15: #{king_relative_nnue_forward.1} parent=11 // pred_region
          %s202 = ssub.s32 14336, 14336
          %203 = vsyncadd [#allocation7], %s202
          %s204 = sshll.u32 [#allocation6], 4
          %s205 = int_to_ptr.vmem [resolvable:$true] %s204
          %210 = dma.hbm_to_vmem [thread:$0]  %s1, 14336, %s205, [#allocation7], 128, 128, 8
        $region16: #{king_relative_nnue_forward.1} parent=11 // pred_fallthru
          _
        // Predicated region
        $region17: #{king_relative_nnue_forward.1} parent=11 // pred_check
          %p211 = pneg %p89
        $region18: #{king_relative_nnue_forward.1} parent=11 // pred_check_branch
          %213 = sbr.rel (%p211) target = $region20
        $region19: #{king_relative_nnue_forward.1} parent=11 // pred_region
          _
        $region20: #{king_relative_nnue_forward.1} parent=11 // pred_fallthru
          _
        // Predicated region
        $region21: #{king_relative_nnue_forward.1} parent=11 // pred_check
          %p214 = pneg %p110
        $region22: #{king_relative_nnue_forward.1} parent=11 // pred_check_branch
          %216 = sbr.rel (%p214) target = $region24
        $region23: #{king_relative_nnue_forward.1} parent=11 // pred_region
          _
        $region24: #{king_relative_nnue_forward.1} parent=11 // pred_fallthru
          _
        // Predicated region
        $region25: #{king_relative_nnue_forward.1} parent=11 // pred_check
          %p217 = pneg %p131
        $region26: #{king_relative_nnue_forward.1} parent=11 // pred_check_branch
          %219 = sbr.rel (%p217) target = $region28
        $region27: #{king_relative_nnue_forward.1} parent=11 // pred_region
          _
        $region28: #{king_relative_nnue_forward.1} parent=11 // pred_fallthru
          _
      $region12: #{king_relative_nnue_forward.1} parent=5 // pred_fallthru
        _
      %p220 = scmp.lt.s32.totalorder %s21, 3
      // Predicated region
      $region29: #{king_relative_nnue_forward.1} parent=5 // pred_check
        %p221 = pneg %p220
      $region30: #{king_relative_nnue_forward.1} parent=5 // pred_check_branch
        %223 = sbr.rel (%p221) target = $region32
      $region31: #{king_relative_nnue_forward.1} parent=5 // pred_region
        // Predicated region
        $region33: #{king_relative_nnue_forward.1} parent=31 // pred_check
          %p224 = pneg %p41
        $region34: #{king_relative_nnue_forward.1} parent=31 // pred_check_branch
          %226 = sbr.rel (%p224) target = $region36
        $region35: #{king_relative_nnue_forward.1} parent=31 // pred_region
          %s227 = sand.u32 %s31, 1
          %s228 = scalar_lea.sflag [#allocation4], %s227
          %s229 = sand.u32 %s31, 1
          %s230 = smul.addr %s229, 896
          %s231 = scalar_lea.vmem [#allocation3], %s230
          %s232 = smul.u32 64, %s21
          %s233 = ssub.s32 130, %s232
          %p234 = scmp.lt.s32.totalorder %s233, 64
          %s235 = scalar_select %p234, %s233, 64
          %s236 = smul.u32 32, %s235
          %s237 = smul.u32 %s236, 7
          %s239 = ssub.s32 14336, %s237
          %240 = vsyncadd %s228, %s239
          %p241 = scmp.ne.s32.totalorder 0, %s237
          %s242 = smul.addr %s232, 7
          %s243 = smul.addr %s242, 32
          %s244 = scalar_lea.hbm %s0, %s243
          %s245 = smul.u32 14, %s235
          %s246 = sshll.u32 %s231, 4
          %s247 = int_to_ptr.vmem [resolvable:$true] %s246
          %s248 = sshll.u32 %s245, 4
          %252 = dma.hbm_to_vmem [thread:$0]  (%p241), %s244, %s248, %s247, %s228, 224, 224, 14
        $region36: #{king_relative_nnue_forward.1} parent=31 // pred_fallthru
          _
      $region32: #{king_relative_nnue_forward.1} parent=5 // pred_fallthru
        _
      %p253 = scmp.le.s32.totalorder 1, %s21
      %p254 = scmp.lt.s32.totalorder %s21, 4
      %p255 = pnand %p253, %p254
      %p256 = pneg %p255
      // Predicated region
      $region37: #{king_relative_nnue_forward.1} parent=5 // pred_check
        _
      $region38: #{king_relative_nnue_forward.1} parent=5 // pred_check_branch
        %258 = sbr.rel (%p255) target = $region40
      $region39: #{king_relative_nnue_forward.1} parent=5 // pred_region
        %s259 = ssub.s32 %s21, 1
        %s260 = sand.u32 %s34, 1
        %s261 = scalar_lea.sflag [#allocation4], %s260
        %s262 = sand.u32 %s34, 1
        %s263 = smul.addr %s262, 896
        %s264 = scalar_lea.vmem [#allocation3], %s263
        // Predicated region
        $region41: #{king_relative_nnue_forward.1} parent=39 // pred_check
          %p265 = pneg %p47
        $region42: #{king_relative_nnue_forward.1} parent=39 // pred_check_branch
          %267 = sbr.rel (%p265) target = $region44
        $region43: #{king_relative_nnue_forward.1} parent=39 // pred_region
          %268 = dma.done %s261, 14336
        $region44: #{king_relative_nnue_forward.1} parent=39 // pred_fallthru
          _
        // Predicated region
        $region45: #{king_relative_nnue_forward.1} parent=39 // pred_check
          %p269 = pneg %p68
        $region46: #{king_relative_nnue_forward.1} parent=39 // pred_check_branch
          %271 = sbr.rel (%p269) target = $region48
        $region47: #{king_relative_nnue_forward.1} parent=39 // pred_region
          %272 = dma.done [#allocation7], 14336
        $region48: #{king_relative_nnue_forward.1} parent=39 // pred_fallthru
          _
        %s273 = sand.u32 %s34, 1
        %s274 = scalar_lea.sflag [#allocation4], %s273
        %s275 = sand.u32 %s34, 1
        %s276 = smul.addr %s275, 896
        %s277 = scalar_lea.vmem [#allocation3], %s276
        %p278 = pneg %p47
        %p279 = pneg %p44
        %p280 = pneg %p68
        %p281 = pneg %p65
        %p282 = pneg %p89
        %p283 = pneg %p86
        %p284 = pneg %p110
        %p285 = pneg %p107
        %p286 = pneg %p131
        %p287 = pneg %p128
        %p288 = pneg %p157
        %p289 = pneg %p154
        %s290 = sand.u32 %s144, 1
        %s291 = scalar_lea.sflag [#allocation5], %s290
        %s292 = sand.u32 %s144, 1
        %s293 = smul.addr %s292, 512
        %s294 = scalar_lea.vmem [#allocation8], %s293
        %p295 = pneg %p183
        %p296 = pneg %p180
        %s297 = sand.u32 %s170, 1
        %s298 = sand.u32 %s170, 1
        %s299 = smul.addr %s298, 512
        %s300 = scalar_lea.vmem [#allocation9], %s299
        %s301 = smul.u32 64, %s26
        %s302 = ssub.s32 130, %s301
        %p303 = scmp.lt.s32.totalorder %s302, 64
        %s304 = scalar_select %p303, %s302, 64
        %s305 = smul.u32 32, %s304
        %s306 = smul.u32 %s305, 7
        %s307 = smul.u32 64, %s26
        %s308 = ssub.s32 130, %s307
        %p309 = scmp.lt.s32.totalorder %s308, 64
        %s310 = scalar_select %p309, %s308, 64
        %s311 = smul.u32 64, %s310
        %s312 = smul.u32 %s311, 2
        %s313 = smul.u32 64, %s26
        %s314 = ssub.s32 130, %s313
        %p315 = scmp.lt.s32.totalorder %s314, 64
        %s316 = scalar_select %p315, %s314, 64
        %s317 = smul.u32 128, %s316
        %v319 = vld [vmem:[%s264] sm:$0xff]
        %v320 = vld [vmem:[%s264 + $0x8] sm:$0x3f]
        %v321 = vld [vmem:[%s264 + $0xe] sm:$0xff]
        %v322 = vld [vmem:[%s264 + $0x16] sm:$0x3f]
        %v323 = vld [vmem:[%s264 + $0x1c] sm:$0xff]
        %v324 = vld [vmem:[%s264 + $0x24] sm:$0x3f]
        %v325 = vld [vmem:[%s264 + $0x2a] sm:$0xff]
        %v326 = vld [vmem:[%s264 + $0x32] sm:$0x3f]
        %v327 = vld [vmem:[%s264 + $0x38] sm:$0xff]
        %v328 = vld [vmem:[%s264 + $0x40] sm:$0x3f]
        %v329 = vld [vmem:[%s264 + $0x46] sm:$0xff]
        %v330 = vld [vmem:[%s264 + $0x4e] sm:$0x3f]
        %v331 = vld [vmem:[%s264 + $0x54] sm:$0xff]
        %v332 = vld [vmem:[%s264 + $0x5c] sm:$0x3f]
        %v333 = vld [vmem:[%s264 + $0x62] sm:$0xff]
        %v334 = vld [vmem:[%s264 + $0x6a] sm:$0x3f]
        %v335 = vld [vmem:[%s264 + $0x70] sm:$0xff]
        %v336 = vld [vmem:[%s264 + $0x78] sm:$0x3f]
        %v337 = vld [vmem:[%s264 + $0x7e] sm:$0xff]
        %v338 = vld [vmem:[%s264 + $0x86] sm:$0x3f]
        %v339 = vld [vmem:[%s264 + $0x8c] sm:$0xff]
        %v340 = vld [vmem:[%s264 + $0x94] sm:$0x3f]
        %v341 = vld [vmem:[%s264 + $0x9a] sm:$0xff]
        %v342 = vld [vmem:[%s264 + $0xa2] sm:$0x3f]
        %v343 = vld [vmem:[%s264 + $0xa8] sm:$0xff]
        %v344 = vld [vmem:[%s264 + $0xb0] sm:$0x3f]
        %v345 = vld [vmem:[%s264 + $0xb6] sm:$0xff]
        %v346 = vld [vmem:[%s264 + $0xbe] sm:$0x3f]
        %v347 = vld [vmem:[%s264 + $0xc4] sm:$0xff]
        %v348 = vld [vmem:[%s264 + $0xcc] sm:$0x3f]
        %v349 = vld [vmem:[%s264 + $0xd2] sm:$0xff]
        %v350 = vld [vmem:[%s264 + $0xda] sm:$0x3f]
        %v351 = vld [vmem:[%s264 + $0xe0] sm:$0xff]
        %v352 = vld [vmem:[%s264 + $0xe8] sm:$0x3f]
        %v353 = vld [vmem:[%s264 + $0xee] sm:$0xff]
        %v354 = vld [vmem:[%s264 + $0xf6] sm:$0x3f]
        %v355 = vld [vmem:[%s264 + $0xfc] sm:$0xff]
        %v356 = vld [vmem:[%s264 + $0x104] sm:$0x3f]
        %v357 = vld [vmem:[%s264 + $0x10a] sm:$0xff]
        %v358 = vld [vmem:[%s264 + $0x112] sm:$0x3f]
        %v359 = vld [vmem:[%s264 + $0x118] sm:$0xff]
        %v360 = vld [vmem:[%s264 + $0x120] sm:$0x3f]
        %v361 = vld [vmem:[%s264 + $0x126] sm:$0xff]
        %v362 = vld [vmem:[%s264 + $0x12e] sm:$0x3f]
        %v363 = vld [vmem:[%s264 + $0x134] sm:$0xff]
        %v364 = vld [vmem:[%s264 + $0x13c] sm:$0x3f]
        %v365 = vld [vmem:[%s264 + $0x142] sm:$0xff]
        %v366 = vld [vmem:[%s264 + $0x14a] sm:$0x3f]
        %v367 = vld [vmem:[%s264 + $0x150] sm:$0xff]
        %v368 = vld [vmem:[%s264 + $0x158] sm:$0x3f]
        %v369 = vld [vmem:[%s264 + $0x15e] sm:$0xff]
        %v370 = vld [vmem:[%s264 + $0x166] sm:$0x3f]
        %v371 = vld [vmem:[%s264 + $0x16c] sm:$0xff]
        %v372 = vld [vmem:[%s264 + $0x174] sm:$0x3f]
        %v373 = vld [vmem:[%s264 + $0x17a] sm:$0xff]
        %v374 = vld [vmem:[%s264 + $0x182] sm:$0x3f]
        %v375 = vld [vmem:[%s264 + $0x188] sm:$0xff]
        %v376 = vld [vmem:[%s264 + $0x190] sm:$0x3f]
        %v377 = vld [vmem:[%s264 + $0x196] sm:$0xff]
        %v378 = vld [vmem:[%s264 + $0x19e] sm:$0x3f]
        %v379 = vld [vmem:[%s264 + $0x1a4] sm:$0xff]
        %v380 = vld [vmem:[%s264 + $0x1ac] sm:$0x3f]
        %v381 = vld [vmem:[%s264 + $0x1b2] sm:$0xff]
        %v382 = vld [vmem:[%s264 + $0x1ba] sm:$0x3f]
        %v383 = vld [vmem:[%s264 + $0x1c0] sm:$0xff]
        %v384 = vld [vmem:[%s264 + $0x1c8] sm:$0x3f]
        %v385 = vld [vmem:[%s264 + $0x1ce] sm:$0xff]
        %v386 = vld [vmem:[%s264 + $0x1d6] sm:$0x3f]
        %v387 = vld [vmem:[%s264 + $0x1dc] sm:$0xff]
        %v388 = vld [vmem:[%s264 + $0x1e4] sm:$0x3f]
        %v389 = vld [vmem:[%s264 + $0x1ea] sm:$0xff]
        %v390 = vld [vmem:[%s264 + $0x1f2] sm:$0x3f]
        %v391 = vld [vmem:[%s264 + $0x1f8] sm:$0xff]
        %v392 = vld [vmem:[%s264 + $0x200] sm:$0x3f]
        %v393 = vld [vmem:[%s264 + $0x206] sm:$0xff]
        %v394 = vld [vmem:[%s264 + $0x20e] sm:$0x3f]
        %v395 = vld [vmem:[%s264 + $0x214] sm:$0xff]
        %v396 = vld [vmem:[%s264 + $0x21c] sm:$0x3f]
        %v397 = vld [vmem:[%s264 + $0x222] sm:$0xff]
        %v398 = vld [vmem:[%s264 + $0x22a] sm:$0x3f]
        %v399 = vld [vmem:[%s264 + $0x230] sm:$0xff]
        %v400 = vld [vmem:[%s264 + $0x238] sm:$0x3f]
        %v401 = vld [vmem:[%s264 + $0x23e] sm:$0xff]
        %v402 = vld [vmem:[%s264 + $0x246] sm:$0x3f]
        %v403 = vld [vmem:[%s264 + $0x24c] sm:$0xff]
        %v404 = vld [vmem:[%s264 + $0x254] sm:$0x3f]
        %v405 = vld [vmem:[%s264 + $0x25a] sm:$0xff]
        %v406 = vld [vmem:[%s264 + $0x262] sm:$0x3f]
        %v407 = vld [vmem:[%s264 + $0x268] sm:$0xff]
        %v408 = vld [vmem:[%s264 + $0x270] sm:$0x3f]
        %v409 = vld [vmem:[%s264 + $0x276] sm:$0xff]
        %v410 = vld [vmem:[%s264 + $0x27e] sm:$0x3f]
        %v411 = vld [vmem:[%s264 + $0x284] sm:$0xff]
        %v412 = vld [vmem:[%s264 + $0x28c] sm:$0x3f]
        %v413 = vld [vmem:[%s264 + $0x292] sm:$0xff]
        %v414 = vld [vmem:[%s264 + $0x29a] sm:$0x3f]
        %v415 = vld [vmem:[%s264 + $0x2a0] sm:$0xff]
        %v416 = vld [vmem:[%s264 + $0x2a8] sm:$0x3f]
        %v417 = vld [vmem:[%s264 + $0x2ae] sm:$0xff]
        %v418 = vld [vmem:[%s264 + $0x2b6] sm:$0x3f]
        %v419 = vld [vmem:[%s264 + $0x2bc] sm:$0xff]
        %v420 = vld [vmem:[%s264 + $0x2c4] sm:$0x3f]
        %v421 = vld [vmem:[%s264 + $0x2ca] sm:$0xff]
        %v422 = vld [vmem:[%s264 + $0x2d2] sm:$0x3f]
        %v423 = vld [vmem:[%s264 + $0x2d8] sm:$0xff]
        %v424 = vld [vmem:[%s264 + $0x2e0] sm:$0x3f]
        %v425 = vld [vmem:[%s264 + $0x2e6] sm:$0xff]
        %v426 = vld [vmem:[%s264 + $0x2ee] sm:$0x3f]
        %v427 = vld [vmem:[%s264 + $0x2f4] sm:$0xff]
        %v428 = vld [vmem:[%s264 + $0x2fc] sm:$0x3f]
        %v429 = vld [vmem:[%s264 + $0x302] sm:$0xff]
        %v430 = vld [vmem:[%s264 + $0x30a] sm:$0x3f]
        %v431 = vld [vmem:[%s264 + $0x310] sm:$0xff]
        %v432 = vld [vmem:[%s264 + $0x318] sm:$0x3f]
        %v433 = vld [vmem:[%s264 + $0x31e] sm:$0xff]
        %v434 = vld [vmem:[%s264 + $0x326] sm:$0x3f]
        %v435 = vld [vmem:[%s264 + $0x32c] sm:$0xff]
        %v436 = vld [vmem:[%s264 + $0x334] sm:$0x3f]
        %v437 = vld [vmem:[%s264 + $0x33a] sm:$0xff]
        %v438 = vld [vmem:[%s264 + $0x342] sm:$0x3f]
        %v439 = vld [vmem:[%s264 + $0x348] sm:$0xff]
        %v440 = vld [vmem:[%s264 + $0x350] sm:$0x3f]
        %v441 = vld [vmem:[%s264 + $0x356] sm:$0xff]
        %v442 = vld [vmem:[%s264 + $0x35e] sm:$0x3f]
        %v443 = vld [vmem:[%s264 + $0x364] sm:$0xff]
        %v444 = vld [vmem:[%s264 + $0x36c] sm:$0x3f]
        %v445 = vld [vmem:[%s264 + $0x372] sm:$0xff]
        %v446 = vld [vmem:[%s264 + $0x37a] sm:$0x3f]
        %v447 = vunpack.c.l.s8.bf16 %v319
        %v448 = vunpack.c.h.s8.bf16 %v319
        %v449 = vunpack.c.l.s8.bf16 %v320
        %v450 = vunpack.c.h.s8.bf16 %v320
        %v451 = vunpack.c.l.s8.bf16 %v321
        %v452 = vunpack.c.h.s8.bf16 %v321
        %v453 = vunpack.c.l.s8.bf16 %v322
        %v454 = vunpack.c.h.s8.bf16 %v322
        %v455 = vunpack.c.l.s8.bf16 %v323
        %v456 = vunpack.c.h.s8.bf16 %v323
        %v457 = vunpack.c.l.s8.bf16 %v324
        %v458 = vunpack.c.h.s8.bf16 %v324
        %v459 = vunpack.c.l.s8.bf16 %v325
        %v460 = vunpack.c.h.s8.bf16 %v325
        %v461 = vunpack.c.l.s8.bf16 %v326
        %v462 = vunpack.c.h.s8.bf16 %v326
        %v463 = vunpack.c.l.s8.bf16 %v327
        %v464 = vunpack.c.h.s8.bf16 %v327
        %v465 = vunpack.c.l.s8.bf16 %v328
        %v466 = vunpack.c.h.s8.bf16 %v328
        %v467 = vunpack.c.l.s8.bf16 %v329
        %v468 = vunpack.c.h.s8.bf16 %v329
        %v469 = vunpack.c.l.s8.bf16 %v330
        %v470 = vunpack.c.h.s8.bf16 %v330
        %v471 = vunpack.c.l.s8.bf16 %v331
        %v472 = vunpack.c.h.s8.bf16 %v331
        %v473 = vunpack.c.l.s8.bf16 %v332
        %v474 = vunpack.c.h.s8.bf16 %v332
        %v475 = vunpack.c.l.s8.bf16 %v333
        %v476 = vunpack.c.h.s8.bf16 %v333
        %v477 = vunpack.c.l.s8.bf16 %v334
        %v478 = vunpack.c.h.s8.bf16 %v334
        %v479 = vunpack.c.l.s8.bf16 %v335
        %v480 = vunpack.c.h.s8.bf16 %v335
        %v481 = vunpack.c.l.s8.bf16 %v336
        %v482 = vunpack.c.h.s8.bf16 %v336
        %v483 = vunpack.c.l.s8.bf16 %v337
        %v484 = vunpack.c.h.s8.bf16 %v337
        %v485 = vunpack.c.l.s8.bf16 %v338
        %v486 = vunpack.c.h.s8.bf16 %v338
        %v487 = vunpack.c.l.s8.bf16 %v339
        %v488 = vunpack.c.h.s8.bf16 %v339
        %v489 = vunpack.c.l.s8.bf16 %v340
        %v490 = vunpack.c.h.s8.bf16 %v340
        %v491 = vunpack.c.l.s8.bf16 %v341
        %v492 = vunpack.c.h.s8.bf16 %v341
        %v493 = vunpack.c.l.s8.bf16 %v342
        %v494 = vunpack.c.h.s8.bf16 %v342
        %v495 = vunpack.c.l.s8.bf16 %v343
        %v496 = vunpack.c.h.s8.bf16 %v343
        %v497 = vunpack.c.l.s8.bf16 %v344
        %v498 = vunpack.c.h.s8.bf16 %v344
        %v499 = vunpack.c.l.s8.bf16 %v345
        %v500 = vunpack.c.h.s8.bf16 %v345
        %v501 = vunpack.c.l.s8.bf16 %v346
        %v502 = vunpack.c.h.s8.bf16 %v346
        %v503 = vunpack.c.l.s8.bf16 %v347
        %v504 = vunpack.c.h.s8.bf16 %v347
        %v505 = vunpack.c.l.s8.bf16 %v348
        %v506 = vunpack.c.h.s8.bf16 %v348
        %v507 = vunpack.c.l.s8.bf16 %v349
        %v508 = vunpack.c.h.s8.bf16 %v349
        %v509 = vunpack.c.l.s8.bf16 %v350
        %v510 = vunpack.c.h.s8.bf16 %v350
        %v511 = vunpack.c.l.s8.bf16 %v351
        %v512 = vunpack.c.h.s8.bf16 %v351
        %v513 = vunpack.c.l.s8.bf16 %v352
        %v514 = vunpack.c.h.s8.bf16 %v352
        %v515 = vunpack.c.l.s8.bf16 %v353
        %v516 = vunpack.c.h.s8.bf16 %v353
        %v517 = vunpack.c.l.s8.bf16 %v354
        %v518 = vunpack.c.h.s8.bf16 %v354
        %v519 = vunpack.c.l.s8.bf16 %v355
        %v520 = vunpack.c.h.s8.bf16 %v355
        %v521 = vunpack.c.l.s8.bf16 %v356
        %v522 = vunpack.c.h.s8.bf16 %v356
        %v523 = vunpack.c.l.s8.bf16 %v357
        %v524 = vunpack.c.h.s8.bf16 %v357
        %v525 = vunpack.c.l.s8.bf16 %v358
        %v526 = vunpack.c.h.s8.bf16 %v358
        %v527 = vunpack.c.l.s8.bf16 %v359
        %v528 = vunpack.c.h.s8.bf16 %v359
        %v529 = vunpack.c.l.s8.bf16 %v360
        %v530 = vunpack.c.h.s8.bf16 %v360
        %v531 = vunpack.c.l.s8.bf16 %v361
        %v532 = vunpack.c.h.s8.bf16 %v361
        %v533 = vunpack.c.l.s8.bf16 %v362
        %v534 = vunpack.c.h.s8.bf16 %v362
        %v535 = vunpack.c.l.s8.bf16 %v363
        %v536 = vunpack.c.h.s8.bf16 %v363
        %v537 = vunpack.c.l.s8.bf16 %v364
        %v538 = vunpack.c.h.s8.bf16 %v364
        %v539 = vunpack.c.l.s8.bf16 %v365
        %v540 = vunpack.c.h.s8.bf16 %v365
        %v541 = vunpack.c.l.s8.bf16 %v366
        %v542 = vunpack.c.h.s8.bf16 %v366
        %v543 = vunpack.c.l.s8.bf16 %v367
        %v544 = vunpack.c.h.s8.bf16 %v367
        %v545 = vunpack.c.l.s8.bf16 %v368
        %v546 = vunpack.c.h.s8.bf16 %v368
        %v547 = vunpack.c.l.s8.bf16 %v369
        %v548 = vunpack.c.h.s8.bf16 %v369
        %v549 = vunpack.c.l.s8.bf16 %v370
        %v550 = vunpack.c.h.s8.bf16 %v370
        %v551 = vunpack.c.l.s8.bf16 %v371
        %v552 = vunpack.c.h.s8.bf16 %v371
        %v553 = vunpack.c.l.s8.bf16 %v372
        %v554 = vunpack.c.h.s8.bf16 %v372
        %v555 = vunpack.c.l.s8.bf16 %v373
        %v556 = vunpack.c.h.s8.bf16 %v373
        %v557 = vunpack.c.l.s8.bf16 %v374
        %v558 = vunpack.c.h.s8.bf16 %v374
        %v559 = vunpack.c.l.s8.bf16 %v375
        %v560 = vunpack.c.h.s8.bf16 %v375
        %v561 = vunpack.c.l.s8.bf16 %v376
        %v562 = vunpack.c.h.s8.bf16 %v376
        %v563 = vunpack.c.l.s8.bf16 %v377
        %v564 = vunpack.c.h.s8.bf16 %v377
        %v565 = vunpack.c.l.s8.bf16 %v378
        %v566 = vunpack.c.h.s8.bf16 %v378
        %v567 = vunpack.c.l.s8.bf16 %v379
        %v568 = vunpack.c.h.s8.bf16 %v379
        %v569 = vunpack.c.l.s8.bf16 %v380
        %v570 = vunpack.c.h.s8.bf16 %v380
        %v571 = vunpack.c.l.s8.bf16 %v381
        %v572 = vunpack.c.h.s8.bf16 %v381
        %v573 = vunpack.c.l.s8.bf16 %v382
        %v574 = vunpack.c.h.s8.bf16 %v382
        %v575 = vunpack.c.l.s8.bf16 %v383
        %v576 = vunpack.c.h.s8.bf16 %v383
        %v577 = vunpack.c.l.s8.bf16 %v384
        %v578 = vunpack.c.h.s8.bf16 %v384
        %v579 = vunpack.c.l.s8.bf16 %v385
        %v580 = vunpack.c.h.s8.bf16 %v385
        %v581 = vunpack.c.l.s8.bf16 %v386
        %v582 = vunpack.c.h.s8.bf16 %v386
        %v583 = vunpack.c.l.s8.bf16 %v387
        %v584 = vunpack.c.h.s8.bf16 %v387
        %v585 = vunpack.c.l.s8.bf16 %v388
        %v586 = vunpack.c.h.s8.bf16 %v388
        %v587 = vunpack.c.l.s8.bf16 %v389
        %v588 = vunpack.c.h.s8.bf16 %v389
        %v589 = vunpack.c.l.s8.bf16 %v390
        %v590 = vunpack.c.h.s8.bf16 %v390
        %v591 = vunpack.c.l.s8.bf16 %v391
        %v592 = vunpack.c.h.s8.bf16 %v391
        %v593 = vunpack.c.l.s8.bf16 %v392
        %v594 = vunpack.c.h.s8.bf16 %v392
        %v595 = vunpack.c.l.s8.bf16 %v393
        %v596 = vunpack.c.h.s8.bf16 %v393
        %v597 = vunpack.c.l.s8.bf16 %v394
        %v598 = vunpack.c.h.s8.bf16 %v394
        %v599 = vunpack.c.l.s8.bf16 %v395
        %v600 = vunpack.c.h.s8.bf16 %v395
        %v601 = vunpack.c.l.s8.bf16 %v396
        %v602 = vunpack.c.h.s8.bf16 %v396
        %v603 = vunpack.c.l.s8.bf16 %v397
        %v604 = vunpack.c.h.s8.bf16 %v397
        %v605 = vunpack.c.l.s8.bf16 %v398
        %v606 = vunpack.c.h.s8.bf16 %v398
        %v607 = vunpack.c.l.s8.bf16 %v399
        %v608 = vunpack.c.h.s8.bf16 %v399
        %v609 = vunpack.c.l.s8.bf16 %v400
        %v610 = vunpack.c.h.s8.bf16 %v400
        %v611 = vunpack.c.l.s8.bf16 %v401
        %v612 = vunpack.c.h.s8.bf16 %v401
        %v613 = vunpack.c.l.s8.bf16 %v402
        %v614 = vunpack.c.h.s8.bf16 %v402
        %v615 = vunpack.c.l.s8.bf16 %v403
        %v616 = vunpack.c.h.s8.bf16 %v403
        %v617 = vunpack.c.l.s8.bf16 %v404
        %v618 = vunpack.c.h.s8.bf16 %v404
        %v619 = vunpack.c.l.s8.bf16 %v405
        %v620 = vunpack.c.h.s8.bf16 %v405
        %v621 = vunpack.c.l.s8.bf16 %v406
        %v622 = vunpack.c.h.s8.bf16 %v406
        %v623 = vunpack.c.l.s8.bf16 %v407
        %v624 = vunpack.c.h.s8.bf16 %v407
        %v625 = vunpack.c.l.s8.bf16 %v408
        %v626 = vunpack.c.h.s8.bf16 %v408
        %v627 = vunpack.c.l.s8.bf16 %v409
        %v628 = vunpack.c.h.s8.bf16 %v409
        %v629 = vunpack.c.l.s8.bf16 %v410
        %v630 = vunpack.c.h.s8.bf16 %v410
        %v631 = vunpack.c.l.s8.bf16 %v411
        %v632 = vunpack.c.h.s8.bf16 %v411
        %v633 = vunpack.c.l.s8.bf16 %v412
        %v634 = vunpack.c.h.s8.bf16 %v412
        %v635 = vunpack.c.l.s8.bf16 %v413
        %v636 = vunpack.c.h.s8.bf16 %v413
        %v637 = vunpack.c.l.s8.bf16 %v414
        %v638 = vunpack.c.h.s8.bf16 %v414
        %v639 = vunpack.c.l.s8.bf16 %v415
        %v640 = vunpack.c.h.s8.bf16 %v415
        %v641 = vunpack.c.l.s8.bf16 %v416
        %v642 = vunpack.c.h.s8.bf16 %v416
        %v643 = vunpack.c.l.s8.bf16 %v417
        %v644 = vunpack.c.h.s8.bf16 %v417
        %v645 = vunpack.c.l.s8.bf16 %v418
        %v646 = vunpack.c.h.s8.bf16 %v418
        %v647 = vunpack.c.l.s8.bf16 %v419
        %v648 = vunpack.c.h.s8.bf16 %v419
        %v649 = vunpack.c.l.s8.bf16 %v420
        %v650 = vunpack.c.h.s8.bf16 %v420
        %v651 = vunpack.c.l.s8.bf16 %v421
        %v652 = vunpack.c.h.s8.bf16 %v421
        %v653 = vunpack.c.l.s8.bf16 %v422
        %v654 = vunpack.c.h.s8.bf16 %v422
        %v655 = vunpack.c.l.s8.bf16 %v423
        %v656 = vunpack.c.h.s8.bf16 %v423
        %v657 = vunpack.c.l.s8.bf16 %v424
        %v658 = vunpack.c.h.s8.bf16 %v424
        %v659 = vunpack.c.l.s8.bf16 %v425
        %v660 = vunpack.c.h.s8.bf16 %v425
        %v661 = vunpack.c.l.s8.bf16 %v426
        %v662 = vunpack.c.h.s8.bf16 %v426
        %v663 = vunpack.c.l.s8.bf16 %v427
        %v664 = vunpack.c.h.s8.bf16 %v427
        %v665 = vunpack.c.l.s8.bf16 %v428
        %v666 = vunpack.c.h.s8.bf16 %v428
        %v667 = vunpack.c.l.s8.bf16 %v429
        %v668 = vunpack.c.h.s8.bf16 %v429
        %v669 = vunpack.c.l.s8.bf16 %v430
        %v670 = vunpack.c.h.s8.bf16 %v430
        %v671 = vunpack.c.l.s8.bf16 %v431
        %v672 = vunpack.c.h.s8.bf16 %v431
        %v673 = vunpack.c.l.s8.bf16 %v432
        %v674 = vunpack.c.h.s8.bf16 %v432
        %v675 = vunpack.c.l.s8.bf16 %v433
        %v676 = vunpack.c.h.s8.bf16 %v433
        %v677 = vunpack.c.l.s8.bf16 %v434
        %v678 = vunpack.c.h.s8.bf16 %v434
        %v679 = vunpack.c.l.s8.bf16 %v435
        %v680 = vunpack.c.h.s8.bf16 %v435
        %v681 = vunpack.c.l.s8.bf16 %v436
        %v682 = vunpack.c.h.s8.bf16 %v436
        %v683 = vunpack.c.l.s8.bf16 %v437
        %v684 = vunpack.c.h.s8.bf16 %v437
        %v685 = vunpack.c.l.s8.bf16 %v438
        %v686 = vunpack.c.h.s8.bf16 %v438
        %v687 = vunpack.c.l.s8.bf16 %v439
        %v688 = vunpack.c.h.s8.bf16 %v439
        %v689 = vunpack.c.l.s8.bf16 %v440
        %v690 = vunpack.c.h.s8.bf16 %v440
        %v691 = vunpack.c.l.s8.bf16 %v441
        %v692 = vunpack.c.h.s8.bf16 %v441
        %v693 = vunpack.c.l.s8.bf16 %v442
        %v694 = vunpack.c.h.s8.bf16 %v442
        %v695 = vunpack.c.l.s8.bf16 %v443
        %v696 = vunpack.c.h.s8.bf16 %v443
        %v697 = vunpack.c.l.s8.bf16 %v444
        %v698 = vunpack.c.h.s8.bf16 %v444
        %v699 = vunpack.c.l.s8.bf16 %v445
        %v700 = vunpack.c.h.s8.bf16 %v445
        %v701 = vunpack.c.l.s8.bf16 %v446
        %v702 = vunpack.c.h.s8.bf16 %v446
        %v703 = vld [vmem:[#allocation6] sm:$0xff]
        %v704 = vld [vmem:[#allocation6 + $0x8] sm:$0xff]
        %v705 = vld [vmem:[#allocation6 + $0x10] sm:$0xff]
        %v706 = vld [vmem:[#allocation6 + $0x18] sm:$0xff]
        %v707 = vld [vmem:[#allocation6 + $0x20] sm:$0xff]
        %v708 = vld [vmem:[#allocation6 + $0x28] sm:$0xff]
        %v709 = vld [vmem:[#allocation6 + $0x30] sm:$0xff]
        %v710 = vld [vmem:[#allocation6 + $0x38] sm:$0xff]
        %v711 = vld [vmem:[#allocation6 + $0x40] sm:$0xff]
        %v712 = vld [vmem:[#allocation6 + $0x48] sm:$0xff]
        %v713 = vld [vmem:[#allocation6 + $0x50] sm:$0xff]
        %v714 = vld [vmem:[#allocation6 + $0x58] sm:$0xff]
        %v715 = vld [vmem:[#allocation6 + $0x60] sm:$0xff]
        %v716 = vld [vmem:[#allocation6 + $0x68] sm:$0xff]
        %v717 = vld [vmem:[#allocation6 + $0x70] sm:$0xff]
        %v718 = vld [vmem:[#allocation6 + $0x78] sm:$0xff]
        %v719 = vld [vmem:[#allocation6 + $0x80] sm:$0xff]
        %v720 = vld [vmem:[#allocation6 + $0x88] sm:$0xff]
        %v721 = vld [vmem:[#allocation6 + $0x90] sm:$0xff]
        %v722 = vld [vmem:[#allocation6 + $0x98] sm:$0xff]
        %v723 = vld [vmem:[#allocation6 + $0xa0] sm:$0xff]
        %v724 = vld [vmem:[#allocation6 + $0xa8] sm:$0xff]
        %v725 = vld [vmem:[#allocation6 + $0xb0] sm:$0xff]
        %v726 = vld [vmem:[#allocation6 + $0xb8] sm:$0xff]
        %v727 = vld [vmem:[#allocation6 + $0xc0] sm:$0xff]
        %v728 = vld [vmem:[#allocation6 + $0xc8] sm:$0xff]
        %v729 = vld [vmem:[#allocation6 + $0xd0] sm:$0xff]
        %v730 = vld [vmem:[#allocation6 + $0xd8] sm:$0xff]
        %v731 = vld [vmem:[#allocation6 + $0xe0] sm:$0xff]
        %v732 = vld [vmem:[#allocation6 + $0xe8] sm:$0xff]
        %v733 = vld [vmem:[#allocation6 + $0xf0] sm:$0xff]
        %v734 = vld [vmem:[#allocation6 + $0xf8] sm:$0xff]
        %v735 = vld [vmem:[#allocation6 + $0x100] sm:$0xff]
        %v736 = vld [vmem:[#allocation6 + $0x108] sm:$0xff]
        %v737 = vld [vmem:[#allocation6 + $0x110] sm:$0xff]
        %v738 = vld [vmem:[#allocation6 + $0x118] sm:$0xff]
        %v739 = vld [vmem:[#allocation6 + $0x120] sm:$0xff]
        %v740 = vld [vmem:[#allocation6 + $0x128] sm:$0xff]
        %v741 = vld [vmem:[#allocation6 + $0x130] sm:$0xff]
        %v742 = vld [vmem:[#allocation6 + $0x138] sm:$0xff]
        %v743 = vld [vmem:[#allocation6 + $0x140] sm:$0xff]
        %v744 = vld [vmem:[#allocation6 + $0x148] sm:$0xff]
        %v745 = vld [vmem:[#allocation6 + $0x150] sm:$0xff]
        %v746 = vld [vmem:[#allocation6 + $0x158] sm:$0xff]
        %v747 = vld [vmem:[#allocation6 + $0x160] sm:$0xff]
        %v748 = vld [vmem:[#allocation6 + $0x168] sm:$0xff]
        %v749 = vld [vmem:[#allocation6 + $0x170] sm:$0xff]
        %v750 = vld [vmem:[#allocation6 + $0x178] sm:$0xff]
        %v751 = vld [vmem:[#allocation6 + $0x180] sm:$0xff]
        %v752 = vld [vmem:[#allocation6 + $0x188] sm:$0xff]
        %v753 = vld [vmem:[#allocation6 + $0x190] sm:$0xff]
        %v754 = vld [vmem:[#allocation6 + $0x198] sm:$0xff]
        %v755 = vld [vmem:[#allocation6 + $0x1a0] sm:$0xff]
        %v756 = vld [vmem:[#allocation6 + $0x1a8] sm:$0xff]
        %v757 = vld [vmem:[#allocation6 + $0x1b0] sm:$0xff]
        %v758 = vld [vmem:[#allocation6 + $0x1b8] sm:$0xff]
        %v759 = vld [vmem:[#allocation6 + $0x1c0] sm:$0xff]
        %v760 = vld [vmem:[#allocation6 + $0x1c8] sm:$0xff]
        %v761 = vld [vmem:[#allocation6 + $0x1d0] sm:$0xff]
        %v762 = vld [vmem:[#allocation6 + $0x1d8] sm:$0xff]
        %v763 = vld [vmem:[#allocation6 + $0x1e0] sm:$0xff]
        %v764 = vld [vmem:[#allocation6 + $0x1e8] sm:$0xff]
        %v765 = vld [vmem:[#allocation6 + $0x1f0] sm:$0xff]
        %v766 = vld [vmem:[#allocation6 + $0x1f8] sm:$0xff]
        %v767 = vld [vmem:[#allocation6 + $0x200] sm:$0xff]
        %v768 = vld [vmem:[#allocation6 + $0x208] sm:$0xff]
        %v769 = vld [vmem:[#allocation6 + $0x210] sm:$0xff]
        %v770 = vld [vmem:[#allocation6 + $0x218] sm:$0xff]
        %v771 = vld [vmem:[#allocation6 + $0x220] sm:$0xff]
        %v772 = vld [vmem:[#allocation6 + $0x228] sm:$0xff]
        %v773 = vld [vmem:[#allocation6 + $0x230] sm:$0xff]
        %v774 = vld [vmem:[#allocation6 + $0x238] sm:$0xff]
        %v775 = vld [vmem:[#allocation6 + $0x240] sm:$0xff]
        %v776 = vld [vmem:[#allocation6 + $0x248] sm:$0xff]
        %v777 = vld [vmem:[#allocation6 + $0x250] sm:$0xff]
        %v778 = vld [vmem:[#allocation6 + $0x258] sm:$0xff]
        %v779 = vld [vmem:[#allocation6 + $0x260] sm:$0xff]
        %v780 = vld [vmem:[#allocation6 + $0x268] sm:$0xff]
        %v781 = vld [vmem:[#allocation6 + $0x270] sm:$0xff]
        %v782 = vld [vmem:[#allocation6 + $0x278] sm:$0xff]
        %v783 = vld [vmem:[#allocation6 + $0x280] sm:$0xff]
        %v784 = vld [vmem:[#allocation6 + $0x288] sm:$0xff]
        %v785 = vld [vmem:[#allocation6 + $0x290] sm:$0xff]
        %v786 = vld [vmem:[#allocation6 + $0x298] sm:$0xff]
        %v787 = vld [vmem:[#allocation6 + $0x2a0] sm:$0xff]
        %v788 = vld [vmem:[#allocation6 + $0x2a8] sm:$0xff]
        %v789 = vld [vmem:[#allocation6 + $0x2b0] sm:$0xff]
        %v790 = vld [vmem:[#allocation6 + $0x2b8] sm:$0xff]
        %v791 = vld [vmem:[#allocation6 + $0x2c0] sm:$0xff]
        %v792 = vld [vmem:[#allocation6 + $0x2c8] sm:$0xff]
        %v793 = vld [vmem:[#allocation6 + $0x2d0] sm:$0xff]
        %v794 = vld [vmem:[#allocation6 + $0x2d8] sm:$0xff]
        %v795 = vld [vmem:[#allocation6 + $0x2e0] sm:$0xff]
        %v796 = vld [vmem:[#allocation6 + $0x2e8] sm:$0xff]
        %v797 = vld [vmem:[#allocation6 + $0x2f0] sm:$0xff]
        %v798 = vld [vmem:[#allocation6 + $0x2f8] sm:$0xff]
        %v799 = vld [vmem:[#allocation6 + $0x300] sm:$0xff]
        %v800 = vld [vmem:[#allocation6 + $0x308] sm:$0xff]
        %v801 = vld [vmem:[#allocation6 + $0x310] sm:$0xff]
        %v802 = vld [vmem:[#allocation6 + $0x318] sm:$0xff]
        %v803 = vld [vmem:[#allocation6 + $0x320] sm:$0xff]
        %v804 = vld [vmem:[#allocation6 + $0x328] sm:$0xff]
        %v805 = vld [vmem:[#allocation6 + $0x330] sm:$0xff]
        %v806 = vld [vmem:[#allocation6 + $0x338] sm:$0xff]
        %v807 = vld [vmem:[#allocation6 + $0x340] sm:$0xff]
        %v808 = vld [vmem:[#allocation6 + $0x348] sm:$0xff]
        %v809 = vld [vmem:[#allocation6 + $0x350] sm:$0xff]
        %v810 = vld [vmem:[#allocation6 + $0x358] sm:$0xff]
        %v811 = vld [vmem:[#allocation6 + $0x360] sm:$0xff]
        %v812 = vld [vmem:[#allocation6 + $0x368] sm:$0xff]
        %v813 = vld [vmem:[#allocation6 + $0x370] sm:$0xff]
        %v814 = vld [vmem:[#allocation6 + $0x378] sm:$0xff]
        %v815 = vld [vmem:[%s2] sm:$0x3]
        %v817 = vlaneseq
        %v818 = vshrl.u32 %v817, 7
        %v819 = vsub.s32 0, %v818
        %v820 = vrot.slane %v815, %v819
        %v821 = vlaneseq
        %v822 = vshrl.u32 %v821, 7
        %v823 = vsub.s32 1, %v822
        %v824 = vrot.slane %v815, %v823
        %v1083 = vunpack.c.l.b16 %v447
        %v1084 = vunpack.c.h.b16 %v447
        %v1085 = vunpack.c.l.b16 %v448
        %v1086 = vunpack.c.h.b16 %v448
        %v1087 = vunpack.c.l.b16 %v449
        %v1088 = vunpack.c.h.b16 %v449
        %v1089 = vunpack.c.l.b16 %v450
        %v1090 = vunpack.c.l.b16 %v451
        %v1091 = vunpack.c.h.b16 %v451
        %v1092 = vunpack.c.l.b16 %v452
        %v1093 = vunpack.c.h.b16 %v452
        %v1094 = vunpack.c.l.b16 %v453
        %v1095 = vunpack.c.h.b16 %v453
        %v1096 = vunpack.c.l.b16 %v454
        %v1097 = vunpack.c.l.b16 %v455
        %v1098 = vunpack.c.h.b16 %v455
        %v1099 = vunpack.c.l.b16 %v456
        %v1100 = vunpack.c.h.b16 %v456
        %v1101 = vunpack.c.l.b16 %v457
        %v1102 = vunpack.c.h.b16 %v457
        %v1103 = vunpack.c.l.b16 %v458
        %v1104 = vunpack.c.l.b16 %v459
        %v1105 = vunpack.c.h.b16 %v459
        %v1106 = vunpack.c.l.b16 %v460
        %v1107 = vunpack.c.h.b16 %v460
        %v1108 = vunpack.c.l.b16 %v461
        %v1109 = vunpack.c.h.b16 %v461
        %v1110 = vunpack.c.l.b16 %v462
        %v1111 = vunpack.c.l.b16 %v463
        %v1112 = vunpack.c.h.b16 %v463
        %v1113 = vunpack.c.l.b16 %v464
        %v1114 = vunpack.c.h.b16 %v464
        %v1115 = vunpack.c.l.b16 %v465
        %v1116 = vunpack.c.h.b16 %v465
        %v1117 = vunpack.c.l.b16 %v466
        %v1118 = vunpack.c.l.b16 %v467
        %v1119 = vunpack.c.h.b16 %v467
        %v1120 = vunpack.c.l.b16 %v468
        %v1121 = vunpack.c.h.b16 %v468
        %v1122 = vunpack.c.l.b16 %v469
        %v1123 = vunpack.c.h.b16 %v469
        %v1124 = vunpack.c.l.b16 %v470
        %v1125 = vunpack.c.l.b16 %v471
        %v1126 = vunpack.c.h.b16 %v471
        %v1127 = vunpack.c.l.b16 %v472
        %v1128 = vunpack.c.h.b16 %v472
        %v1129 = vunpack.c.l.b16 %v473
        %v1130 = vunpack.c.h.b16 %v473
        %v1131 = vunpack.c.l.b16 %v474
        %v1132 = vunpack.c.l.b16 %v475
        %v1133 = vunpack.c.h.b16 %v475
        %v1134 = vunpack.c.l.b16 %v476
        %v1135 = vunpack.c.h.b16 %v476
        %v1136 = vunpack.c.l.b16 %v477
        %v1137 = vunpack.c.h.b16 %v477
        %v1138 = vunpack.c.l.b16 %v478
        %v1139 = vunpack.c.l.b16 %v479
        %v1140 = vunpack.c.h.b16 %v479
        %v1141 = vunpack.c.l.b16 %v480
        %v1142 = vunpack.c.h.b16 %v480
        %v1143 = vunpack.c.l.b16 %v481
        %v1144 = vunpack.c.h.b16 %v481
        %v1145 = vunpack.c.l.b16 %v482
        %v1146 = vunpack.c.l.b16 %v483
        %v1147 = vunpack.c.h.b16 %v483
        %v1148 = vunpack.c.l.b16 %v484
        %v1149 = vunpack.c.h.b16 %v484
        %v1150 = vunpack.c.l.b16 %v485
        %v1151 = vunpack.c.h.b16 %v485
        %v1152 = vunpack.c.l.b16 %v486
        %v1153 = vunpack.c.l.b16 %v487
        %v1154 = vunpack.c.h.b16 %v487
        %v1155 = vunpack.c.l.b16 %v488
        %v1156 = vunpack.c.h.b16 %v488
        %v1157 = vunpack.c.l.b16 %v489
        %v1158 = vunpack.c.h.b16 %v489
        %v1159 = vunpack.c.l.b16 %v490
        %v1160 = vunpack.c.l.b16 %v491
        %v1161 = vunpack.c.h.b16 %v491
        %v1162 = vunpack.c.l.b16 %v492
        %v1163 = vunpack.c.h.b16 %v492
        %v1164 = vunpack.c.l.b16 %v493
        %v1165 = vunpack.c.h.b16 %v493
        %v1166 = vunpack.c.l.b16 %v494
        %v1167 = vunpack.c.l.b16 %v495
        %v1168 = vunpack.c.h.b16 %v495
        %v1169 = vunpack.c.l.b16 %v496
        %v1170 = vunpack.c.h.b16 %v496
        %v1171 = vunpack.c.l.b16 %v497
        %v1172 = vunpack.c.h.b16 %v497
        %v1173 = vunpack.c.l.b16 %v498
        %v1174 = vunpack.c.l.b16 %v499
        %v1175 = vunpack.c.h.b16 %v499
        %v1176 = vunpack.c.l.b16 %v500
        %v1177 = vunpack.c.h.b16 %v500
        %v1178 = vunpack.c.l.b16 %v501
        %v1179 = vunpack.c.h.b16 %v501
        %v1180 = vunpack.c.l.b16 %v502
        %v1181 = vunpack.c.l.b16 %v503
        %v1182 = vunpack.c.h.b16 %v503
        %v1183 = vunpack.c.l.b16 %v504
        %v1184 = vunpack.c.h.b16 %v504
        %v1185 = vunpack.c.l.b16 %v505
        %v1186 = vunpack.c.h.b16 %v505
        %v1187 = vunpack.c.l.b16 %v506
        %v1188 = vunpack.c.l.b16 %v507
        %v1189 = vunpack.c.h.b16 %v507
        %v1190 = vunpack.c.l.b16 %v508
        %v1191 = vunpack.c.h.b16 %v508
        %v1192 = vunpack.c.l.b16 %v509
        %v1193 = vunpack.c.h.b16 %v509
        %v1194 = vunpack.c.l.b16 %v510
        %v1195 = vunpack.c.l.b16 %v511
        %v1196 = vunpack.c.h.b16 %v511
        %v1197 = vunpack.c.l.b16 %v512
        %v1198 = vunpack.c.h.b16 %v512
        %v1199 = vunpack.c.l.b16 %v513
        %v1200 = vunpack.c.h.b16 %v513
        %v1201 = vunpack.c.l.b16 %v514
        %v1202 = vunpack.c.l.b16 %v515
        %v1203 = vunpack.c.h.b16 %v515
        %v1204 = vunpack.c.l.b16 %v516
        %v1205 = vunpack.c.h.b16 %v516
        %v1206 = vunpack.c.l.b16 %v517
        %v1207 = vunpack.c.h.b16 %v517
        %v1208 = vunpack.c.l.b16 %v518
        %v1209 = vunpack.c.l.b16 %v519
        %v1210 = vunpack.c.h.b16 %v519
        %v1211 = vunpack.c.l.b16 %v520
        %v1212 = vunpack.c.h.b16 %v520
        %v1213 = vunpack.c.l.b16 %v521
        %v1214 = vunpack.c.h.b16 %v521
        %v1215 = vunpack.c.l.b16 %v522
        %v1216 = vunpack.c.l.b16 %v523
        %v1217 = vunpack.c.h.b16 %v523
        %v1218 = vunpack.c.l.b16 %v524
        %v1219 = vunpack.c.h.b16 %v524
        %v1220 = vunpack.c.l.b16 %v525
        %v1221 = vunpack.c.h.b16 %v525
        %v1222 = vunpack.c.l.b16 %v526
        %v1223 = vunpack.c.l.b16 %v527
        %v1224 = vunpack.c.h.b16 %v527
        %v1225 = vunpack.c.l.b16 %v528
        %v1226 = vunpack.c.h.b16 %v528
        %v1227 = vunpack.c.l.b16 %v529
        %v1228 = vunpack.c.h.b16 %v529
        %v1229 = vunpack.c.l.b16 %v530
        %v1230 = vunpack.c.l.b16 %v531
        %v1231 = vunpack.c.h.b16 %v531
        %v1232 = vunpack.c.l.b16 %v532
        %v1233 = vunpack.c.h.b16 %v532
        %v1234 = vunpack.c.l.b16 %v533
        %v1235 = vunpack.c.h.b16 %v533
        %v1236 = vunpack.c.l.b16 %v534
        %v1237 = vunpack.c.l.b16 %v535
        %v1238 = vunpack.c.h.b16 %v535
        %v1239 = vunpack.c.l.b16 %v536
        %v1240 = vunpack.c.h.b16 %v536
        %v1241 = vunpack.c.l.b16 %v537
        %v1242 = vunpack.c.h.b16 %v537
        %v1243 = vunpack.c.l.b16 %v538
        %v1244 = vunpack.c.l.b16 %v539
        %v1245 = vunpack.c.h.b16 %v539
        %v1246 = vunpack.c.l.b16 %v540
        %v1247 = vunpack.c.h.b16 %v540
        %v1248 = vunpack.c.l.b16 %v541
        %v1249 = vunpack.c.h.b16 %v541
        %v1250 = vunpack.c.l.b16 %v542
        %v1251 = vunpack.c.l.b16 %v543
        %v1252 = vunpack.c.h.b16 %v543
        %v1253 = vunpack.c.l.b16 %v544
        %v1254 = vunpack.c.h.b16 %v544
        %v1255 = vunpack.c.l.b16 %v545
        %v1256 = vunpack.c.h.b16 %v545
        %v1257 = vunpack.c.l.b16 %v546
        %v1258 = vunpack.c.l.b16 %v547
        %v1259 = vunpack.c.h.b16 %v547
        %v1260 = vunpack.c.l.b16 %v548
        %v1261 = vunpack.c.h.b16 %v548
        %v1262 = vunpack.c.l.b16 %v549
        %v1263 = vunpack.c.h.b16 %v549
        %v1264 = vunpack.c.l.b16 %v550
        %v1265 = vunpack.c.l.b16 %v551
        %v1266 = vunpack.c.h.b16 %v551
        %v1267 = vunpack.c.l.b16 %v552
        %v1268 = vunpack.c.h.b16 %v552
        %v1269 = vunpack.c.l.b16 %v553
        %v1270 = vunpack.c.h.b16 %v553
        %v1271 = vunpack.c.l.b16 %v554
        %v1272 = vunpack.c.l.b16 %v555
        %v1273 = vunpack.c.h.b16 %v555
        %v1274 = vunpack.c.l.b16 %v556
        %v1275 = vunpack.c.h.b16 %v556
        %v1276 = vunpack.c.l.b16 %v557
        %v1277 = vunpack.c.h.b16 %v557
        %v1278 = vunpack.c.l.b16 %v558
        %v1279 = vunpack.c.l.b16 %v559
        %v1280 = vunpack.c.h.b16 %v559
        %v1281 = vunpack.c.l.b16 %v560
        %v1282 = vunpack.c.h.b16 %v560
        %v1283 = vunpack.c.l.b16 %v561
        %v1284 = vunpack.c.h.b16 %v561
        %v1285 = vunpack.c.l.b16 %v562
        %v1286 = vunpack.c.l.b16 %v563
        %v1287 = vunpack.c.h.b16 %v563
        %v1288 = vunpack.c.l.b16 %v564
        %v1289 = vunpack.c.h.b16 %v564
        %v1290 = vunpack.c.l.b16 %v565
        %v1291 = vunpack.c.h.b16 %v565
        %v1292 = vunpack.c.l.b16 %v566
        %v1293 = vunpack.c.l.b16 %v567
        %v1294 = vunpack.c.h.b16 %v567
        %v1295 = vunpack.c.l.b16 %v568
        %v1296 = vunpack.c.h.b16 %v568
        %v1297 = vunpack.c.l.b16 %v569
        %v1298 = vunpack.c.h.b16 %v569
        %v1299 = vunpack.c.l.b16 %v570
        %v1300 = vunpack.c.l.b16 %v571
        %v1301 = vunpack.c.h.b16 %v571
        %v1302 = vunpack.c.l.b16 %v572
        %v1303 = vunpack.c.h.b16 %v572
        %v1304 = vunpack.c.l.b16 %v573
        %v1305 = vunpack.c.h.b16 %v573
        %v1306 = vunpack.c.l.b16 %v574
        %v1307 = vunpack.c.l.b16 %v575
        %v1308 = vunpack.c.h.b16 %v575
        %v1309 = vunpack.c.l.b16 %v576
        %v1310 = vunpack.c.h.b16 %v576
        %v1311 = vunpack.c.l.b16 %v577
        %v1312 = vunpack.c.h.b16 %v577
        %v1313 = vunpack.c.l.b16 %v578
        %v1314 = vunpack.c.l.b16 %v579
        %v1315 = vunpack.c.h.b16 %v579
        %v1316 = vunpack.c.l.b16 %v580
        %v1317 = vunpack.c.h.b16 %v580
        %v1318 = vunpack.c.l.b16 %v581
        %v1319 = vunpack.c.h.b16 %v581
        %v1320 = vunpack.c.l.b16 %v582
        %v1321 = vunpack.c.l.b16 %v583
        %v1322 = vunpack.c.h.b16 %v583
        %v1323 = vunpack.c.l.b16 %v584
        %v1324 = vunpack.c.h.b16 %v584
        %v1325 = vunpack.c.l.b16 %v585
        %v1326 = vunpack.c.h.b16 %v585
        %v1327 = vunpack.c.l.b16 %v586
        %v1328 = vunpack.c.l.b16 %v587
        %v1329 = vunpack.c.h.b16 %v587
        %v1330 = vunpack.c.l.b16 %v588
        %v1331 = vunpack.c.h.b16 %v588
        %v1332 = vunpack.c.l.b16 %v589
        %v1333 = vunpack.c.h.b16 %v589
        %v1334 = vunpack.c.l.b16 %v590
        %v1335 = vunpack.c.l.b16 %v591
        %v1336 = vunpack.c.h.b16 %v591
        %v1337 = vunpack.c.l.b16 %v592
        %v1338 = vunpack.c.h.b16 %v592
        %v1339 = vunpack.c.l.b16 %v593
        %v1340 = vunpack.c.h.b16 %v593
        %v1341 = vunpack.c.l.b16 %v594
        %v1342 = vunpack.c.l.b16 %v595
        %v1343 = vunpack.c.h.b16 %v595
        %v1344 = vunpack.c.l.b16 %v596
        %v1345 = vunpack.c.h.b16 %v596
        %v1346 = vunpack.c.l.b16 %v597
        %v1347 = vunpack.c.h.b16 %v597
        %v1348 = vunpack.c.l.b16 %v598
        %v1349 = vunpack.c.l.b16 %v599
        %v1350 = vunpack.c.h.b16 %v599
        %v1351 = vunpack.c.l.b16 %v600
        %v1352 = vunpack.c.h.b16 %v600
        %v1353 = vunpack.c.l.b16 %v601
        %v1354 = vunpack.c.h.b16 %v601
        %v1355 = vunpack.c.l.b16 %v602
        %v1356 = vunpack.c.l.b16 %v603
        %v1357 = vunpack.c.h.b16 %v603
        %v1358 = vunpack.c.l.b16 %v604
        %v1359 = vunpack.c.h.b16 %v604
        %v1360 = vunpack.c.l.b16 %v605
        %v1361 = vunpack.c.h.b16 %v605
        %v1362 = vunpack.c.l.b16 %v606
        %v1363 = vunpack.c.l.b16 %v607
        %v1364 = vunpack.c.h.b16 %v607
        %v1365 = vunpack.c.l.b16 %v608
        %v1366 = vunpack.c.h.b16 %v608
        %v1367 = vunpack.c.l.b16 %v609
        %v1368 = vunpack.c.h.b16 %v609
        %v1369 = vunpack.c.l.b16 %v610
        %v1370 = vunpack.c.l.b16 %v611
        %v1371 = vunpack.c.h.b16 %v611
        %v1372 = vunpack.c.l.b16 %v612
        %v1373 = vunpack.c.h.b16 %v612
        %v1374 = vunpack.c.l.b16 %v613
        %v1375 = vunpack.c.h.b16 %v613
        %v1376 = vunpack.c.l.b16 %v614
        %v1377 = vunpack.c.l.b16 %v615
        %v1378 = vunpack.c.h.b16 %v615
        %v1379 = vunpack.c.l.b16 %v616
        %v1380 = vunpack.c.h.b16 %v616
        %v1381 = vunpack.c.l.b16 %v617
        %v1382 = vunpack.c.h.b16 %v617
        %v1383 = vunpack.c.l.b16 %v618
        %v1384 = vunpack.c.l.b16 %v619
        %v1385 = vunpack.c.h.b16 %v619
        %v1386 = vunpack.c.l.b16 %v620
        %v1387 = vunpack.c.h.b16 %v620
        %v1388 = vunpack.c.l.b16 %v621
        %v1389 = vunpack.c.h.b16 %v621
        %v1390 = vunpack.c.l.b16 %v622
        %v1391 = vunpack.c.l.b16 %v623
        %v1392 = vunpack.c.h.b16 %v623
        %v1393 = vunpack.c.l.b16 %v624
        %v1394 = vunpack.c.h.b16 %v624
        %v1395 = vunpack.c.l.b16 %v625
        %v1396 = vunpack.c.h.b16 %v625
        %v1397 = vunpack.c.l.b16 %v626
        %v1398 = vunpack.c.l.b16 %v627
        %v1399 = vunpack.c.h.b16 %v627
        %v1400 = vunpack.c.l.b16 %v628
        %v1401 = vunpack.c.h.b16 %v628
        %v1402 = vunpack.c.l.b16 %v629
        %v1403 = vunpack.c.h.b16 %v629
        %v1404 = vunpack.c.l.b16 %v630
        %v1405 = vunpack.c.l.b16 %v631
        %v1406 = vunpack.c.h.b16 %v631
        %v1407 = vunpack.c.l.b16 %v632
        %v1408 = vunpack.c.h.b16 %v632
        %v1409 = vunpack.c.l.b16 %v633
        %v1410 = vunpack.c.h.b16 %v633
        %v1411 = vunpack.c.l.b16 %v634
        %v1412 = vunpack.c.l.b16 %v635
        %v1413 = vunpack.c.h.b16 %v635
        %v1414 = vunpack.c.l.b16 %v636
        %v1415 = vunpack.c.h.b16 %v636
        %v1416 = vunpack.c.l.b16 %v637
        %v1417 = vunpack.c.h.b16 %v637
        %v1418 = vunpack.c.l.b16 %v638
        %v1419 = vunpack.c.l.b16 %v639
        %v1420 = vunpack.c.h.b16 %v639
        %v1421 = vunpack.c.l.b16 %v640
        %v1422 = vunpack.c.h.b16 %v640
        %v1423 = vunpack.c.l.b16 %v641
        %v1424 = vunpack.c.h.b16 %v641
        %v1425 = vunpack.c.l.b16 %v642
        %v1426 = vunpack.c.l.b16 %v643
        %v1427 = vunpack.c.h.b16 %v643
        %v1428 = vunpack.c.l.b16 %v644
        %v1429 = vunpack.c.h.b16 %v644
        %v1430 = vunpack.c.l.b16 %v645
        %v1431 = vunpack.c.h.b16 %v645
        %v1432 = vunpack.c.l.b16 %v646
        %v1433 = vunpack.c.l.b16 %v647
        %v1434 = vunpack.c.h.b16 %v647
        %v1435 = vunpack.c.l.b16 %v648
        %v1436 = vunpack.c.h.b16 %v648
        %v1437 = vunpack.c.l.b16 %v649
        %v1438 = vunpack.c.h.b16 %v649
        %v1439 = vunpack.c.l.b16 %v650
        %v1440 = vunpack.c.l.b16 %v651
        %v1441 = vunpack.c.h.b16 %v651
        %v1442 = vunpack.c.l.b16 %v652
        %v1443 = vunpack.c.h.b16 %v652
        %v1444 = vunpack.c.l.b16 %v653
        %v1445 = vunpack.c.h.b16 %v653
        %v1446 = vunpack.c.l.b16 %v654
        %v1447 = vunpack.c.l.b16 %v655
        %v1448 = vunpack.c.h.b16 %v655
        %v1449 = vunpack.c.l.b16 %v656
        %v1450 = vunpack.c.h.b16 %v656
        %v1451 = vunpack.c.l.b16 %v657
        %v1452 = vunpack.c.h.b16 %v657
        %v1453 = vunpack.c.l.b16 %v658
        %v1454 = vunpack.c.l.b16 %v659
        %v1455 = vunpack.c.h.b16 %v659
        %v1456 = vunpack.c.l.b16 %v660
        %v1457 = vunpack.c.h.b16 %v660
        %v1458 = vunpack.c.l.b16 %v661
        %v1459 = vunpack.c.h.b16 %v661
        %v1460 = vunpack.c.l.b16 %v662
        %v1461 = vunpack.c.l.b16 %v663
        %v1462 = vunpack.c.h.b16 %v663
        %v1463 = vunpack.c.l.b16 %v664
        %v1464 = vunpack.c.h.b16 %v664
        %v1465 = vunpack.c.l.b16 %v665
        %v1466 = vunpack.c.h.b16 %v665
        %v1467 = vunpack.c.l.b16 %v666
        %v1468 = vunpack.c.l.b16 %v667
        %v1469 = vunpack.c.h.b16 %v667
        %v1470 = vunpack.c.l.b16 %v668
        %v1471 = vunpack.c.h.b16 %v668
        %v1472 = vunpack.c.l.b16 %v669
        %v1473 = vunpack.c.h.b16 %v669
        %v1474 = vunpack.c.l.b16 %v670
        %v1475 = vunpack.c.l.b16 %v671
        %v1476 = vunpack.c.h.b16 %v671
        %v1477 = vunpack.c.l.b16 %v672
        %v1478 = vunpack.c.h.b16 %v672
        %v1479 = vunpack.c.l.b16 %v673
        %v1480 = vunpack.c.h.b16 %v673
        %v1481 = vunpack.c.l.b16 %v674
        %v1482 = vunpack.c.l.b16 %v675
        %v1483 = vunpack.c.h.b16 %v675
        %v1484 = vunpack.c.l.b16 %v676
        %v1485 = vunpack.c.h.b16 %v676
        %v1486 = vunpack.c.l.b16 %v677
        %v1487 = vunpack.c.h.b16 %v677
        %v1488 = vunpack.c.l.b16 %v678
        %v1489 = vunpack.c.l.b16 %v679
        %v1490 = vunpack.c.h.b16 %v679
        %v1491 = vunpack.c.l.b16 %v680
        %v1492 = vunpack.c.h.b16 %v680
        %v1493 = vunpack.c.l.b16 %v681
        %v1494 = vunpack.c.h.b16 %v681
        %v1495 = vunpack.c.l.b16 %v682
        %v1496 = vunpack.c.l.b16 %v683
        %v1497 = vunpack.c.h.b16 %v683
        %v1498 = vunpack.c.l.b16 %v684
        %v1499 = vunpack.c.h.b16 %v684
        %v1500 = vunpack.c.l.b16 %v685
        %v1501 = vunpack.c.h.b16 %v685
        %v1502 = vunpack.c.l.b16 %v686
        %v1503 = vunpack.c.l.b16 %v687
        %v1504 = vunpack.c.h.b16 %v687
        %v1505 = vunpack.c.l.b16 %v688
        %v1506 = vunpack.c.h.b16 %v688
        %v1507 = vunpack.c.l.b16 %v689
        %v1508 = vunpack.c.h.b16 %v689
        %v1509 = vunpack.c.l.b16 %v690
        %v1510 = vunpack.c.l.b16 %v691
        %v1511 = vunpack.c.h.b16 %v691
        %v1512 = vunpack.c.l.b16 %v692
        %v1513 = vunpack.c.h.b16 %v692
        %v1514 = vunpack.c.l.b16 %v693
        %v1515 = vunpack.c.h.b16 %v693
        %v1516 = vunpack.c.l.b16 %v694
        %v1517 = vunpack.c.l.b16 %v695
        %v1518 = vunpack.c.h.b16 %v695
        %v1519 = vunpack.c.l.b16 %v696
        %v1520 = vunpack.c.h.b16 %v696
        %v1521 = vunpack.c.l.b16 %v697
        %v1522 = vunpack.c.h.b16 %v697
        %v1523 = vunpack.c.l.b16 %v698
        %v1524 = vunpack.c.l.b16 %v699
        %v1525 = vunpack.c.h.b16 %v699
        %v1526 = vunpack.c.l.b16 %v700
        %v1527 = vunpack.c.h.b16 %v700
        %v1528 = vunpack.c.l.b16 %v701
        %v1529 = vunpack.c.h.b16 %v701
        %v1530 = vunpack.c.l.b16 %v702
        %v1531 = vpack.c.b16 %v1090, %v1083
        %v1532 = vpack.c.b16 %v1091, %v1084
        %v1533 = vpack.c.b16 %v1092, %v1085
        %v1534 = vpack.c.b16 %v1093, %v1086
        %v1535 = vpack.c.b16 %v1094, %v1087
        %v1536 = vpack.c.b16 %v1095, %v1088
        %v1537 = vpack.c.b16 %v1096, %v1089
        %v1538 = vpack.c.b16 %v1104, %v1097
        %v1539 = vpack.c.b16 %v1105, %v1098
        %v1540 = vpack.c.b16 %v1106, %v1099
        %v1541 = vpack.c.b16 %v1107, %v1100
        %v1542 = vpack.c.b16 %v1108, %v1101
        %v1543 = vpack.c.b16 %v1109, %v1102
        %v1544 = vpack.c.b16 %v1110, %v1103
        %v1545 = vpack.c.b16 %v1118, %v1111
        %v1546 = vpack.c.b16 %v1119, %v1112
        %v1547 = vpack.c.b16 %v1120, %v1113
        %v1548 = vpack.c.b16 %v1121, %v1114
        %v1549 = vpack.c.b16 %v1122, %v1115
        %v1550 = vpack.c.b16 %v1123, %v1116
        %v1551 = vpack.c.b16 %v1124, %v1117
        %v1552 = vpack.c.b16 %v1132, %v1125
        %v1553 = vpack.c.b16 %v1133, %v1126
        %v1554 = vpack.c.b16 %v1134, %v1127
        %v1555 = vpack.c.b16 %v1135, %v1128
        %v1556 = vpack.c.b16 %v1136, %v1129
        %v1557 = vpack.c.b16 %v1137, %v1130
        %v1558 = vpack.c.b16 %v1138, %v1131
        %v1559 = vpack.c.b16 %v1146, %v1139
        %v1560 = vpack.c.b16 %v1147, %v1140
        %v1561 = vpack.c.b16 %v1148, %v1141
        %v1562 = vpack.c.b16 %v1149, %v1142
        %v1563 = vpack.c.b16 %v1150, %v1143
        %v1564 = vpack.c.b16 %v1151, %v1144
        %v1565 = vpack.c.b16 %v1152, %v1145
        %v1566 = vpack.c.b16 %v1160, %v1153
        %v1567 = vpack.c.b16 %v1161, %v1154
        %v1568 = vpack.c.b16 %v1162, %v1155
        %v1569 = vpack.c.b16 %v1163, %v1156
        %v1570 = vpack.c.b16 %v1164, %v1157
        %v1571 = vpack.c.b16 %v1165, %v1158
        %v1572 = vpack.c.b16 %v1166, %v1159
        %v1573 = vpack.c.b16 %v1174, %v1167
        %v1574 = vpack.c.b16 %v1175, %v1168
        %v1575 = vpack.c.b16 %v1176, %v1169
        %v1576 = vpack.c.b16 %v1177, %v1170
        %v1577 = vpack.c.b16 %v1178, %v1171
        %v1578 = vpack.c.b16 %v1179, %v1172
        %v1579 = vpack.c.b16 %v1180, %v1173
        %v1580 = vpack.c.b16 %v1188, %v1181
        %v1581 = vpack.c.b16 %v1189, %v1182
        %v1582 = vpack.c.b16 %v1190, %v1183
        %v1583 = vpack.c.b16 %v1191, %v1184
        %v1584 = vpack.c.b16 %v1192, %v1185
        %v1585 = vpack.c.b16 %v1193, %v1186
        %v1586 = vpack.c.b16 %v1194, %v1187
        %v1587 = vpack.c.b16 %v1202, %v1195
        %v1588 = vpack.c.b16 %v1203, %v1196
        %v1589 = vpack.c.b16 %v1204, %v1197
        %v1590 = vpack.c.b16 %v1205, %v1198
        %v1591 = vpack.c.b16 %v1206, %v1199
        %v1592 = vpack.c.b16 %v1207, %v1200
        %v1593 = vpack.c.b16 %v1208, %v1201
        %v1594 = vpack.c.b16 %v1216, %v1209
        %v1595 = vpack.c.b16 %v1217, %v1210
        %v1596 = vpack.c.b16 %v1218, %v1211
        %v1597 = vpack.c.b16 %v1219, %v1212
        %v1598 = vpack.c.b16 %v1220, %v1213
        %v1599 = vpack.c.b16 %v1221, %v1214
        %v1600 = vpack.c.b16 %v1222, %v1215
        %v1601 = vpack.c.b16 %v1230, %v1223
        %v1602 = vpack.c.b16 %v1231, %v1224
        %v1603 = vpack.c.b16 %v1232, %v1225
        %v1604 = vpack.c.b16 %v1233, %v1226
        %v1605 = vpack.c.b16 %v1234, %v1227
        %v1606 = vpack.c.b16 %v1235, %v1228
        %v1607 = vpack.c.b16 %v1236, %v1229
        %v1608 = vpack.c.b16 %v1244, %v1237
        %v1609 = vpack.c.b16 %v1245, %v1238
        %v1610 = vpack.c.b16 %v1246, %v1239
        %v1611 = vpack.c.b16 %v1247, %v1240
        %v1612 = vpack.c.b16 %v1248, %v1241
        %v1613 = vpack.c.b16 %v1249, %v1242
        %v1614 = vpack.c.b16 %v1250, %v1243
        %v1615 = vpack.c.b16 %v1258, %v1251
        %v1616 = vpack.c.b16 %v1259, %v1252
        %v1617 = vpack.c.b16 %v1260, %v1253
        %v1618 = vpack.c.b16 %v1261, %v1254
        %v1619 = vpack.c.b16 %v1262, %v1255
        %v1620 = vpack.c.b16 %v1263, %v1256
        %v1621 = vpack.c.b16 %v1264, %v1257
        %v1622 = vpack.c.b16 %v1272, %v1265
        %v1623 = vpack.c.b16 %v1273, %v1266
        %v1624 = vpack.c.b16 %v1274, %v1267
        %v1625 = vpack.c.b16 %v1275, %v1268
        %v1626 = vpack.c.b16 %v1276, %v1269
        %v1627 = vpack.c.b16 %v1277, %v1270
        %v1628 = vpack.c.b16 %v1278, %v1271
        %v1629 = vpack.c.b16 %v1286, %v1279
        %v1630 = vpack.c.b16 %v1287, %v1280
        %v1631 = vpack.c.b16 %v1288, %v1281
        %v1632 = vpack.c.b16 %v1289, %v1282
        %v1633 = vpack.c.b16 %v1290, %v1283
        %v1634 = vpack.c.b16 %v1291, %v1284
        %v1635 = vpack.c.b16 %v1292, %v1285
        %v1636 = vpack.c.b16 %v1300, %v1293
        %v1637 = vpack.c.b16 %v1301, %v1294
        %v1638 = vpack.c.b16 %v1302, %v1295
        %v1639 = vpack.c.b16 %v1303, %v1296
        %v1640 = vpack.c.b16 %v1304, %v1297
        %v1641 = vpack.c.b16 %v1305, %v1298
        %v1642 = vpack.c.b16 %v1306, %v1299
        %v1643 = vpack.c.b16 %v1314, %v1307
        %v1644 = vpack.c.b16 %v1315, %v1308
        %v1645 = vpack.c.b16 %v1316, %v1309
        %v1646 = vpack.c.b16 %v1317, %v1310
        %v1647 = vpack.c.b16 %v1318, %v1311
        %v1648 = vpack.c.b16 %v1319, %v1312
        %v1649 = vpack.c.b16 %v1320, %v1313
        %v1650 = vpack.c.b16 %v1328, %v1321
        %v1651 = vpack.c.b16 %v1329, %v1322
        %v1652 = vpack.c.b16 %v1330, %v1323
        %v1653 = vpack.c.b16 %v1331, %v1324
        %v1654 = vpack.c.b16 %v1332, %v1325
        %v1655 = vpack.c.b16 %v1333, %v1326
        %v1656 = vpack.c.b16 %v1334, %v1327
        %v1657 = vpack.c.b16 %v1342, %v1335
        %v1658 = vpack.c.b16 %v1343, %v1336
        %v1659 = vpack.c.b16 %v1344, %v1337
        %v1660 = vpack.c.b16 %v1345, %v1338
        %v1661 = vpack.c.b16 %v1346, %v1339
        %v1662 = vpack.c.b16 %v1347, %v1340
        %v1663 = vpack.c.b16 %v1348, %v1341
        %v1664 = vpack.c.b16 %v1356, %v1349
        %v1665 = vpack.c.b16 %v1357, %v1350
        %v1666 = vpack.c.b16 %v1358, %v1351
        %v1667 = vpack.c.b16 %v1359, %v1352
        %v1668 = vpack.c.b16 %v1360, %v1353
        %v1669 = vpack.c.b16 %v1361, %v1354
        %v1670 = vpack.c.b16 %v1362, %v1355
        %v1671 = vpack.c.b16 %v1370, %v1363
        %v1672 = vpack.c.b16 %v1371, %v1364
        %v1673 = vpack.c.b16 %v1372, %v1365
        %v1674 = vpack.c.b16 %v1373, %v1366
        %v1675 = vpack.c.b16 %v1374, %v1367
        %v1676 = vpack.c.b16 %v1375, %v1368
        %v1677 = vpack.c.b16 %v1376, %v1369
        %v1678 = vpack.c.b16 %v1384, %v1377
        %v1679 = vpack.c.b16 %v1385, %v1378
        %v1680 = vpack.c.b16 %v1386, %v1379
        %v1681 = vpack.c.b16 %v1387, %v1380
        %v1682 = vpack.c.b16 %v1388, %v1381
        %v1683 = vpack.c.b16 %v1389, %v1382
        %v1684 = vpack.c.b16 %v1390, %v1383
        %v1685 = vpack.c.b16 %v1398, %v1391
        %v1686 = vpack.c.b16 %v1399, %v1392
        %v1687 = vpack.c.b16 %v1400, %v1393
        %v1688 = vpack.c.b16 %v1401, %v1394
        %v1689 = vpack.c.b16 %v1402, %v1395
        %v1690 = vpack.c.b16 %v1403, %v1396
        %v1691 = vpack.c.b16 %v1404, %v1397
        %v1692 = vpack.c.b16 %v1412, %v1405
        %v1693 = vpack.c.b16 %v1413, %v1406
        %v1694 = vpack.c.b16 %v1414, %v1407
        %v1695 = vpack.c.b16 %v1415, %v1408
        %v1696 = vpack.c.b16 %v1416, %v1409
        %v1697 = vpack.c.b16 %v1417, %v1410
        %v1698 = vpack.c.b16 %v1418, %v1411
        %v1699 = vpack.c.b16 %v1426, %v1419
        %v1700 = vpack.c.b16 %v1427, %v1420
        %v1701 = vpack.c.b16 %v1428, %v1421
        %v1702 = vpack.c.b16 %v1429, %v1422
        %v1703 = vpack.c.b16 %v1430, %v1423
        %v1704 = vpack.c.b16 %v1431, %v1424
        %v1705 = vpack.c.b16 %v1432, %v1425
        %v1706 = vpack.c.b16 %v1440, %v1433
        %v1707 = vpack.c.b16 %v1441, %v1434
        %v1708 = vpack.c.b16 %v1442, %v1435
        %v1709 = vpack.c.b16 %v1443, %v1436
        %v1710 = vpack.c.b16 %v1444, %v1437
        %v1711 = vpack.c.b16 %v1445, %v1438
        %v1712 = vpack.c.b16 %v1446, %v1439
        %v1713 = vpack.c.b16 %v1454, %v1447
        %v1714 = vpack.c.b16 %v1455, %v1448
        %v1715 = vpack.c.b16 %v1456, %v1449
        %v1716 = vpack.c.b16 %v1457, %v1450
        %v1717 = vpack.c.b16 %v1458, %v1451
        %v1718 = vpack.c.b16 %v1459, %v1452
        %v1719 = vpack.c.b16 %v1460, %v1453
        %v1720 = vpack.c.b16 %v1468, %v1461
        %v1721 = vpack.c.b16 %v1469, %v1462
        %v1722 = vpack.c.b16 %v1470, %v1463
        %v1723 = vpack.c.b16 %v1471, %v1464
        %v1724 = vpack.c.b16 %v1472, %v1465
        %v1725 = vpack.c.b16 %v1473, %v1466
        %v1726 = vpack.c.b16 %v1474, %v1467
        %v1727 = vpack.c.b16 %v1482, %v1475
        %v1728 = vpack.c.b16 %v1483, %v1476
        %v1729 = vpack.c.b16 %v1484, %v1477
        %v1730 = vpack.c.b16 %v1485, %v1478
        %v1731 = vpack.c.b16 %v1486, %v1479
        %v1732 = vpack.c.b16 %v1487, %v1480
        %v1733 = vpack.c.b16 %v1488, %v1481
        %v1734 = vpack.c.b16 %v1496, %v1489
        %v1735 = vpack.c.b16 %v1497, %v1490
        %v1736 = vpack.c.b16 %v1498, %v1491
        %v1737 = vpack.c.b16 %v1499, %v1492
        %v1738 = vpack.c.b16 %v1500, %v1493
        %v1739 = vpack.c.b16 %v1501, %v1494
        %v1740 = vpack.c.b16 %v1502, %v1495
        %v1741 = vpack.c.b16 %v1510, %v1503
        %v1742 = vpack.c.b16 %v1511, %v1504
        %v1743 = vpack.c.b16 %v1512, %v1505
        %v1744 = vpack.c.b16 %v1513, %v1506
        %v1745 = vpack.c.b16 %v1514, %v1507
        %v1746 = vpack.c.b16 %v1515, %v1508
        %v1747 = vpack.c.b16 %v1516, %v1509
        %v1748 = vpack.c.b16 %v1524, %v1517
        %v1749 = vpack.c.b16 %v1525, %v1518
        %v1750 = vpack.c.b16 %v1526, %v1519
        %v1751 = vpack.c.b16 %v1527, %v1520
        %v1752 = vpack.c.b16 %v1528, %v1521
        %v1753 = vpack.c.b16 %v1529, %v1522
        %v1754 = vpack.c.b16 %v1530, %v1523
        %v2091 = vunpack.c.l.b16 %v703
        %v2092 = vunpack.c.h.b16 %v703
        %v2093 = vunpack.c.l.b16 %v704
        %v2094 = vunpack.c.h.b16 %v704
        %v2095 = vunpack.c.l.b16 %v705
        %v2096 = vunpack.c.h.b16 %v705
        %v2097 = vunpack.c.l.b16 %v706
        %v2098 = vunpack.c.h.b16 %v706
        %v2099 = vunpack.c.l.b16 %v707
        %v2100 = vunpack.c.h.b16 %v707
        %v2101 = vunpack.c.l.b16 %v708
        %v2102 = vunpack.c.h.b16 %v708
        %v2103 = vunpack.c.l.b16 %v709
        %v2104 = vunpack.c.h.b16 %v709
        %v2105 = vunpack.c.l.b16 %v710
        %v2106 = vunpack.c.h.b16 %v710
        %v2107 = vunpack.c.l.b16 %v711
        %v2108 = vunpack.c.h.b16 %v711
        %v2109 = vunpack.c.l.b16 %v712
        %v2110 = vunpack.c.h.b16 %v712
        %v2111 = vunpack.c.l.b16 %v713
        %v2112 = vunpack.c.h.b16 %v713
        %v2113 = vunpack.c.l.b16 %v714
        %v2114 = vunpack.c.h.b16 %v714
        %v2115 = vunpack.c.l.b16 %v715
        %v2116 = vunpack.c.h.b16 %v715
        %v2117 = vunpack.c.l.b16 %v716
        %v2118 = vunpack.c.h.b16 %v716
        %v2119 = vunpack.c.l.b16 %v717
        %v2120 = vunpack.c.h.b16 %v717
        %v2121 = vunpack.c.l.b16 %v718
        %v2122 = vunpack.c.h.b16 %v718
        %v2123 = vunpack.c.l.b16 %v719
        %v2124 = vunpack.c.h.b16 %v719
        %v2125 = vunpack.c.l.b16 %v720
        %v2126 = vunpack.c.h.b16 %v720
        %v2127 = vunpack.c.l.b16 %v721
        %v2128 = vunpack.c.h.b16 %v721
        %v2129 = vunpack.c.l.b16 %v722
        %v2130 = vunpack.c.h.b16 %v722
        %v2131 = vunpack.c.l.b16 %v723
        %v2132 = vunpack.c.h.b16 %v723
        %v2133 = vunpack.c.l.b16 %v724
        %v2134 = vunpack.c.h.b16 %v724
        %v2135 = vunpack.c.l.b16 %v725
        %v2136 = vunpack.c.h.b16 %v725
        %v2137 = vunpack.c.l.b16 %v726
        %v2138 = vunpack.c.h.b16 %v726
        %v2139 = vunpack.c.l.b16 %v727
        %v2140 = vunpack.c.h.b16 %v727
        %v2141 = vunpack.c.l.b16 %v728
        %v2142 = vunpack.c.h.b16 %v728
        %v2143 = vunpack.c.l.b16 %v729
        %v2144 = vunpack.c.h.b16 %v729
        %v2145 = vunpack.c.l.b16 %v730
        %v2146 = vunpack.c.h.b16 %v730
        %v2147 = vunpack.c.l.b16 %v731
        %v2148 = vunpack.c.h.b16 %v731
        %v2149 = vunpack.c.l.b16 %v732
        %v2150 = vunpack.c.h.b16 %v732
        %v2151 = vunpack.c.l.b16 %v733
        %v2152 = vunpack.c.h.b16 %v733
        %v2153 = vunpack.c.l.b16 %v734
        %v2154 = vunpack.c.h.b16 %v734
        %v2155 = vunpack.c.l.b16 %v735
        %v2156 = vunpack.c.h.b16 %v735
        %v2157 = vunpack.c.l.b16 %v736
        %v2158 = vunpack.c.h.b16 %v736
        %v2159 = vunpack.c.l.b16 %v737
        %v2160 = vunpack.c.h.b16 %v737
        %v2161 = vunpack.c.l.b16 %v738
        %v2162 = vunpack.c.h.b16 %v738
        %v2163 = vunpack.c.l.b16 %v739
        %v2164 = vunpack.c.h.b16 %v739
        %v2165 = vunpack.c.l.b16 %v740
        %v2166 = vunpack.c.h.b16 %v740
        %v2167 = vunpack.c.l.b16 %v741
        %v2168 = vunpack.c.h.b16 %v741
        %v2169 = vunpack.c.l.b16 %v742
        %v2170 = vunpack.c.h.b16 %v742
        %v2171 = vunpack.c.l.b16 %v743
        %v2172 = vunpack.c.h.b16 %v743
        %v2173 = vunpack.c.l.b16 %v744
        %v2174 = vunpack.c.h.b16 %v744
        %v2175 = vunpack.c.l.b16 %v745
        %v2176 = vunpack.c.h.b16 %v745
        %v2177 = vunpack.c.l.b16 %v746
        %v2178 = vunpack.c.h.b16 %v746
        %v2179 = vunpack.c.l.b16 %v747
        %v2180 = vunpack.c.h.b16 %v747
        %v2181 = vunpack.c.l.b16 %v748
        %v2182 = vunpack.c.h.b16 %v748
        %v2183 = vunpack.c.l.b16 %v749
        %v2184 = vunpack.c.h.b16 %v749
        %v2185 = vunpack.c.l.b16 %v750
        %v2186 = vunpack.c.h.b16 %v750
        %v2187 = vunpack.c.l.b16 %v751
        %v2188 = vunpack.c.h.b16 %v751
        %v2189 = vunpack.c.l.b16 %v752
        %v2190 = vunpack.c.h.b16 %v752
        %v2191 = vunpack.c.l.b16 %v753
        %v2192 = vunpack.c.h.b16 %v753
        %v2193 = vunpack.c.l.b16 %v754
        %v2194 = vunpack.c.h.b16 %v754
        %v2195 = vunpack.c.l.b16 %v755
        %v2196 = vunpack.c.h.b16 %v755
        %v2197 = vunpack.c.l.b16 %v756
        %v2198 = vunpack.c.h.b16 %v756
        %v2199 = vunpack.c.l.b16 %v757
        %v2200 = vunpack.c.h.b16 %v757
        %v2201 = vunpack.c.l.b16 %v758
        %v2202 = vunpack.c.h.b16 %v758
        %v2203 = vunpack.c.l.b16 %v759
        %v2204 = vunpack.c.h.b16 %v759
        %v2205 = vunpack.c.l.b16 %v760
        %v2206 = vunpack.c.h.b16 %v760
        %v2207 = vunpack.c.l.b16 %v761
        %v2208 = vunpack.c.h.b16 %v761
        %v2209 = vunpack.c.l.b16 %v762
        %v2210 = vunpack.c.h.b16 %v762
        %v2211 = vunpack.c.l.b16 %v763
        %v2212 = vunpack.c.h.b16 %v763
        %v2213 = vunpack.c.l.b16 %v764
        %v2214 = vunpack.c.h.b16 %v764
        %v2215 = vunpack.c.l.b16 %v765
        %v2216 = vunpack.c.h.b16 %v765
        %v2217 = vunpack.c.l.b16 %v766
        %v2218 = vunpack.c.h.b16 %v766
        %v2219 = vunpack.c.l.b16 %v767
        %v2220 = vunpack.c.h.b16 %v767
        %v2221 = vunpack.c.l.b16 %v768
        %v2222 = vunpack.c.h.b16 %v768
        %v2223 = vunpack.c.l.b16 %v769
        %v2224 = vunpack.c.h.b16 %v769
        %v2225 = vunpack.c.l.b16 %v770
        %v2226 = vunpack.c.h.b16 %v770
        %v2227 = vunpack.c.l.b16 %v771
        %v2228 = vunpack.c.h.b16 %v771
        %v2229 = vunpack.c.l.b16 %v772
        %v2230 = vunpack.c.h.b16 %v772
        %v2231 = vunpack.c.l.b16 %v773
        %v2232 = vunpack.c.h.b16 %v773
        %v2233 = vunpack.c.l.b16 %v774
        %v2234 = vunpack.c.h.b16 %v774
        %v2235 = vunpack.c.l.b16 %v775
        %v2236 = vunpack.c.h.b16 %v775
        %v2237 = vunpack.c.l.b16 %v776
        %v2238 = vunpack.c.h.b16 %v776
        %v2239 = vunpack.c.l.b16 %v777
        %v2240 = vunpack.c.h.b16 %v777
        %v2241 = vunpack.c.l.b16 %v778
        %v2242 = vunpack.c.h.b16 %v778
        %v2243 = vunpack.c.l.b16 %v779
        %v2244 = vunpack.c.h.b16 %v779
        %v2245 = vunpack.c.l.b16 %v780
        %v2246 = vunpack.c.h.b16 %v780
        %v2247 = vunpack.c.l.b16 %v781
        %v2248 = vunpack.c.h.b16 %v781
        %v2249 = vunpack.c.l.b16 %v782
        %v2250 = vunpack.c.h.b16 %v782
        %v2251 = vunpack.c.l.b16 %v783
        %v2252 = vunpack.c.h.b16 %v783
        %v2253 = vunpack.c.l.b16 %v784
        %v2254 = vunpack.c.h.b16 %v784
        %v2255 = vunpack.c.l.b16 %v785
        %v2256 = vunpack.c.h.b16 %v785
        %v2257 = vunpack.c.l.b16 %v786
        %v2258 = vunpack.c.h.b16 %v786
        %v2259 = vunpack.c.l.b16 %v787
        %v2260 = vunpack.c.h.b16 %v787
        %v2261 = vunpack.c.l.b16 %v788
        %v2262 = vunpack.c.h.b16 %v788
        %v2263 = vunpack.c.l.b16 %v789
        %v2264 = vunpack.c.h.b16 %v789
        %v2265 = vunpack.c.l.b16 %v790
        %v2266 = vunpack.c.h.b16 %v790
        %v2267 = vunpack.c.l.b16 %v791
        %v2268 = vunpack.c.h.b16 %v791
        %v2269 = vunpack.c.l.b16 %v792
        %v2270 = vunpack.c.h.b16 %v792
        %v2271 = vunpack.c.l.b16 %v793
        %v2272 = vunpack.c.h.b16 %v793
        %v2273 = vunpack.c.l.b16 %v794
        %v2274 = vunpack.c.h.b16 %v794
        %v2275 = vunpack.c.l.b16 %v795
        %v2276 = vunpack.c.h.b16 %v795
        %v2277 = vunpack.c.l.b16 %v796
        %v2278 = vunpack.c.h.b16 %v796
        %v2279 = vunpack.c.l.b16 %v797
        %v2280 = vunpack.c.h.b16 %v797
        %v2281 = vunpack.c.l.b16 %v798
        %v2282 = vunpack.c.h.b16 %v798
        %v2283 = vunpack.c.l.b16 %v799
        %v2284 = vunpack.c.h.b16 %v799
        %v2285 = vunpack.c.l.b16 %v800
        %v2286 = vunpack.c.h.b16 %v800
        %v2287 = vunpack.c.l.b16 %v801
        %v2288 = vunpack.c.h.b16 %v801
        %v2289 = vunpack.c.l.b16 %v802
        %v2290 = vunpack.c.h.b16 %v802
        %v2291 = vunpack.c.l.b16 %v803
        %v2292 = vunpack.c.h.b16 %v803
        %v2293 = vunpack.c.l.b16 %v804
        %v2294 = vunpack.c.h.b16 %v804
        %v2295 = vunpack.c.l.b16 %v805
        %v2296 = vunpack.c.h.b16 %v805
        %v2297 = vunpack.c.l.b16 %v806
        %v2298 = vunpack.c.h.b16 %v806
        %v2299 = vunpack.c.l.b16 %v807
        %v2300 = vunpack.c.h.b16 %v807
        %v2301 = vunpack.c.l.b16 %v808
        %v2302 = vunpack.c.h.b16 %v808
        %v2303 = vunpack.c.l.b16 %v809
        %v2304 = vunpack.c.h.b16 %v809
        %v2305 = vunpack.c.l.b16 %v810
        %v2306 = vunpack.c.h.b16 %v810
        %v2307 = vunpack.c.l.b16 %v811
        %v2308 = vunpack.c.h.b16 %v811
        %v2309 = vunpack.c.l.b16 %v812
        %v2310 = vunpack.c.h.b16 %v812
        %v2311 = vunpack.c.l.b16 %v813
        %v2312 = vunpack.c.h.b16 %v813
        %v2313 = vunpack.c.l.b16 %v814
        %v2314 = vunpack.c.h.b16 %v814
        %v2315 = vpack.c.b16 %v2093, %v2091
        %v2316 = vpack.c.b16 %v2094, %v2092
        %v2317 = vpack.c.b16 %v2097, %v2095
        %v2318 = vpack.c.b16 %v2098, %v2096
        %v2319 = vpack.c.b16 %v2101, %v2099
        %v2320 = vpack.c.b16 %v2102, %v2100
        %v2321 = vpack.c.b16 %v2105, %v2103
        %v2322 = vpack.c.b16 %v2106, %v2104
        %v2323 = vpack.c.b16 %v2109, %v2107
        %v2324 = vpack.c.b16 %v2110, %v2108
        %v2325 = vpack.c.b16 %v2113, %v2111
        %v2326 = vpack.c.b16 %v2114, %v2112
        %v2327 = vpack.c.b16 %v2117, %v2115
        %v2328 = vpack.c.b16 %v2118, %v2116
        %v2329 = vpack.c.b16 %v2121, %v2119
        %v2330 = vpack.c.b16 %v2122, %v2120
        %v2331 = vpack.c.b16 %v2125, %v2123
        %v2332 = vpack.c.b16 %v2126, %v2124
        %v2333 = vpack.c.b16 %v2129, %v2127
        %v2334 = vpack.c.b16 %v2130, %v2128
        %v2335 = vpack.c.b16 %v2133, %v2131
        %v2336 = vpack.c.b16 %v2134, %v2132
        %v2337 = vpack.c.b16 %v2137, %v2135
        %v2338 = vpack.c.b16 %v2138, %v2136
        %v2339 = vpack.c.b16 %v2141, %v2139
        %v2340 = vpack.c.b16 %v2142, %v2140
        %v2341 = vpack.c.b16 %v2145, %v2143
        %v2342 = vpack.c.b16 %v2146, %v2144
        %v2343 = vpack.c.b16 %v2149, %v2147
        %v2344 = vpack.c.b16 %v2150, %v2148
        %v2345 = vpack.c.b16 %v2153, %v2151
        %v2346 = vpack.c.b16 %v2154, %v2152
        %v2347 = vpack.c.b16 %v2157, %v2155
        %v2348 = vpack.c.b16 %v2158, %v2156
        %v2349 = vpack.c.b16 %v2161, %v2159
        %v2350 = vpack.c.b16 %v2162, %v2160
        %v2351 = vpack.c.b16 %v2165, %v2163
        %v2352 = vpack.c.b16 %v2166, %v2164
        %v2353 = vpack.c.b16 %v2169, %v2167
        %v2354 = vpack.c.b16 %v2170, %v2168
        %v2355 = vpack.c.b16 %v2173, %v2171
        %v2356 = vpack.c.b16 %v2174, %v2172
        %v2357 = vpack.c.b16 %v2177, %v2175
        %v2358 = vpack.c.b16 %v2178, %v2176
        %v2359 = vpack.c.b16 %v2181, %v2179
        %v2360 = vpack.c.b16 %v2182, %v2180
        %v2361 = vpack.c.b16 %v2185, %v2183
        %v2362 = vpack.c.b16 %v2186, %v2184
        %v2363 = vpack.c.b16 %v2189, %v2187
        %v2364 = vpack.c.b16 %v2190, %v2188
        %v2365 = vpack.c.b16 %v2193, %v2191
        %v2366 = vpack.c.b16 %v2194, %v2192
        %v2367 = vpack.c.b16 %v2197, %v2195
        %v2368 = vpack.c.b16 %v2198, %v2196
        %v2369 = vpack.c.b16 %v2201, %v2199
        %v2370 = vpack.c.b16 %v2202, %v2200
        %v2371 = vpack.c.b16 %v2205, %v2203
        %v2372 = vpack.c.b16 %v2206, %v2204
        %v2373 = vpack.c.b16 %v2209, %v2207
        %v2374 = vpack.c.b16 %v2210, %v2208
        %v2375 = vpack.c.b16 %v2213, %v2211
        %v2376 = vpack.c.b16 %v2214, %v2212
        %v2377 = vpack.c.b16 %v2217, %v2215
        %v2378 = vpack.c.b16 %v2218, %v2216
        %v2379 = vpack.c.b16 %v2221, %v2219
        %v2380 = vpack.c.b16 %v2222, %v2220
        %v2381 = vpack.c.b16 %v2225, %v2223
        %v2382 = vpack.c.b16 %v2226, %v2224
        %v2383 = vpack.c.b16 %v2229, %v2227
        %v2384 = vpack.c.b16 %v2230, %v2228
        %v2385 = vpack.c.b16 %v2233, %v2231
        %v2386 = vpack.c.b16 %v2234, %v2232
        %v2387 = vpack.c.b16 %v2237, %v2235
        %v2388 = vpack.c.b16 %v2238, %v2236
        %v2389 = vpack.c.b16 %v2241, %v2239
        %v2390 = vpack.c.b16 %v2242, %v2240
        %v2391 = vpack.c.b16 %v2245, %v2243
        %v2392 = vpack.c.b16 %v2246, %v2244
        %v2393 = vpack.c.b16 %v2249, %v2247
        %v2394 = vpack.c.b16 %v2250, %v2248
        %v2395 = vpack.c.b16 %v2253, %v2251
        %v2396 = vpack.c.b16 %v2254, %v2252
        %v2397 = vpack.c.b16 %v2257, %v2255
        %v2398 = vpack.c.b16 %v2258, %v2256
        %v2399 = vpack.c.b16 %v2261, %v2259
        %v2400 = vpack.c.b16 %v2262, %v2260
        %v2401 = vpack.c.b16 %v2265, %v2263
        %v2402 = vpack.c.b16 %v2266, %v2264
        %v2403 = vpack.c.b16 %v2269, %v2267
        %v2404 = vpack.c.b16 %v2270, %v2268
        %v2405 = vpack.c.b16 %v2273, %v2271
        %v2406 = vpack.c.b16 %v2274, %v2272
        %v2407 = vpack.c.b16 %v2277, %v2275
        %v2408 = vpack.c.b16 %v2278, %v2276
        %v2409 = vpack.c.b16 %v2281, %v2279
        %v2410 = vpack.c.b16 %v2282, %v2280
        %v2411 = vpack.c.b16 %v2285, %v2283
        %v2412 = vpack.c.b16 %v2286, %v2284
        %v2413 = vpack.c.b16 %v2289, %v2287
        %v2414 = vpack.c.b16 %v2290, %v2288
        %v2415 = vpack.c.b16 %v2293, %v2291
        %v2416 = vpack.c.b16 %v2294, %v2292
        %v2417 = vpack.c.b16 %v2297, %v2295
        %v2418 = vpack.c.b16 %v2298, %v2296
        %v2419 = vpack.c.b16 %v2301, %v2299
        %v2420 = vpack.c.b16 %v2302, %v2300
        %v2421 = vpack.c.b16 %v2305, %v2303
        %v2422 = vpack.c.b16 %v2306, %v2304
        %v2423 = vpack.c.b16 %v2309, %v2307
        %v2424 = vpack.c.b16 %v2310, %v2308
        %v2425 = vpack.c.b16 %v2313, %v2311
        %v2426 = vpack.c.b16 %v2314, %v2312
        %2539 = vmatprep.subr.bf16.mxu0 %v2330
        %2540 = vmatpush1.bf16.msra.mxu0 %v2329
        %2541 = vmatprep.subr.bf16.mxu0 %v2328
        %2542 = vmatpush1.bf16.msra.mxu0 %v2327
        %2543 = vmatprep.subr.bf16.mxu0 %v2326
        %2544 = vmatpush1.bf16.msra.mxu0 %v2325
        %2545 = vmatprep.subr.bf16.mxu0 %v2324
        %2546 = vmatpush1.bf16.msra.mxu0 %v2323
        %2547 = vmatprep.subr.bf16.mxu0 %v2322
        %2548 = vmatpush1.bf16.msra.mxu0 %v2321
        %2549 = vmatprep.subr.bf16.mxu0 %v2320
        %2550 = vmatpush1.bf16.msra.mxu0 %v2319
        %2551 = vmatprep.subr.bf16.mxu0 %v2318
        %2552 = vmatpush1.bf16.msra.mxu0 %v2317
        %2553 = vmatprep.subr.bf16.mxu0 %v2316
        %2554 = vmatpush1.bf16.msra.mxu0 %v2315
        %2555 = vmatprep.subr.bf16.mxu0 %v2346
        %2556 = vmatpush2.bf16.msra.mxu0 %v2345
        %2557 = vmatprep.subr.bf16.mxu0 %v2344
        %2558 = vmatpush2.bf16.msra.mxu0 %v2343
        %2559 = vmatprep.subr.bf16.mxu0 %v2342
        %2560 = vmatpush2.bf16.msra.mxu0 %v2341
        %2561 = vmatprep.subr.bf16.mxu0 %v2340
        %2562 = vmatpush2.bf16.msra.mxu0 %v2339
        %2563 = vmatprep.subr.bf16.mxu0 %v2338
        %2564 = vmatpush2.bf16.msra.mxu0 %v2337
        %2565 = vmatprep.subr.bf16.mxu0 %v2336
        %2566 = vmatpush2.bf16.msra.mxu0 %v2335
        %2567 = vmatprep.subr.bf16.mxu0 %v2334
        %2568 = vmatpush2.bf16.msra.mxu0 %v2333
        %2569 = vmatprep.subr.bf16.mxu0 %v2332
        %2570 = vmatpush2.bf16.msra.mxu0 %v2331
        %2571 = vmatprep.mubr.bf16.mxu0 %v1532
        %2572 = vmatmul.mubr.bf16.gmra.mxu0 %v1531
        %v2573 = vpop.f32.mrf.mxu0
        %v2574 = vadd.f32 %v820, %v2573
        %v2575 = vpop.f32.mrf.mxu0
        %v2576 = vadd.f32 %v824, %v2575
        %v2577 = vpop.f32.mrf.mxu0
        %v2578 = vadd.f32 %v820, %v2577
        %v2579 = vpop.f32.mrf.mxu0
        %v2580 = vadd.f32 %v824, %v2579
        %2581 = vmatprep.mubr.bf16.mxu0 %v1539
        %2582 = vmatmul.mubr.bf16.gmra.mxu0 %v1538
        %v2583 = vpop.f32.mrf.mxu0
        %v2584 = vadd.f32 %v820, %v2583
        %v2585 = vpop.f32.mrf.mxu0
        %v2586 = vadd.f32 %v824, %v2585
        %v2587 = vpop.f32.mrf.mxu0
        %v2588 = vadd.f32 %v820, %v2587
        %v2589 = vpop.f32.mrf.mxu0
        %v2590 = vadd.f32 %v824, %v2589
        %2591 = vmatprep.mubr.bf16.mxu0 %v1546
        %2592 = vmatmul.mubr.bf16.gmra.mxu0 %v1545
        %v2593 = vpop.f32.mrf.mxu0
        %v2594 = vadd.f32 %v820, %v2593
        %v2595 = vpop.f32.mrf.mxu0
        %v2596 = vadd.f32 %v824, %v2595
        %v2597 = vpop.f32.mrf.mxu0
        %v2598 = vadd.f32 %v820, %v2597
        %v2599 = vpop.f32.mrf.mxu0
        %v2600 = vadd.f32 %v824, %v2599
        %2601 = vmatprep.mubr.bf16.mxu0 %v1553
        %2602 = vmatmul.mubr.bf16.gmra.mxu0 %v1552
        %v2603 = vpop.f32.mrf.mxu0
        %v2604 = vadd.f32 %v820, %v2603
        %v2605 = vpop.f32.mrf.mxu0
        %v2606 = vadd.f32 %v824, %v2605
        %v2607 = vpop.f32.mrf.mxu0
        %v2608 = vadd.f32 %v820, %v2607
        %v2609 = vpop.f32.mrf.mxu0
        %v2610 = vadd.f32 %v824, %v2609
        %2611 = vmatprep.mubr.bf16.mxu0 %v1560
        %2612 = vmatmul.mubr.bf16.gmra.mxu0 %v1559
        %v2613 = vpop.f32.mrf.mxu0
        %v2614 = vadd.f32 %v820, %v2613
        %v2615 = vpop.f32.mrf.mxu0
        %v2616 = vadd.f32 %v824, %v2615
        %v2617 = vpop.f32.mrf.mxu0
        %v2618 = vadd.f32 %v820, %v2617
        %v2619 = vpop.f32.mrf.mxu0
        %v2620 = vadd.f32 %v824, %v2619
        %2621 = vmatprep.mubr.bf16.mxu0 %v1567
        %2622 = vmatmul.mubr.bf16.gmra.mxu0 %v1566
        %v2623 = vpop.f32.mrf.mxu0
        %v2624 = vadd.f32 %v820, %v2623
        %v2625 = vpop.f32.mrf.mxu0
        %v2626 = vadd.f32 %v824, %v2625
        %v2627 = vpop.f32.mrf.mxu0
        %v2628 = vadd.f32 %v820, %v2627
        %v2629 = vpop.f32.mrf.mxu0
        %v2630 = vadd.f32 %v824, %v2629
        %2631 = vmatprep.mubr.bf16.mxu0 %v1574
        %2632 = vmatmul.mubr.bf16.gmra.mxu0 %v1573
        %v2633 = vpop.f32.mrf.mxu0
        %v2634 = vadd.f32 %v820, %v2633
        %v2635 = vpop.f32.mrf.mxu0
        %v2636 = vadd.f32 %v824, %v2635
        %v2637 = vpop.f32.mrf.mxu0
        %v2638 = vadd.f32 %v820, %v2637
        %v2639 = vpop.f32.mrf.mxu0
        %v2640 = vadd.f32 %v824, %v2639
        %2641 = vmatprep.mubr.bf16.mxu0 %v1581
        %2642 = vmatmul.mubr.bf16.gmra.mxu0 %v1580
        %v2643 = vpop.f32.mrf.mxu0
        %v2644 = vadd.f32 %v820, %v2643
        %v2645 = vpop.f32.mrf.mxu0
        %v2646 = vadd.f32 %v824, %v2645
        %v2647 = vpop.f32.mrf.mxu0
        %v2648 = vadd.f32 %v820, %v2647
        %v2649 = vpop.f32.mrf.mxu0
        %v2650 = vadd.f32 %v824, %v2649
        %2651 = vmatprep.mubr.bf16.mxu0 %v1588
        %2652 = vmatmul.mubr.bf16.gmra.mxu0 %v1587
        %v2653 = vpop.f32.mrf.mxu0
        %v2654 = vadd.f32 %v820, %v2653
        %v2655 = vpop.f32.mrf.mxu0
        %v2656 = vadd.f32 %v824, %v2655
        %v2657 = vpop.f32.mrf.mxu0
        %v2658 = vadd.f32 %v820, %v2657
        %v2659 = vpop.f32.mrf.mxu0
        %v2660 = vadd.f32 %v824, %v2659
        %2661 = vmatprep.mubr.bf16.mxu0 %v1595
        %2662 = vmatmul.mubr.bf16.gmra.mxu0 %v1594
        %v2663 = vpop.f32.mrf.mxu0
        %v2664 = vadd.f32 %v820, %v2663
        %v2665 = vpop.f32.mrf.mxu0
        %v2666 = vadd.f32 %v824, %v2665
        %v2667 = vpop.f32.mrf.mxu0
        %v2668 = vadd.f32 %v820, %v2667
        %v2669 = vpop.f32.mrf.mxu0
        %v2670 = vadd.f32 %v824, %v2669
        %2671 = vmatprep.mubr.bf16.mxu0 %v1602
        %2672 = vmatmul.mubr.bf16.gmra.mxu0 %v1601
        %v2673 = vpop.f32.mrf.mxu0
        %v2674 = vadd.f32 %v820, %v2673
        %v2675 = vpop.f32.mrf.mxu0
        %v2676 = vadd.f32 %v824, %v2675
        %v2677 = vpop.f32.mrf.mxu0
        %v2678 = vadd.f32 %v820, %v2677
        %v2679 = vpop.f32.mrf.mxu0
        %v2680 = vadd.f32 %v824, %v2679
        %2681 = vmatprep.mubr.bf16.mxu0 %v1609
        %2682 = vmatmul.mubr.bf16.gmra.mxu0 %v1608
        %v2683 = vpop.f32.mrf.mxu0
        %v2684 = vadd.f32 %v820, %v2683
        %v2685 = vpop.f32.mrf.mxu0
        %v2686 = vadd.f32 %v824, %v2685
        %v2687 = vpop.f32.mrf.mxu0
        %v2688 = vadd.f32 %v820, %v2687
        %v2689 = vpop.f32.mrf.mxu0
        %v2690 = vadd.f32 %v824, %v2689
        %2691 = vmatprep.mubr.bf16.mxu0 %v1616
        %2692 = vmatmul.mubr.bf16.gmra.mxu0 %v1615
        %v2693 = vpop.f32.mrf.mxu0
        %v2694 = vadd.f32 %v820, %v2693
        %v2695 = vpop.f32.mrf.mxu0
        %v2696 = vadd.f32 %v824, %v2695
        %v2697 = vpop.f32.mrf.mxu0
        %v2698 = vadd.f32 %v820, %v2697
        %v2699 = vpop.f32.mrf.mxu0
        %v2700 = vadd.f32 %v824, %v2699
        %2701 = vmatprep.mubr.bf16.mxu0 %v1623
        %2702 = vmatmul.mubr.bf16.gmra.mxu0 %v1622
        %v2703 = vpop.f32.mrf.mxu0
        %v2704 = vadd.f32 %v820, %v2703
        %v2705 = vpop.f32.mrf.mxu0
        %v2706 = vadd.f32 %v824, %v2705
        %v2707 = vpop.f32.mrf.mxu0
        %v2708 = vadd.f32 %v820, %v2707
        %v2709 = vpop.f32.mrf.mxu0
        %v2710 = vadd.f32 %v824, %v2709
        %2711 = vmatprep.mubr.bf16.mxu0 %v1630
        %2712 = vmatmul.mubr.bf16.gmra.mxu0 %v1629
        %v2713 = vpop.f32.mrf.mxu0
        %v2714 = vadd.f32 %v820, %v2713
        %v2715 = vpop.f32.mrf.mxu0
        %v2716 = vadd.f32 %v824, %v2715
        %v2717 = vpop.f32.mrf.mxu0
        %v2718 = vadd.f32 %v820, %v2717
        %v2719 = vpop.f32.mrf.mxu0
        %v2720 = vadd.f32 %v824, %v2719
        %2721 = vmatprep.mubr.bf16.mxu0 %v1637
        %2722 = vmatmul.mubr.bf16.gmra.mxu0 %v1636
        %v2723 = vpop.f32.mrf.mxu0
        %v2724 = vadd.f32 %v820, %v2723
        %v2725 = vpop.f32.mrf.mxu0
        %v2726 = vadd.f32 %v824, %v2725
        %v2727 = vpop.f32.mrf.mxu0
        %v2728 = vadd.f32 %v820, %v2727
        %v2729 = vpop.f32.mrf.mxu0
        %v2730 = vadd.f32 %v824, %v2729
        %2731 = vmatprep.mubr.bf16.mxu0 %v1644
        %2732 = vmatmul.mubr.bf16.gmra.mxu0 %v1643
        %v2733 = vpop.f32.mrf.mxu0
        %v2734 = vadd.f32 %v820, %v2733
        %v2735 = vpop.f32.mrf.mxu0
        %v2736 = vadd.f32 %v824, %v2735
        %v2737 = vpop.f32.mrf.mxu0
        %v2738 = vadd.f32 %v820, %v2737
        %v2739 = vpop.f32.mrf.mxu0
        %v2740 = vadd.f32 %v824, %v2739
        %2741 = vmatprep.mubr.bf16.mxu0 %v1651
        %2742 = vmatmul.mubr.bf16.gmra.mxu0 %v1650
        %v2743 = vpop.f32.mrf.mxu0
        %v2744 = vadd.f32 %v820, %v2743
        %v2745 = vpop.f32.mrf.mxu0
        %v2746 = vadd.f32 %v824, %v2745
        %v2747 = vpop.f32.mrf.mxu0
        %v2748 = vadd.f32 %v820, %v2747
        %v2749 = vpop.f32.mrf.mxu0
        %v2750 = vadd.f32 %v824, %v2749
        %2751 = vmatprep.mubr.bf16.mxu0 %v1658
        %2752 = vmatmul.mubr.bf16.gmra.mxu0 %v1657
        %v2753 = vpop.f32.mrf.mxu0
        %v2754 = vadd.f32 %v820, %v2753
        %v2755 = vpop.f32.mrf.mxu0
        %v2756 = vadd.f32 %v824, %v2755
        %v2757 = vpop.f32.mrf.mxu0
        %v2758 = vadd.f32 %v820, %v2757
        %v2759 = vpop.f32.mrf.mxu0
        %v2760 = vadd.f32 %v824, %v2759
        %2761 = vmatprep.mubr.bf16.mxu0 %v1665
        %2762 = vmatmul.mubr.bf16.gmra.mxu0 %v1664
        %v2763 = vpop.f32.mrf.mxu0
        %v2764 = vadd.f32 %v820, %v2763
        %v2765 = vpop.f32.mrf.mxu0
        %v2766 = vadd.f32 %v824, %v2765
        %v2767 = vpop.f32.mrf.mxu0
        %v2768 = vadd.f32 %v820, %v2767
        %v2769 = vpop.f32.mrf.mxu0
        %v2770 = vadd.f32 %v824, %v2769
        %2771 = vmatprep.mubr.bf16.mxu0 %v1672
        %2772 = vmatmul.mubr.bf16.gmra.mxu0 %v1671
        %v2773 = vpop.f32.mrf.mxu0
        %v2774 = vadd.f32 %v820, %v2773
        %v2775 = vpop.f32.mrf.mxu0
        %v2776 = vadd.f32 %v824, %v2775
        %v2777 = vpop.f32.mrf.mxu0
        %v2778 = vadd.f32 %v820, %v2777
        %v2779 = vpop.f32.mrf.mxu0
        %v2780 = vadd.f32 %v824, %v2779
        %2781 = vmatprep.mubr.bf16.mxu0 %v1679
        %2782 = vmatmul.mubr.bf16.gmra.mxu0 %v1678
        %v2783 = vpop.f32.mrf.mxu0
        %v2784 = vadd.f32 %v820, %v2783
        %v2785 = vpop.f32.mrf.mxu0
        %v2786 = vadd.f32 %v824, %v2785
        %v2787 = vpop.f32.mrf.mxu0
        %v2788 = vadd.f32 %v820, %v2787
        %v2789 = vpop.f32.mrf.mxu0
        %v2790 = vadd.f32 %v824, %v2789
        %2791 = vmatprep.mubr.bf16.mxu0 %v1686
        %2792 = vmatmul.mubr.bf16.gmra.mxu0 %v1685
        %v2793 = vpop.f32.mrf.mxu0
        %v2794 = vadd.f32 %v820, %v2793
        %v2795 = vpop.f32.mrf.mxu0
        %v2796 = vadd.f32 %v824, %v2795
        %v2797 = vpop.f32.mrf.mxu0
        %v2798 = vadd.f32 %v820, %v2797
        %v2799 = vpop.f32.mrf.mxu0
        %v2800 = vadd.f32 %v824, %v2799
        %2801 = vmatprep.mubr.bf16.mxu0 %v1693
        %2802 = vmatmul.mubr.bf16.gmra.mxu0 %v1692
        %v2803 = vpop.f32.mrf.mxu0
        %v2804 = vadd.f32 %v820, %v2803
        %v2805 = vpop.f32.mrf.mxu0
        %v2806 = vadd.f32 %v824, %v2805
        %v2807 = vpop.f32.mrf.mxu0
        %v2808 = vadd.f32 %v820, %v2807
        %v2809 = vpop.f32.mrf.mxu0
        %v2810 = vadd.f32 %v824, %v2809
        %2811 = vmatprep.mubr.bf16.mxu0 %v1700
        %2812 = vmatmul.mubr.bf16.gmra.mxu0 %v1699
        %v2813 = vpop.f32.mrf.mxu0
        %v2814 = vadd.f32 %v820, %v2813
        %v2815 = vpop.f32.mrf.mxu0
        %v2816 = vadd.f32 %v824, %v2815
        %v2817 = vpop.f32.mrf.mxu0
        %v2818 = vadd.f32 %v820, %v2817
        %v2819 = vpop.f32.mrf.mxu0
        %v2820 = vadd.f32 %v824, %v2819
        %2821 = vmatprep.mubr.bf16.mxu0 %v1707
        %2822 = vmatmul.mubr.bf16.gmra.mxu0 %v1706
        %v2823 = vpop.f32.mrf.mxu0
        %v2824 = vadd.f32 %v820, %v2823
        %v2825 = vpop.f32.mrf.mxu0
        %v2826 = vadd.f32 %v824, %v2825
        %v2827 = vpop.f32.mrf.mxu0
        %v2828 = vadd.f32 %v820, %v2827
        %v2829 = vpop.f32.mrf.mxu0
        %v2830 = vadd.f32 %v824, %v2829
        %2831 = vmatprep.mubr.bf16.mxu0 %v1714
        %2832 = vmatmul.mubr.bf16.gmra.mxu0 %v1713
        %v2833 = vpop.f32.mrf.mxu0
        %v2834 = vadd.f32 %v820, %v2833
        %v2835 = vpop.f32.mrf.mxu0
        %v2836 = vadd.f32 %v824, %v2835
        %v2837 = vpop.f32.mrf.mxu0
        %v2838 = vadd.f32 %v820, %v2837
        %v2839 = vpop.f32.mrf.mxu0
        %v2840 = vadd.f32 %v824, %v2839
        %2841 = vmatprep.mubr.bf16.mxu0 %v1721
        %2842 = vmatmul.mubr.bf16.gmra.mxu0 %v1720
        %v2843 = vpop.f32.mrf.mxu0
        %v2844 = vadd.f32 %v820, %v2843
        %v2845 = vpop.f32.mrf.mxu0
        %v2846 = vadd.f32 %v824, %v2845
        %v2847 = vpop.f32.mrf.mxu0
        %v2848 = vadd.f32 %v820, %v2847
        %v2849 = vpop.f32.mrf.mxu0
        %v2850 = vadd.f32 %v824, %v2849
        %2851 = vmatprep.mubr.bf16.mxu0 %v1728
        %2852 = vmatmul.mubr.bf16.gmra.mxu0 %v1727
        %v2853 = vpop.f32.mrf.mxu0
        %v2854 = vadd.f32 %v820, %v2853
        %v2855 = vpop.f32.mrf.mxu0
        %v2856 = vadd.f32 %v824, %v2855
        %v2857 = vpop.f32.mrf.mxu0
        %v2858 = vadd.f32 %v820, %v2857
        %v2859 = vpop.f32.mrf.mxu0
        %v2860 = vadd.f32 %v824, %v2859
        %2861 = vmatprep.mubr.bf16.mxu0 %v1735
        %2862 = vmatmul.mubr.bf16.gmra.mxu0 %v1734
        %v2863 = vpop.f32.mrf.mxu0
        %v2864 = vadd.f32 %v820, %v2863
        %v2865 = vpop.f32.mrf.mxu0
        %v2866 = vadd.f32 %v824, %v2865
        %v2867 = vpop.f32.mrf.mxu0
        %v2868 = vadd.f32 %v820, %v2867
        %v2869 = vpop.f32.mrf.mxu0
        %v2870 = vadd.f32 %v824, %v2869
        %2871 = vmatprep.mubr.bf16.mxu0 %v1742
        %2872 = vmatmul.mubr.bf16.gmra.mxu0 %v1741
        %v2873 = vpop.f32.mrf.mxu0
        %v2874 = vadd.f32 %v820, %v2873
        %v2875 = vpop.f32.mrf.mxu0
        %v2876 = vadd.f32 %v824, %v2875
        %v2877 = vpop.f32.mrf.mxu0
        %v2878 = vadd.f32 %v820, %v2877
        %v2879 = vpop.f32.mrf.mxu0
        %v2880 = vadd.f32 %v824, %v2879
        %2881 = vmatprep.mubr.bf16.mxu0 %v1749
        %2882 = vmatmul.mubr.bf16.gmra.mxu0 %v1748
        %v2883 = vpop.f32.mrf.mxu0
        %v2884 = vadd.f32 %v820, %v2883
        %v2885 = vpop.f32.mrf.mxu0
        %v2886 = vadd.f32 %v824, %v2885
        %v2887 = vpop.f32.mrf.mxu0
        %v2888 = vadd.f32 %v820, %v2887
        %v2889 = vpop.f32.mrf.mxu0
        %v2890 = vadd.f32 %v824, %v2889
        %2891 = vdwg.mxu0
        %2892 = vmatprep.subr.bf16.mxu0 %v2362
        %2893 = vmatpush1.bf16.msra.mxu0 %v2361
        %2894 = vmatprep.subr.bf16.mxu0 %v2360
        %2895 = vmatpush1.bf16.msra.mxu0 %v2359
        %2896 = vmatprep.subr.bf16.mxu0 %v2358
        %2897 = vmatpush1.bf16.msra.mxu0 %v2357
        %2898 = vmatprep.subr.bf16.mxu0 %v2356
        %2899 = vmatpush1.bf16.msra.mxu0 %v2355
        %2900 = vmatprep.subr.bf16.mxu0 %v2354
        %2901 = vmatpush1.bf16.msra.mxu0 %v2353
        %2902 = vmatprep.subr.bf16.mxu0 %v2352
        %2903 = vmatpush1.bf16.msra.mxu0 %v2351
        %2904 = vmatprep.subr.bf16.mxu0 %v2350
        %2905 = vmatpush1.bf16.msra.mxu0 %v2349
        %2906 = vmatprep.subr.bf16.mxu0 %v2348
        %2907 = vmatpush1.bf16.msra.mxu0 %v2347
        %2908 = vmatprep.subr.bf16.mxu0 %v2378
        %2909 = vmatpush2.bf16.msra.mxu0 %v2377
        %2910 = vmatprep.subr.bf16.mxu0 %v2376
        %2911 = vmatpush2.bf16.msra.mxu0 %v2375
        %2912 = vmatprep.subr.bf16.mxu0 %v2374
        %2913 = vmatpush2.bf16.msra.mxu0 %v2373
        %2914 = vmatprep.subr.bf16.mxu0 %v2372
        %2915 = vmatpush2.bf16.msra.mxu0 %v2371
        %2916 = vmatprep.subr.bf16.mxu0 %v2370
        %2917 = vmatpush2.bf16.msra.mxu0 %v2369
        %2918 = vmatprep.subr.bf16.mxu0 %v2368
        %2919 = vmatpush2.bf16.msra.mxu0 %v2367
        %2920 = vmatprep.subr.bf16.mxu0 %v2366
        %2921 = vmatpush2.bf16.msra.mxu0 %v2365
        %2922 = vmatprep.subr.bf16.mxu0 %v2364
        %2923 = vmatpush2.bf16.msra.mxu0 %v2363
        %2924 = vmatprep.mubr.bf16.mxu0 %v1534
        %2925 = vmatmul.mubr.bf16.gmra.mxu0 %v1533
        %v2926 = vpop.f32.mrf.mxu0
        %v2927 = vadd.f32 %v2574, %v2926
        %v2928 = vpop.f32.mrf.mxu0
        %v2929 = vadd.f32 %v2576, %v2928
        %v2930 = vpop.f32.mrf.mxu0
        %v2931 = vadd.f32 %v2578, %v2930
        %v2932 = vpop.f32.mrf.mxu0
        %v2933 = vadd.f32 %v2580, %v2932
        %2934 = vmatprep.mubr.bf16.mxu0 %v1541
        %2935 = vmatmul.mubr.bf16.gmra.mxu0 %v1540
        %v2936 = vpop.f32.mrf.mxu0
        %v2937 = vadd.f32 %v2584, %v2936
        %v2938 = vpop.f32.mrf.mxu0
        %v2939 = vadd.f32 %v2586, %v2938
        %v2940 = vpop.f32.mrf.mxu0
        %v2941 = vadd.f32 %v2588, %v2940
        %v2942 = vpop.f32.mrf.mxu0
        %v2943 = vadd.f32 %v2590, %v2942
        %2944 = vmatprep.mubr.bf16.mxu0 %v1548
        %2945 = vmatmul.mubr.bf16.gmra.mxu0 %v1547
        %v2946 = vpop.f32.mrf.mxu0
        %v2947 = vadd.f32 %v2594, %v2946
        %v2948 = vpop.f32.mrf.mxu0
        %v2949 = vadd.f32 %v2596, %v2948
        %v2950 = vpop.f32.mrf.mxu0
        %v2951 = vadd.f32 %v2598, %v2950
        %v2952 = vpop.f32.mrf.mxu0
        %v2953 = vadd.f32 %v2600, %v2952
        %2954 = vmatprep.mubr.bf16.mxu0 %v1555
        %2955 = vmatmul.mubr.bf16.gmra.mxu0 %v1554
        %v2956 = vpop.f32.mrf.mxu0
        %v2957 = vadd.f32 %v2604, %v2956
        %v2958 = vpop.f32.mrf.mxu0
        %v2959 = vadd.f32 %v2606, %v2958
        %v2960 = vpop.f32.mrf.mxu0
        %v2961 = vadd.f32 %v2608, %v2960
        %v2962 = vpop.f32.mrf.mxu0
        %v2963 = vadd.f32 %v2610, %v2962
        %2964 = vmatprep.mubr.bf16.mxu0 %v1562
        %2965 = vmatmul.mubr.bf16.gmra.mxu0 %v1561
        %v2966 = vpop.f32.mrf.mxu0
        %v2967 = vadd.f32 %v2614, %v2966
        %v2968 = vpop.f32.mrf.mxu0
        %v2969 = vadd.f32 %v2616, %v2968
        %v2970 = vpop.f32.mrf.mxu0
        %v2971 = vadd.f32 %v2618, %v2970
        %v2972 = vpop.f32.mrf.mxu0
        %v2973 = vadd.f32 %v2620, %v2972
        %2974 = vmatprep.mubr.bf16.mxu0 %v1569
        %2975 = vmatmul.mubr.bf16.gmra.mxu0 %v1568
        %v2976 = vpop.f32.mrf.mxu0
        %v2977 = vadd.f32 %v2624, %v2976
        %v2978 = vpop.f32.mrf.mxu0
        %v2979 = vadd.f32 %v2626, %v2978
        %v2980 = vpop.f32.mrf.mxu0
        %v2981 = vadd.f32 %v2628, %v2980
        %v2982 = vpop.f32.mrf.mxu0
        %v2983 = vadd.f32 %v2630, %v2982
        %2984 = vmatprep.mubr.bf16.mxu0 %v1576
        %2985 = vmatmul.mubr.bf16.gmra.mxu0 %v1575
        %v2986 = vpop.f32.mrf.mxu0
        %v2987 = vadd.f32 %v2634, %v2986
        %v2988 = vpop.f32.mrf.mxu0
        %v2989 = vadd.f32 %v2636, %v2988
        %v2990 = vpop.f32.mrf.mxu0
        %v2991 = vadd.f32 %v2638, %v2990
        %v2992 = vpop.f32.mrf.mxu0
        %v2993 = vadd.f32 %v2640, %v2992
        %2994 = vmatprep.mubr.bf16.mxu0 %v1583
        %2995 = vmatmul.mubr.bf16.gmra.mxu0 %v1582
        %v2996 = vpop.f32.mrf.mxu0
        %v2997 = vadd.f32 %v2644, %v2996
        %v2998 = vpop.f32.mrf.mxu0
        %v2999 = vadd.f32 %v2646, %v2998
        %v3000 = vpop.f32.mrf.mxu0
        %v3001 = vadd.f32 %v2648, %v3000
        %v3002 = vpop.f32.mrf.mxu0
        %v3003 = vadd.f32 %v2650, %v3002
        %3004 = vmatprep.mubr.bf16.mxu0 %v1590
        %3005 = vmatmul.mubr.bf16.gmra.mxu0 %v1589
        %v3006 = vpop.f32.mrf.mxu0
        %v3007 = vadd.f32 %v2654, %v3006
        %v3008 = vpop.f32.mrf.mxu0
        %v3009 = vadd.f32 %v2656, %v3008
        %v3010 = vpop.f32.mrf.mxu0
        %v3011 = vadd.f32 %v2658, %v3010
        %v3012 = vpop.f32.mrf.mxu0
        %v3013 = vadd.f32 %v2660, %v3012
        %3014 = vmatprep.mubr.bf16.mxu0 %v1597
        %3015 = vmatmul.mubr.bf16.gmra.mxu0 %v1596
        %v3016 = vpop.f32.mrf.mxu0
        %v3017 = vadd.f32 %v2664, %v3016
        %v3018 = vpop.f32.mrf.mxu0
        %v3019 = vadd.f32 %v2666, %v3018
        %v3020 = vpop.f32.mrf.mxu0
        %v3021 = vadd.f32 %v2668, %v3020
        %v3022 = vpop.f32.mrf.mxu0
        %v3023 = vadd.f32 %v2670, %v3022
        %3024 = vmatprep.mubr.bf16.mxu0 %v1604
        %3025 = vmatmul.mubr.bf16.gmra.mxu0 %v1603
        %v3026 = vpop.f32.mrf.mxu0
        %v3027 = vadd.f32 %v2674, %v3026
        %v3028 = vpop.f32.mrf.mxu0
        %v3029 = vadd.f32 %v2676, %v3028
        %v3030 = vpop.f32.mrf.mxu0
        %v3031 = vadd.f32 %v2678, %v3030
        %v3032 = vpop.f32.mrf.mxu0
        %v3033 = vadd.f32 %v2680, %v3032
        %3034 = vmatprep.mubr.bf16.mxu0 %v1611
        %3035 = vmatmul.mubr.bf16.gmra.mxu0 %v1610
        %v3036 = vpop.f32.mrf.mxu0
        %v3037 = vadd.f32 %v2684, %v3036
        %v3038 = vpop.f32.mrf.mxu0
        %v3039 = vadd.f32 %v2686, %v3038
        %v3040 = vpop.f32.mrf.mxu0
        %v3041 = vadd.f32 %v2688, %v3040
        %v3042 = vpop.f32.mrf.mxu0
        %v3043 = vadd.f32 %v2690, %v3042
        %3044 = vmatprep.mubr.bf16.mxu0 %v1618
        %3045 = vmatmul.mubr.bf16.gmra.mxu0 %v1617
        %v3046 = vpop.f32.mrf.mxu0
        %v3047 = vadd.f32 %v2694, %v3046
        %v3048 = vpop.f32.mrf.mxu0
        %v3049 = vadd.f32 %v2696, %v3048
        %v3050 = vpop.f32.mrf.mxu0
        %v3051 = vadd.f32 %v2698, %v3050
        %v3052 = vpop.f32.mrf.mxu0
        %v3053 = vadd.f32 %v2700, %v3052
        %3054 = vmatprep.mubr.bf16.mxu0 %v1625
        %3055 = vmatmul.mubr.bf16.gmra.mxu0 %v1624
        %v3056 = vpop.f32.mrf.mxu0
        %v3057 = vadd.f32 %v2704, %v3056
        %v3058 = vpop.f32.mrf.mxu0
        %v3059 = vadd.f32 %v2706, %v3058
        %v3060 = vpop.f32.mrf.mxu0
        %v3061 = vadd.f32 %v2708, %v3060
        %v3062 = vpop.f32.mrf.mxu0
        %v3063 = vadd.f32 %v2710, %v3062
        %3064 = vmatprep.mubr.bf16.mxu0 %v1632
        %3065 = vmatmul.mubr.bf16.gmra.mxu0 %v1631
        %v3066 = vpop.f32.mrf.mxu0
        %v3067 = vadd.f32 %v2714, %v3066
        %v3068 = vpop.f32.mrf.mxu0
        %v3069 = vadd.f32 %v2716, %v3068
        %v3070 = vpop.f32.mrf.mxu0
        %v3071 = vadd.f32 %v2718, %v3070
        %v3072 = vpop.f32.mrf.mxu0
        %v3073 = vadd.f32 %v2720, %v3072
        %3074 = vmatprep.mubr.bf16.mxu0 %v1639
        %3075 = vmatmul.mubr.bf16.gmra.mxu0 %v1638
        %v3076 = vpop.f32.mrf.mxu0
        %v3077 = vadd.f32 %v2724, %v3076
        %v3078 = vpop.f32.mrf.mxu0
        %v3079 = vadd.f32 %v2726, %v3078
        %v3080 = vpop.f32.mrf.mxu0
        %v3081 = vadd.f32 %v2728, %v3080
        %v3082 = vpop.f32.mrf.mxu0
        %v3083 = vadd.f32 %v2730, %v3082
        %3084 = vmatprep.mubr.bf16.mxu0 %v1646
        %3085 = vmatmul.mubr.bf16.gmra.mxu0 %v1645
        %v3086 = vpop.f32.mrf.mxu0
        %v3087 = vadd.f32 %v2734, %v3086
        %v3088 = vpop.f32.mrf.mxu0
        %v3089 = vadd.f32 %v2736, %v3088
        %v3090 = vpop.f32.mrf.mxu0
        %v3091 = vadd.f32 %v2738, %v3090
        %v3092 = vpop.f32.mrf.mxu0
        %v3093 = vadd.f32 %v2740, %v3092
        %3094 = vmatprep.mubr.bf16.mxu0 %v1653
        %3095 = vmatmul.mubr.bf16.gmra.mxu0 %v1652
        %v3096 = vpop.f32.mrf.mxu0
        %v3097 = vadd.f32 %v2744, %v3096
        %v3098 = vpop.f32.mrf.mxu0
        %v3099 = vadd.f32 %v2746, %v3098
        %v3100 = vpop.f32.mrf.mxu0
        %v3101 = vadd.f32 %v2748, %v3100
        %v3102 = vpop.f32.mrf.mxu0
        %v3103 = vadd.f32 %v2750, %v3102
        %3104 = vmatprep.mubr.bf16.mxu0 %v1660
        %3105 = vmatmul.mubr.bf16.gmra.mxu0 %v1659
        %v3106 = vpop.f32.mrf.mxu0
        %v3107 = vadd.f32 %v2754, %v3106
        %v3108 = vpop.f32.mrf.mxu0
        %v3109 = vadd.f32 %v2756, %v3108
        %v3110 = vpop.f32.mrf.mxu0
        %v3111 = vadd.f32 %v2758, %v3110
        %v3112 = vpop.f32.mrf.mxu0
        %v3113 = vadd.f32 %v2760, %v3112
        %3114 = vmatprep.mubr.bf16.mxu0 %v1667
        %3115 = vmatmul.mubr.bf16.gmra.mxu0 %v1666
        %v3116 = vpop.f32.mrf.mxu0
        %v3117 = vadd.f32 %v2764, %v3116
        %v3118 = vpop.f32.mrf.mxu0
        %v3119 = vadd.f32 %v2766, %v3118
        %v3120 = vpop.f32.mrf.mxu0
        %v3121 = vadd.f32 %v2768, %v3120
        %v3122 = vpop.f32.mrf.mxu0
        %v3123 = vadd.f32 %v2770, %v3122
        %3124 = vmatprep.mubr.bf16.mxu0 %v1674
        %3125 = vmatmul.mubr.bf16.gmra.mxu0 %v1673
        %v3126 = vpop.f32.mrf.mxu0
        %v3127 = vadd.f32 %v2774, %v3126
        %v3128 = vpop.f32.mrf.mxu0
        %v3129 = vadd.f32 %v2776, %v3128
        %v3130 = vpop.f32.mrf.mxu0
        %v3131 = vadd.f32 %v2778, %v3130
        %v3132 = vpop.f32.mrf.mxu0
        %v3133 = vadd.f32 %v2780, %v3132
        %3134 = vmatprep.mubr.bf16.mxu0 %v1681
        %3135 = vmatmul.mubr.bf16.gmra.mxu0 %v1680
        %v3136 = vpop.f32.mrf.mxu0
        %v3137 = vadd.f32 %v2784, %v3136
        %v3138 = vpop.f32.mrf.mxu0
        %v3139 = vadd.f32 %v2786, %v3138
        %v3140 = vpop.f32.mrf.mxu0
        %v3141 = vadd.f32 %v2788, %v3140
        %v3142 = vpop.f32.mrf.mxu0
        %v3143 = vadd.f32 %v2790, %v3142
        %3144 = vmatprep.mubr.bf16.mxu0 %v1688
        %3145 = vmatmul.mubr.bf16.gmra.mxu0 %v1687
        %v3146 = vpop.f32.mrf.mxu0
        %v3147 = vadd.f32 %v2794, %v3146
        %v3148 = vpop.f32.mrf.mxu0
        %v3149 = vadd.f32 %v2796, %v3148
        %v3150 = vpop.f32.mrf.mxu0
        %v3151 = vadd.f32 %v2798, %v3150
        %v3152 = vpop.f32.mrf.mxu0
        %v3153 = vadd.f32 %v2800, %v3152
        %3154 = vmatprep.mubr.bf16.mxu0 %v1695
        %3155 = vmatmul.mubr.bf16.gmra.mxu0 %v1694
        %v3156 = vpop.f32.mrf.mxu0
        %v3157 = vadd.f32 %v2804, %v3156
        %v3158 = vpop.f32.mrf.mxu0
        %v3159 = vadd.f32 %v2806, %v3158
        %v3160 = vpop.f32.mrf.mxu0
        %v3161 = vadd.f32 %v2808, %v3160
        %v3162 = vpop.f32.mrf.mxu0
        %v3163 = vadd.f32 %v2810, %v3162
        %3164 = vmatprep.mubr.bf16.mxu0 %v1702
        %3165 = vmatmul.mubr.bf16.gmra.mxu0 %v1701
        %v3166 = vpop.f32.mrf.mxu0
        %v3167 = vadd.f32 %v2814, %v3166
        %v3168 = vpop.f32.mrf.mxu0
        %v3169 = vadd.f32 %v2816, %v3168
        %v3170 = vpop.f32.mrf.mxu0
        %v3171 = vadd.f32 %v2818, %v3170
        %v3172 = vpop.f32.mrf.mxu0
        %v3173 = vadd.f32 %v2820, %v3172
        %3174 = vmatprep.mubr.bf16.mxu0 %v1709
        %3175 = vmatmul.mubr.bf16.gmra.mxu0 %v1708
        %v3176 = vpop.f32.mrf.mxu0
        %v3177 = vadd.f32 %v2824, %v3176
        %v3178 = vpop.f32.mrf.mxu0
        %v3179 = vadd.f32 %v2826, %v3178
        %v3180 = vpop.f32.mrf.mxu0
        %v3181 = vadd.f32 %v2828, %v3180
        %v3182 = vpop.f32.mrf.mxu0
        %v3183 = vadd.f32 %v2830, %v3182
        %3184 = vmatprep.mubr.bf16.mxu0 %v1716
        %3185 = vmatmul.mubr.bf16.gmra.mxu0 %v1715
        %v3186 = vpop.f32.mrf.mxu0
        %v3187 = vadd.f32 %v2834, %v3186
        %v3188 = vpop.f32.mrf.mxu0
        %v3189 = vadd.f32 %v2836, %v3188
        %v3190 = vpop.f32.mrf.mxu0
        %v3191 = vadd.f32 %v2838, %v3190
        %v3192 = vpop.f32.mrf.mxu0
        %v3193 = vadd.f32 %v2840, %v3192
        %3194 = vmatprep.mubr.bf16.mxu0 %v1723
        %3195 = vmatmul.mubr.bf16.gmra.mxu0 %v1722
        %v3196 = vpop.f32.mrf.mxu0
        %v3197 = vadd.f32 %v2844, %v3196
        %v3198 = vpop.f32.mrf.mxu0
        %v3199 = vadd.f32 %v2846, %v3198
        %v3200 = vpop.f32.mrf.mxu0
        %v3201 = vadd.f32 %v2848, %v3200
        %v3202 = vpop.f32.mrf.mxu0
        %v3203 = vadd.f32 %v2850, %v3202
        %3204 = vmatprep.mubr.bf16.mxu0 %v1730
        %3205 = vmatmul.mubr.bf16.gmra.mxu0 %v1729
        %v3206 = vpop.f32.mrf.mxu0
        %v3207 = vadd.f32 %v2854, %v3206
        %v3208 = vpop.f32.mrf.mxu0
        %v3209 = vadd.f32 %v2856, %v3208
        %v3210 = vpop.f32.mrf.mxu0
        %v3211 = vadd.f32 %v2858, %v3210
        %v3212 = vpop.f32.mrf.mxu0
        %v3213 = vadd.f32 %v2860, %v3212
        %3214 = vmatprep.mubr.bf16.mxu0 %v1737
        %3215 = vmatmul.mubr.bf16.gmra.mxu0 %v1736
        %v3216 = vpop.f32.mrf.mxu0
        %v3217 = vadd.f32 %v2864, %v3216
        %v3218 = vpop.f32.mrf.mxu0
        %v3219 = vadd.f32 %v2866, %v3218
        %v3220 = vpop.f32.mrf.mxu0
        %v3221 = vadd.f32 %v2868, %v3220
        %v3222 = vpop.f32.mrf.mxu0
        %v3223 = vadd.f32 %v2870, %v3222
        %3224 = vmatprep.mubr.bf16.mxu0 %v1744
        %3225 = vmatmul.mubr.bf16.gmra.mxu0 %v1743
        %v3226 = vpop.f32.mrf.mxu0
        %v3227 = vadd.f32 %v2874, %v3226
        %v3228 = vpop.f32.mrf.mxu0
        %v3229 = vadd.f32 %v2876, %v3228
        %v3230 = vpop.f32.mrf.mxu0
        %v3231 = vadd.f32 %v2878, %v3230
        %v3232 = vpop.f32.mrf.mxu0
        %v3233 = vadd.f32 %v2880, %v3232
        %3234 = vmatprep.mubr.bf16.mxu0 %v1751
        %3235 = vmatmul.mubr.bf16.gmra.mxu0 %v1750
        %v3236 = vpop.f32.mrf.mxu0
        %v3237 = vadd.f32 %v2884, %v3236
        %v3238 = vpop.f32.mrf.mxu0
        %v3239 = vadd.f32 %v2886, %v3238
        %v3240 = vpop.f32.mrf.mxu0
        %v3241 = vadd.f32 %v2888, %v3240
        %v3242 = vpop.f32.mrf.mxu0
        %v3243 = vadd.f32 %v2890, %v3242
        %3244 = vdwg.mxu0
        %3245 = vmatprep.subr.bf16.mxu0 %v2394
        %3246 = vmatpush1.bf16.msra.mxu0 %v2393
        %3247 = vmatprep.subr.bf16.mxu0 %v2392
        %3248 = vmatpush1.bf16.msra.mxu0 %v2391
        %3249 = vmatprep.subr.bf16.mxu0 %v2390
        %3250 = vmatpush1.bf16.msra.mxu0 %v2389
        %3251 = vmatprep.subr.bf16.mxu0 %v2388
        %3252 = vmatpush1.bf16.msra.mxu0 %v2387
        %3253 = vmatprep.subr.bf16.mxu0 %v2386
        %3254 = vmatpush1.bf16.msra.mxu0 %v2385
        %3255 = vmatprep.subr.bf16.mxu0 %v2384
        %3256 = vmatpush1.bf16.msra.mxu0 %v2383
        %3257 = vmatprep.subr.bf16.mxu0 %v2382
        %3258 = vmatpush1.bf16.msra.mxu0 %v2381
        %3259 = vmatprep.subr.bf16.mxu0 %v2380
        %3260 = vmatpush1.bf16.msra.mxu0 %v2379
        %3261 = vmatprep.subr.bf16.mxu0 %v2410
        %3262 = vmatpush2.bf16.msra.mxu0 %v2409
        %3263 = vmatprep.subr.bf16.mxu0 %v2408
        %3264 = vmatpush2.bf16.msra.mxu0 %v2407
        %3265 = vmatprep.subr.bf16.mxu0 %v2406
        %3266 = vmatpush2.bf16.msra.mxu0 %v2405
        %3267 = vmatprep.subr.bf16.mxu0 %v2404
        %3268 = vmatpush2.bf16.msra.mxu0 %v2403
        %3269 = vmatprep.subr.bf16.mxu0 %v2402
        %3270 = vmatpush2.bf16.msra.mxu0 %v2401
        %3271 = vmatprep.subr.bf16.mxu0 %v2400
        %3272 = vmatpush2.bf16.msra.mxu0 %v2399
        %3273 = vmatprep.subr.bf16.mxu0 %v2398
        %3274 = vmatpush2.bf16.msra.mxu0 %v2397
        %3275 = vmatprep.subr.bf16.mxu0 %v2396
        %3276 = vmatpush2.bf16.msra.mxu0 %v2395
        %3277 = vmatprep.mubr.bf16.mxu0 %v1536
        %3278 = vmatmul.mubr.bf16.gmra.mxu0 %v1535
        %v3279 = vpop.f32.mrf.mxu0
        %v3280 = vadd.f32 %v2927, %v3279
        %v3281 = vpop.f32.mrf.mxu0
        %v3282 = vadd.f32 %v2929, %v3281
        %v3283 = vpop.f32.mrf.mxu0
        %v3284 = vadd.f32 %v2931, %v3283
        %v3285 = vpop.f32.mrf.mxu0
        %v3286 = vadd.f32 %v2933, %v3285
        %3287 = vmatprep.mubr.bf16.mxu0 %v1543
        %3288 = vmatmul.mubr.bf16.gmra.mxu0 %v1542
        %v3289 = vpop.f32.mrf.mxu0
        %v3290 = vadd.f32 %v2937, %v3289
        %v3291 = vpop.f32.mrf.mxu0
        %v3292 = vadd.f32 %v2939, %v3291
        %v3293 = vpop.f32.mrf.mxu0
        %v3294 = vadd.f32 %v2941, %v3293
        %v3295 = vpop.f32.mrf.mxu0
        %v3296 = vadd.f32 %v2943, %v3295
        %3297 = vmatprep.mubr.bf16.mxu0 %v1550
        %3298 = vmatmul.mubr.bf16.gmra.mxu0 %v1549
        %v3299 = vpop.f32.mrf.mxu0
        %v3300 = vadd.f32 %v2947, %v3299
        %v3301 = vpop.f32.mrf.mxu0
        %v3302 = vadd.f32 %v2949, %v3301
        %v3303 = vpop.f32.mrf.mxu0
        %v3304 = vadd.f32 %v2951, %v3303
        %v3305 = vpop.f32.mrf.mxu0
        %v3306 = vadd.f32 %v2953, %v3305
        %3307 = vmatprep.mubr.bf16.mxu0 %v1557
        %3308 = vmatmul.mubr.bf16.gmra.mxu0 %v1556
        %v3309 = vpop.f32.mrf.mxu0
        %v3310 = vadd.f32 %v2957, %v3309
        %v3311 = vpop.f32.mrf.mxu0
        %v3312 = vadd.f32 %v2959, %v3311
        %v3313 = vpop.f32.mrf.mxu0
        %v3314 = vadd.f32 %v2961, %v3313
        %v3315 = vpop.f32.mrf.mxu0
        %v3316 = vadd.f32 %v2963, %v3315
        %3317 = vmatprep.mubr.bf16.mxu0 %v1564
        %3318 = vmatmul.mubr.bf16.gmra.mxu0 %v1563
        %v3319 = vpop.f32.mrf.mxu0
        %v3320 = vadd.f32 %v2967, %v3319
        %v3321 = vpop.f32.mrf.mxu0
        %v3322 = vadd.f32 %v2969, %v3321
        %v3323 = vpop.f32.mrf.mxu0
        %v3324 = vadd.f32 %v2971, %v3323
        %v3325 = vpop.f32.mrf.mxu0
        %v3326 = vadd.f32 %v2973, %v3325
        %3327 = vmatprep.mubr.bf16.mxu0 %v1571
        %3328 = vmatmul.mubr.bf16.gmra.mxu0 %v1570
        %v3329 = vpop.f32.mrf.mxu0
        %v3330 = vadd.f32 %v2977, %v3329
        %v3331 = vpop.f32.mrf.mxu0
        %v3332 = vadd.f32 %v2979, %v3331
        %v3333 = vpop.f32.mrf.mxu0
        %v3334 = vadd.f32 %v2981, %v3333
        %v3335 = vpop.f32.mrf.mxu0
        %v3336 = vadd.f32 %v2983, %v3335
        %3337 = vmatprep.mubr.bf16.mxu0 %v1578
        %3338 = vmatmul.mubr.bf16.gmra.mxu0 %v1577
        %v3339 = vpop.f32.mrf.mxu0
        %v3340 = vadd.f32 %v2987, %v3339
        %v3341 = vpop.f32.mrf.mxu0
        %v3342 = vadd.f32 %v2989, %v3341
        %v3343 = vpop.f32.mrf.mxu0
        %v3344 = vadd.f32 %v2991, %v3343
        %v3345 = vpop.f32.mrf.mxu0
        %v3346 = vadd.f32 %v2993, %v3345
        %3347 = vmatprep.mubr.bf16.mxu0 %v1585
        %3348 = vmatmul.mubr.bf16.gmra.mxu0 %v1584
        %v3349 = vpop.f32.mrf.mxu0
        %v3350 = vadd.f32 %v2997, %v3349
        %v3351 = vpop.f32.mrf.mxu0
        %v3352 = vadd.f32 %v2999, %v3351
        %v3353 = vpop.f32.mrf.mxu0
        %v3354 = vadd.f32 %v3001, %v3353
        %v3355 = vpop.f32.mrf.mxu0
        %v3356 = vadd.f32 %v3003, %v3355
        %3357 = vmatprep.mubr.bf16.mxu0 %v1592
        %3358 = vmatmul.mubr.bf16.gmra.mxu0 %v1591
        %v3359 = vpop.f32.mrf.mxu0
        %v3360 = vadd.f32 %v3007, %v3359
        %v3361 = vpop.f32.mrf.mxu0
        %v3362 = vadd.f32 %v3009, %v3361
        %v3363 = vpop.f32.mrf.mxu0
        %v3364 = vadd.f32 %v3011, %v3363
        %v3365 = vpop.f32.mrf.mxu0
        %v3366 = vadd.f32 %v3013, %v3365
        %3367 = vmatprep.mubr.bf16.mxu0 %v1599
        %3368 = vmatmul.mubr.bf16.gmra.mxu0 %v1598
        %v3369 = vpop.f32.mrf.mxu0
        %v3370 = vadd.f32 %v3017, %v3369
        %v3371 = vpop.f32.mrf.mxu0
        %v3372 = vadd.f32 %v3019, %v3371
        %v3373 = vpop.f32.mrf.mxu0
        %v3374 = vadd.f32 %v3021, %v3373
        %v3375 = vpop.f32.mrf.mxu0
        %v3376 = vadd.f32 %v3023, %v3375
        %3377 = vmatprep.mubr.bf16.mxu0 %v1606
        %3378 = vmatmul.mubr.bf16.gmra.mxu0 %v1605
        %v3379 = vpop.f32.mrf.mxu0
        %v3380 = vadd.f32 %v3027, %v3379
        %v3381 = vpop.f32.mrf.mxu0
        %v3382 = vadd.f32 %v3029, %v3381
        %v3383 = vpop.f32.mrf.mxu0
        %v3384 = vadd.f32 %v3031, %v3383
        %v3385 = vpop.f32.mrf.mxu0
        %v3386 = vadd.f32 %v3033, %v3385
        %3387 = vmatprep.mubr.bf16.mxu0 %v1613
        %3388 = vmatmul.mubr.bf16.gmra.mxu0 %v1612
        %v3389 = vpop.f32.mrf.mxu0
        %v3390 = vadd.f32 %v3037, %v3389
        %v3391 = vpop.f32.mrf.mxu0
        %v3392 = vadd.f32 %v3039, %v3391
        %v3393 = vpop.f32.mrf.mxu0
        %v3394 = vadd.f32 %v3041, %v3393
        %v3395 = vpop.f32.mrf.mxu0
        %v3396 = vadd.f32 %v3043, %v3395
        %3397 = vmatprep.mubr.bf16.mxu0 %v1620
        %3398 = vmatmul.mubr.bf16.gmra.mxu0 %v1619
        %v3399 = vpop.f32.mrf.mxu0
        %v3400 = vadd.f32 %v3047, %v3399
        %v3401 = vpop.f32.mrf.mxu0
        %v3402 = vadd.f32 %v3049, %v3401
        %v3403 = vpop.f32.mrf.mxu0
        %v3404 = vadd.f32 %v3051, %v3403
        %v3405 = vpop.f32.mrf.mxu0
        %v3406 = vadd.f32 %v3053, %v3405
        %3407 = vmatprep.mubr.bf16.mxu0 %v1627
        %3408 = vmatmul.mubr.bf16.gmra.mxu0 %v1626
        %v3409 = vpop.f32.mrf.mxu0
        %v3410 = vadd.f32 %v3057, %v3409
        %v3411 = vpop.f32.mrf.mxu0
        %v3412 = vadd.f32 %v3059, %v3411
        %v3413 = vpop.f32.mrf.mxu0
        %v3414 = vadd.f32 %v3061, %v3413
        %v3415 = vpop.f32.mrf.mxu0
        %v3416 = vadd.f32 %v3063, %v3415
        %3417 = vmatprep.mubr.bf16.mxu0 %v1634
        %3418 = vmatmul.mubr.bf16.gmra.mxu0 %v1633
        %v3419 = vpop.f32.mrf.mxu0
        %v3420 = vadd.f32 %v3067, %v3419
        %v3421 = vpop.f32.mrf.mxu0
        %v3422 = vadd.f32 %v3069, %v3421
        %v3423 = vpop.f32.mrf.mxu0
        %v3424 = vadd.f32 %v3071, %v3423
        %v3425 = vpop.f32.mrf.mxu0
        %v3426 = vadd.f32 %v3073, %v3425
        %3427 = vmatprep.mubr.bf16.mxu0 %v1641
        %3428 = vmatmul.mubr.bf16.gmra.mxu0 %v1640
        %v3429 = vpop.f32.mrf.mxu0
        %v3430 = vadd.f32 %v3077, %v3429
        %v3431 = vpop.f32.mrf.mxu0
        %v3432 = vadd.f32 %v3079, %v3431
        %v3433 = vpop.f32.mrf.mxu0
        %v3434 = vadd.f32 %v3081, %v3433
        %v3435 = vpop.f32.mrf.mxu0
        %v3436 = vadd.f32 %v3083, %v3435
        %3437 = vmatprep.mubr.bf16.mxu0 %v1648
        %3438 = vmatmul.mubr.bf16.gmra.mxu0 %v1647
        %v3439 = vpop.f32.mrf.mxu0
        %v3440 = vadd.f32 %v3087, %v3439
        %v3441 = vpop.f32.mrf.mxu0
        %v3442 = vadd.f32 %v3089, %v3441
        %v3443 = vpop.f32.mrf.mxu0
        %v3444 = vadd.f32 %v3091, %v3443
        %v3445 = vpop.f32.mrf.mxu0
        %v3446 = vadd.f32 %v3093, %v3445
        %3447 = vmatprep.mubr.bf16.mxu0 %v1655
        %3448 = vmatmul.mubr.bf16.gmra.mxu0 %v1654
        %v3449 = vpop.f32.mrf.mxu0
        %v3450 = vadd.f32 %v3097, %v3449
        %v3451 = vpop.f32.mrf.mxu0
        %v3452 = vadd.f32 %v3099, %v3451
        %v3453 = vpop.f32.mrf.mxu0
        %v3454 = vadd.f32 %v3101, %v3453
        %v3455 = vpop.f32.mrf.mxu0
        %v3456 = vadd.f32 %v3103, %v3455
        %3457 = vmatprep.mubr.bf16.mxu0 %v1662
        %3458 = vmatmul.mubr.bf16.gmra.mxu0 %v1661
        %v3459 = vpop.f32.mrf.mxu0
        %v3460 = vadd.f32 %v3107, %v3459
        %v3461 = vpop.f32.mrf.mxu0
        %v3462 = vadd.f32 %v3109, %v3461
        %v3463 = vpop.f32.mrf.mxu0
        %v3464 = vadd.f32 %v3111, %v3463
        %v3465 = vpop.f32.mrf.mxu0
        %v3466 = vadd.f32 %v3113, %v3465
        %3467 = vmatprep.mubr.bf16.mxu0 %v1669
        %3468 = vmatmul.mubr.bf16.gmra.mxu0 %v1668
        %v3469 = vpop.f32.mrf.mxu0
        %v3470 = vadd.f32 %v3117, %v3469
        %v3471 = vpop.f32.mrf.mxu0
        %v3472 = vadd.f32 %v3119, %v3471
        %v3473 = vpop.f32.mrf.mxu0
        %v3474 = vadd.f32 %v3121, %v3473
        %v3475 = vpop.f32.mrf.mxu0
        %v3476 = vadd.f32 %v3123, %v3475
        %3477 = vmatprep.mubr.bf16.mxu0 %v1676
        %3478 = vmatmul.mubr.bf16.gmra.mxu0 %v1675
        %v3479 = vpop.f32.mrf.mxu0
        %v3480 = vadd.f32 %v3127, %v3479
        %v3481 = vpop.f32.mrf.mxu0
        %v3482 = vadd.f32 %v3129, %v3481
        %v3483 = vpop.f32.mrf.mxu0
        %v3484 = vadd.f32 %v3131, %v3483
        %v3485 = vpop.f32.mrf.mxu0
        %v3486 = vadd.f32 %v3133, %v3485
        %3487 = vmatprep.mubr.bf16.mxu0 %v1683
        %3488 = vmatmul.mubr.bf16.gmra.mxu0 %v1682
        %v3489 = vpop.f32.mrf.mxu0
        %v3490 = vadd.f32 %v3137, %v3489
        %v3491 = vpop.f32.mrf.mxu0
        %v3492 = vadd.f32 %v3139, %v3491
        %v3493 = vpop.f32.mrf.mxu0
        %v3494 = vadd.f32 %v3141, %v3493
        %v3495 = vpop.f32.mrf.mxu0
        %v3496 = vadd.f32 %v3143, %v3495
        %3497 = vmatprep.mubr.bf16.mxu0 %v1690
        %3498 = vmatmul.mubr.bf16.gmra.mxu0 %v1689
        %v3499 = vpop.f32.mrf.mxu0
        %v3500 = vadd.f32 %v3147, %v3499
        %v3501 = vpop.f32.mrf.mxu0
        %v3502 = vadd.f32 %v3149, %v3501
        %v3503 = vpop.f32.mrf.mxu0
        %v3504 = vadd.f32 %v3151, %v3503
        %v3505 = vpop.f32.mrf.mxu0
        %v3506 = vadd.f32 %v3153, %v3505
        %3507 = vmatprep.mubr.bf16.mxu0 %v1697
        %3508 = vmatmul.mubr.bf16.gmra.mxu0 %v1696
        %v3509 = vpop.f32.mrf.mxu0
        %v3510 = vadd.f32 %v3157, %v3509
        %v3511 = vpop.f32.mrf.mxu0
        %v3512 = vadd.f32 %v3159, %v3511
        %v3513 = vpop.f32.mrf.mxu0
        %v3514 = vadd.f32 %v3161, %v3513
        %v3515 = vpop.f32.mrf.mxu0
        %v3516 = vadd.f32 %v3163, %v3515
        %3517 = vmatprep.mubr.bf16.mxu0 %v1704
        %3518 = vmatmul.mubr.bf16.gmra.mxu0 %v1703
        %v3519 = vpop.f32.mrf.mxu0
        %v3520 = vadd.f32 %v3167, %v3519
        %v3521 = vpop.f32.mrf.mxu0
        %v3522 = vadd.f32 %v3169, %v3521
        %v3523 = vpop.f32.mrf.mxu0
        %v3524 = vadd.f32 %v3171, %v3523
        %v3525 = vpop.f32.mrf.mxu0
        %v3526 = vadd.f32 %v3173, %v3525
        %3527 = vmatprep.mubr.bf16.mxu0 %v1711
        %3528 = vmatmul.mubr.bf16.gmra.mxu0 %v1710
        %v3529 = vpop.f32.mrf.mxu0
        %v3530 = vadd.f32 %v3177, %v3529
        %v3531 = vpop.f32.mrf.mxu0
        %v3532 = vadd.f32 %v3179, %v3531
        %v3533 = vpop.f32.mrf.mxu0
        %v3534 = vadd.f32 %v3181, %v3533
        %v3535 = vpop.f32.mrf.mxu0
        %v3536 = vadd.f32 %v3183, %v3535
        %3537 = vmatprep.mubr.bf16.mxu0 %v1718
        %3538 = vmatmul.mubr.bf16.gmra.mxu0 %v1717
        %v3539 = vpop.f32.mrf.mxu0
        %v3540 = vadd.f32 %v3187, %v3539
        %v3541 = vpop.f32.mrf.mxu0
        %v3542 = vadd.f32 %v3189, %v3541
        %v3543 = vpop.f32.mrf.mxu0
        %v3544 = vadd.f32 %v3191, %v3543
        %v3545 = vpop.f32.mrf.mxu0
        %v3546 = vadd.f32 %v3193, %v3545
        %3547 = vmatprep.mubr.bf16.mxu0 %v1725
        %3548 = vmatmul.mubr.bf16.gmra.mxu0 %v1724
        %v3549 = vpop.f32.mrf.mxu0
        %v3550 = vadd.f32 %v3197, %v3549
        %v3551 = vpop.f32.mrf.mxu0
        %v3552 = vadd.f32 %v3199, %v3551
        %v3553 = vpop.f32.mrf.mxu0
        %v3554 = vadd.f32 %v3201, %v3553
        %v3555 = vpop.f32.mrf.mxu0
        %v3556 = vadd.f32 %v3203, %v3555
        %3557 = vmatprep.mubr.bf16.mxu0 %v1732
        %3558 = vmatmul.mubr.bf16.gmra.mxu0 %v1731
        %v3559 = vpop.f32.mrf.mxu0
        %v3560 = vadd.f32 %v3207, %v3559
        %v3561 = vpop.f32.mrf.mxu0
        %v3562 = vadd.f32 %v3209, %v3561
        %v3563 = vpop.f32.mrf.mxu0
        %v3564 = vadd.f32 %v3211, %v3563
        %v3565 = vpop.f32.mrf.mxu0
        %v3566 = vadd.f32 %v3213, %v3565
        %3567 = vmatprep.mubr.bf16.mxu0 %v1739
        %3568 = vmatmul.mubr.bf16.gmra.mxu0 %v1738
        %v3569 = vpop.f32.mrf.mxu0
        %v3570 = vadd.f32 %v3217, %v3569
        %v3571 = vpop.f32.mrf.mxu0
        %v3572 = vadd.f32 %v3219, %v3571
        %v3573 = vpop.f32.mrf.mxu0
        %v3574 = vadd.f32 %v3221, %v3573
        %v3575 = vpop.f32.mrf.mxu0
        %v3576 = vadd.f32 %v3223, %v3575
        %3577 = vmatprep.mubr.bf16.mxu0 %v1746
        %3578 = vmatmul.mubr.bf16.gmra.mxu0 %v1745
        %v3579 = vpop.f32.mrf.mxu0
        %v3580 = vadd.f32 %v3227, %v3579
        %v3581 = vpop.f32.mrf.mxu0
        %v3582 = vadd.f32 %v3229, %v3581
        %v3583 = vpop.f32.mrf.mxu0
        %v3584 = vadd.f32 %v3231, %v3583
        %v3585 = vpop.f32.mrf.mxu0
        %v3586 = vadd.f32 %v3233, %v3585
        %3587 = vmatprep.mubr.bf16.mxu0 %v1753
        %3588 = vmatmul.mubr.bf16.gmra.mxu0 %v1752
        %v3589 = vpop.f32.mrf.mxu0
        %v3590 = vadd.f32 %v3237, %v3589
        %v3591 = vpop.f32.mrf.mxu0
        %v3592 = vadd.f32 %v3239, %v3591
        %v3593 = vpop.f32.mrf.mxu0
        %v3594 = vadd.f32 %v3241, %v3593
        %v3595 = vpop.f32.mrf.mxu0
        %v3596 = vadd.f32 %v3243, %v3595
        %3597 = vdwg.mxu0
        %3598 = vmatprep.subr.bf16.mxu0 %v2426
        %3599 = vmatpush1.bf16.msra.mxu0 %v2425
        %3600 = vmatprep.subr.bf16.mxu0 %v2424
        %3601 = vmatpush1.bf16.msra.mxu0 %v2423
        %3602 = vmatprep.subr.bf16.mxu0 %v2422
        %3603 = vmatpush1.bf16.msra.mxu0 %v2421
        %3604 = vmatprep.subr.bf16.mxu0 %v2420
        %3605 = vmatpush1.bf16.msra.mxu0 %v2419
        %3606 = vmatprep.subr.bf16.mxu0 %v2418
        %3607 = vmatpush1.bf16.msra.mxu0 %v2417
        %3608 = vmatprep.subr.bf16.mxu0 %v2416
        %3609 = vmatpush1.bf16.msra.mxu0 %v2415
        %3610 = vmatprep.subr.bf16.mxu0 %v2414
        %3611 = vmatpush1.bf16.msra.mxu0 %v2413
        %3612 = vmatprep.subr.bf16.mxu0 %v2412
        %3613 = vmatpush1.bf16.msra.mxu0 %v2411
        %3614 = vmatprep.subr.bf16.mxu0 0
        %3615 = vmatpush2.bf16.msra.mxu0 0
        %3616 = vmatprep.subr.bf16.mxu0 0
        %3617 = vmatpush2.bf16.msra.mxu0 0
        %3618 = vmatprep.subr.bf16.mxu0 0
        %3619 = vmatpush2.bf16.msra.mxu0 0
        %3620 = vmatprep.subr.bf16.mxu0 0
        %3621 = vmatpush2.bf16.msra.mxu0 0
        %3622 = vmatprep.subr.bf16.mxu0 0
        %3623 = vmatpush2.bf16.msra.mxu0 0
        %3624 = vmatprep.subr.bf16.mxu0 0
        %3625 = vmatpush2.bf16.msra.mxu0 0
        %3626 = vmatprep.subr.bf16.mxu0 0
        %3627 = vmatpush2.bf16.msra.mxu0 0
        %3628 = vmatprep.subr.bf16.mxu0 0
        %3629 = vmatpush2.bf16.msra.mxu0 0
        %3630 = vmatprep.mubr.bf16.mxu0 0
        %3631 = vmatmul.mubr.bf16.gmra.mxu0 %v1537
        %v3632 = vpop.f32.mrf.mxu0
        %v3633 = vadd.f32 %v3280, %v3632
        %v3634 = vpop.f32.mrf.mxu0
        %v3635 = vadd.f32 %v3282, %v3634
        %v3636 = vpop.f32.mrf.mxu0
        %v3637 = vadd.f32 %v3284, %v3636
        %v3638 = vpop.f32.mrf.mxu0
        %v3639 = vadd.f32 %v3286, %v3638
        %3640 = vmatprep.mubr.bf16.mxu0 0
        %3641 = vmatmul.mubr.bf16.gmra.mxu0 %v1544
        %v3642 = vpop.f32.mrf.mxu0
        %v3643 = vadd.f32 %v3290, %v3642
        %v3644 = vpop.f32.mrf.mxu0
        %v3645 = vadd.f32 %v3292, %v3644
        %v3646 = vpop.f32.mrf.mxu0
        %v3647 = vadd.f32 %v3294, %v3646
        %v3648 = vpop.f32.mrf.mxu0
        %v3649 = vadd.f32 %v3296, %v3648
        %3650 = vmatprep.mubr.bf16.mxu0 0
        %3651 = vmatmul.mubr.bf16.gmra.mxu0 %v1551
        %v3652 = vpop.f32.mrf.mxu0
        %v3653 = vadd.f32 %v3300, %v3652
        %v3654 = vpop.f32.mrf.mxu0
        %v3655 = vadd.f32 %v3302, %v3654
        %v3656 = vpop.f32.mrf.mxu0
        %v3657 = vadd.f32 %v3304, %v3656
        %v3658 = vpop.f32.mrf.mxu0
        %v3659 = vadd.f32 %v3306, %v3658
        %3660 = vmatprep.mubr.bf16.mxu0 0
        %3661 = vmatmul.mubr.bf16.gmra.mxu0 %v1558
        %v3662 = vpop.f32.mrf.mxu0
        %v3663 = vadd.f32 %v3310, %v3662
        %v3664 = vpop.f32.mrf.mxu0
        %v3665 = vadd.f32 %v3312, %v3664
        %v3666 = vpop.f32.mrf.mxu0
        %v3667 = vadd.f32 %v3314, %v3666
        %v3668 = vpop.f32.mrf.mxu0
        %v3669 = vadd.f32 %v3316, %v3668
        %3670 = vmatprep.mubr.bf16.mxu0 0
        %3671 = vmatmul.mubr.bf16.gmra.mxu0 %v1565
        %v3672 = vpop.f32.mrf.mxu0
        %v3673 = vadd.f32 %v3320, %v3672
        %v3674 = vpop.f32.mrf.mxu0
        %v3675 = vadd.f32 %v3322, %v3674
        %v3676 = vpop.f32.mrf.mxu0
        %v3677 = vadd.f32 %v3324, %v3676
        %v3678 = vpop.f32.mrf.mxu0
        %v3679 = vadd.f32 %v3326, %v3678
        %3680 = vmatprep.mubr.bf16.mxu0 0
        %3681 = vmatmul.mubr.bf16.gmra.mxu0 %v1572
        %v3682 = vpop.f32.mrf.mxu0
        %v3683 = vadd.f32 %v3330, %v3682
        %v3684 = vpop.f32.mrf.mxu0
        %v3685 = vadd.f32 %v3332, %v3684
        %v3686 = vpop.f32.mrf.mxu0
        %v3687 = vadd.f32 %v3334, %v3686
        %v3688 = vpop.f32.mrf.mxu0
        %v3689 = vadd.f32 %v3336, %v3688
        %3690 = vmatprep.mubr.bf16.mxu0 0
        %3691 = vmatmul.mubr.bf16.gmra.mxu0 %v1579
        %v3692 = vpop.f32.mrf.mxu0
        %v3693 = vadd.f32 %v3340, %v3692
        %v3694 = vpop.f32.mrf.mxu0
        %v3695 = vadd.f32 %v3342, %v3694
        %v3696 = vpop.f32.mrf.mxu0
        %v3697 = vadd.f32 %v3344, %v3696
        %v3698 = vpop.f32.mrf.mxu0
        %v3699 = vadd.f32 %v3346, %v3698
        %3700 = vmatprep.mubr.bf16.mxu0 0
        %3701 = vmatmul.mubr.bf16.gmra.mxu0 %v1586
        %v3702 = vpop.f32.mrf.mxu0
        %v3703 = vadd.f32 %v3350, %v3702
        %v3704 = vpop.f32.mrf.mxu0
        %v3705 = vadd.f32 %v3352, %v3704
        %v3706 = vpop.f32.mrf.mxu0
        %v3707 = vadd.f32 %v3354, %v3706
        %v3708 = vpop.f32.mrf.mxu0
        %v3709 = vadd.f32 %v3356, %v3708
        %3710 = vmatprep.mubr.bf16.mxu0 0
        %3711 = vmatmul.mubr.bf16.gmra.mxu0 %v1593
        %v3712 = vpop.f32.mrf.mxu0
        %v3713 = vadd.f32 %v3360, %v3712
        %v3714 = vpop.f32.mrf.mxu0
        %v3715 = vadd.f32 %v3362, %v3714
        %v3716 = vpop.f32.mrf.mxu0
        %v3717 = vadd.f32 %v3364, %v3716
        %v3718 = vpop.f32.mrf.mxu0
        %v3719 = vadd.f32 %v3366, %v3718
        %3720 = vmatprep.mubr.bf16.mxu0 0
        %3721 = vmatmul.mubr.bf16.gmra.mxu0 %v1600
        %v3722 = vpop.f32.mrf.mxu0
        %v3723 = vadd.f32 %v3370, %v3722
        %v3724 = vpop.f32.mrf.mxu0
        %v3725 = vadd.f32 %v3372, %v3724
        %v3726 = vpop.f32.mrf.mxu0
        %v3727 = vadd.f32 %v3374, %v3726
        %v3728 = vpop.f32.mrf.mxu0
        %v3729 = vadd.f32 %v3376, %v3728
        %3730 = vmatprep.mubr.bf16.mxu0 0
        %3731 = vmatmul.mubr.bf16.gmra.mxu0 %v1607
        %v3732 = vpop.f32.mrf.mxu0
        %v3733 = vadd.f32 %v3380, %v3732
        %v3734 = vpop.f32.mrf.mxu0
        %v3735 = vadd.f32 %v3382, %v3734
        %v3736 = vpop.f32.mrf.mxu0
        %v3737 = vadd.f32 %v3384, %v3736
        %v3738 = vpop.f32.mrf.mxu0
        %v3739 = vadd.f32 %v3386, %v3738
        %3740 = vmatprep.mubr.bf16.mxu0 0
        %3741 = vmatmul.mubr.bf16.gmra.mxu0 %v1614
        %v3742 = vpop.f32.mrf.mxu0
        %v3743 = vadd.f32 %v3390, %v3742
        %v3744 = vpop.f32.mrf.mxu0
        %v3745 = vadd.f32 %v3392, %v3744
        %v3746 = vpop.f32.mrf.mxu0
        %v3747 = vadd.f32 %v3394, %v3746
        %v3748 = vpop.f32.mrf.mxu0
        %v3749 = vadd.f32 %v3396, %v3748
        %3750 = vmatprep.mubr.bf16.mxu0 0
        %3751 = vmatmul.mubr.bf16.gmra.mxu0 %v1621
        %v3752 = vpop.f32.mrf.mxu0
        %v3753 = vadd.f32 %v3400, %v3752
        %v3754 = vpop.f32.mrf.mxu0
        %v3755 = vadd.f32 %v3402, %v3754
        %v3756 = vpop.f32.mrf.mxu0
        %v3757 = vadd.f32 %v3404, %v3756
        %v3758 = vpop.f32.mrf.mxu0
        %v3759 = vadd.f32 %v3406, %v3758
        %3760 = vmatprep.mubr.bf16.mxu0 0
        %3761 = vmatmul.mubr.bf16.gmra.mxu0 %v1628
        %v3762 = vpop.f32.mrf.mxu0
        %v3763 = vadd.f32 %v3410, %v3762
        %v3764 = vpop.f32.mrf.mxu0
        %v3765 = vadd.f32 %v3412, %v3764
        %v3766 = vpop.f32.mrf.mxu0
        %v3767 = vadd.f32 %v3414, %v3766
        %v3768 = vpop.f32.mrf.mxu0
        %v3769 = vadd.f32 %v3416, %v3768
        %3770 = vmatprep.mubr.bf16.mxu0 0
        %3771 = vmatmul.mubr.bf16.gmra.mxu0 %v1635
        %v3772 = vpop.f32.mrf.mxu0
        %v3773 = vadd.f32 %v3420, %v3772
        %v3774 = vpop.f32.mrf.mxu0
        %v3775 = vadd.f32 %v3422, %v3774
        %v3776 = vpop.f32.mrf.mxu0
        %v3777 = vadd.f32 %v3424, %v3776
        %v3778 = vpop.f32.mrf.mxu0
        %v3779 = vadd.f32 %v3426, %v3778
        %3780 = vmatprep.mubr.bf16.mxu0 0
        %3781 = vmatmul.mubr.bf16.gmra.mxu0 %v1642
        %v3782 = vpop.f32.mrf.mxu0
        %v3783 = vadd.f32 %v3430, %v3782
        %v3784 = vpop.f32.mrf.mxu0
        %v3785 = vadd.f32 %v3432, %v3784
        %v3786 = vpop.f32.mrf.mxu0
        %v3787 = vadd.f32 %v3434, %v3786
        %v3788 = vpop.f32.mrf.mxu0
        %v3789 = vadd.f32 %v3436, %v3788
        %3790 = vmatprep.mubr.bf16.mxu0 0
        %3791 = vmatmul.mubr.bf16.gmra.mxu0 %v1649
        %v3792 = vpop.f32.mrf.mxu0
        %v3793 = vadd.f32 %v3440, %v3792
        %v3794 = vpop.f32.mrf.mxu0
        %v3795 = vadd.f32 %v3442, %v3794
        %v3796 = vpop.f32.mrf.mxu0
        %v3797 = vadd.f32 %v3444, %v3796
        %v3798 = vpop.f32.mrf.mxu0
        %v3799 = vadd.f32 %v3446, %v3798
        %3800 = vmatprep.mubr.bf16.mxu0 0
        %3801 = vmatmul.mubr.bf16.gmra.mxu0 %v1656
        %v3802 = vpop.f32.mrf.mxu0
        %v3803 = vadd.f32 %v3450, %v3802
        %v3804 = vpop.f32.mrf.mxu0
        %v3805 = vadd.f32 %v3452, %v3804
        %v3806 = vpop.f32.mrf.mxu0
        %v3807 = vadd.f32 %v3454, %v3806
        %v3808 = vpop.f32.mrf.mxu0
        %v3809 = vadd.f32 %v3456, %v3808
        %3810 = vmatprep.mubr.bf16.mxu0 0
        %3811 = vmatmul.mubr.bf16.gmra.mxu0 %v1663
        %v3812 = vpop.f32.mrf.mxu0
        %v3813 = vadd.f32 %v3460, %v3812
        %v3814 = vpop.f32.mrf.mxu0
        %v3815 = vadd.f32 %v3462, %v3814
        %v3816 = vpop.f32.mrf.mxu0
        %v3817 = vadd.f32 %v3464, %v3816
        %v3818 = vpop.f32.mrf.mxu0
        %v3819 = vadd.f32 %v3466, %v3818
        %3820 = vmatprep.mubr.bf16.mxu0 0
        %3821 = vmatmul.mubr.bf16.gmra.mxu0 %v1670
        %v3822 = vpop.f32.mrf.mxu0
        %v3823 = vadd.f32 %v3470, %v3822
        %v3824 = vpop.f32.mrf.mxu0
        %v3825 = vadd.f32 %v3472, %v3824
        %v3826 = vpop.f32.mrf.mxu0
        %v3827 = vadd.f32 %v3474, %v3826
        %v3828 = vpop.f32.mrf.mxu0
        %v3829 = vadd.f32 %v3476, %v3828
        %3830 = vmatprep.mubr.bf16.mxu0 0
        %3831 = vmatmul.mubr.bf16.gmra.mxu0 %v1677
        %v3832 = vpop.f32.mrf.mxu0
        %v3833 = vadd.f32 %v3480, %v3832
        %v3834 = vpop.f32.mrf.mxu0
        %v3835 = vadd.f32 %v3482, %v3834
        %v3836 = vpop.f32.mrf.mxu0
        %v3837 = vadd.f32 %v3484, %v3836
        %v3838 = vpop.f32.mrf.mxu0
        %v3839 = vadd.f32 %v3486, %v3838
        %3840 = vmatprep.mubr.bf16.mxu0 0
        %3841 = vmatmul.mubr.bf16.gmra.mxu0 %v1684
        %v3842 = vpop.f32.mrf.mxu0
        %v3843 = vadd.f32 %v3490, %v3842
        %v3844 = vpop.f32.mrf.mxu0
        %v3845 = vadd.f32 %v3492, %v3844
        %v3846 = vpop.f32.mrf.mxu0
        %v3847 = vadd.f32 %v3494, %v3846
        %v3848 = vpop.f32.mrf.mxu0
        %v3849 = vadd.f32 %v3496, %v3848
        %3850 = vmatprep.mubr.bf16.mxu0 0
        %3851 = vmatmul.mubr.bf16.gmra.mxu0 %v1691
        %v3852 = vpop.f32.mrf.mxu0
        %v3853 = vadd.f32 %v3500, %v3852
        %v3854 = vpop.f32.mrf.mxu0
        %v3855 = vadd.f32 %v3502, %v3854
        %v3856 = vpop.f32.mrf.mxu0
        %v3857 = vadd.f32 %v3504, %v3856
        %v3858 = vpop.f32.mrf.mxu0
        %v3859 = vadd.f32 %v3506, %v3858
        %3860 = vmatprep.mubr.bf16.mxu0 0
        %3861 = vmatmul.mubr.bf16.gmra.mxu0 %v1698
        %v3862 = vpop.f32.mrf.mxu0
        %v3863 = vadd.f32 %v3510, %v3862
        %v3864 = vpop.f32.mrf.mxu0
        %v3865 = vadd.f32 %v3512, %v3864
        %v3866 = vpop.f32.mrf.mxu0
        %v3867 = vadd.f32 %v3514, %v3866
        %v3868 = vpop.f32.mrf.mxu0
        %v3869 = vadd.f32 %v3516, %v3868
        %3870 = vmatprep.mubr.bf16.mxu0 0
        %3871 = vmatmul.mubr.bf16.gmra.mxu0 %v1705
        %v3872 = vpop.f32.mrf.mxu0
        %v3873 = vadd.f32 %v3520, %v3872
        %v3874 = vpop.f32.mrf.mxu0
        %v3875 = vadd.f32 %v3522, %v3874
        %v3876 = vpop.f32.mrf.mxu0
        %v3877 = vadd.f32 %v3524, %v3876
        %v3878 = vpop.f32.mrf.mxu0
        %v3879 = vadd.f32 %v3526, %v3878
        %3880 = vmatprep.mubr.bf16.mxu0 0
        %3881 = vmatmul.mubr.bf16.gmra.mxu0 %v1712
        %v3882 = vpop.f32.mrf.mxu0
        %v3883 = vadd.f32 %v3530, %v3882
        %v3884 = vpop.f32.mrf.mxu0
        %v3885 = vadd.f32 %v3532, %v3884
        %v3886 = vpop.f32.mrf.mxu0
        %v3887 = vadd.f32 %v3534, %v3886
        %v3888 = vpop.f32.mrf.mxu0
        %v3889 = vadd.f32 %v3536, %v3888
        %3890 = vmatprep.mubr.bf16.mxu0 0
        %3891 = vmatmul.mubr.bf16.gmra.mxu0 %v1719
        %v3892 = vpop.f32.mrf.mxu0
        %v3893 = vadd.f32 %v3540, %v3892
        %v3894 = vpop.f32.mrf.mxu0
        %v3895 = vadd.f32 %v3542, %v3894
        %v3896 = vpop.f32.mrf.mxu0
        %v3897 = vadd.f32 %v3544, %v3896
        %v3898 = vpop.f32.mrf.mxu0
        %v3899 = vadd.f32 %v3546, %v3898
        %3900 = vmatprep.mubr.bf16.mxu0 0
        %3901 = vmatmul.mubr.bf16.gmra.mxu0 %v1726
        %v3902 = vpop.f32.mrf.mxu0
        %v3903 = vadd.f32 %v3550, %v3902
        %v3904 = vpop.f32.mrf.mxu0
        %v3905 = vadd.f32 %v3552, %v3904
        %v3906 = vpop.f32.mrf.mxu0
        %v3907 = vadd.f32 %v3554, %v3906
        %v3908 = vpop.f32.mrf.mxu0
        %v3909 = vadd.f32 %v3556, %v3908
        %3910 = vmatprep.mubr.bf16.mxu0 0
        %3911 = vmatmul.mubr.bf16.gmra.mxu0 %v1733
        %v3912 = vpop.f32.mrf.mxu0
        %v3913 = vadd.f32 %v3560, %v3912
        %v3914 = vpop.f32.mrf.mxu0
        %v3915 = vadd.f32 %v3562, %v3914
        %v3916 = vpop.f32.mrf.mxu0
        %v3917 = vadd.f32 %v3564, %v3916
        %v3918 = vpop.f32.mrf.mxu0
        %v3919 = vadd.f32 %v3566, %v3918
        %3920 = vmatprep.mubr.bf16.mxu0 0
        %3921 = vmatmul.mubr.bf16.gmra.mxu0 %v1740
        %v3922 = vpop.f32.mrf.mxu0
        %v3923 = vadd.f32 %v3570, %v3922
        %v3924 = vpop.f32.mrf.mxu0
        %v3925 = vadd.f32 %v3572, %v3924
        %v3926 = vpop.f32.mrf.mxu0
        %v3927 = vadd.f32 %v3574, %v3926
        %v3928 = vpop.f32.mrf.mxu0
        %v3929 = vadd.f32 %v3576, %v3928
        %3930 = vmatprep.mubr.bf16.mxu0 0
        %3931 = vmatmul.mubr.bf16.gmra.mxu0 %v1747
        %v3932 = vpop.f32.mrf.mxu0
        %v3933 = vadd.f32 %v3580, %v3932
        %v3934 = vpop.f32.mrf.mxu0
        %v3935 = vadd.f32 %v3582, %v3934
        %v3936 = vpop.f32.mrf.mxu0
        %v3937 = vadd.f32 %v3584, %v3936
        %v3938 = vpop.f32.mrf.mxu0
        %v3939 = vadd.f32 %v3586, %v3938
        %3940 = vmatprep.mubr.bf16.mxu0 0
        %3941 = vmatmul.mubr.bf16.gmra.mxu0 %v1754
        %v3942 = vpop.f32.mrf.mxu0
        %v3943 = vadd.f32 %v3590, %v3942
        %v3944 = vpop.f32.mrf.mxu0
        %v3945 = vadd.f32 %v3592, %v3944
        %v3946 = vpop.f32.mrf.mxu0
        %v3947 = vadd.f32 %v3594, %v3946
        %v3948 = vpop.f32.mrf.mxu0
        %v3949 = vadd.f32 %v3596, %v3948
        %3950 = vdwg.mxu0
        %v3951 = vmax.f32 %v3633, 0.0
        %v3952 = vmax.f32 %v3635, 0.0
        %v3953 = vmax.f32 %v3637, 0.0
        %v3954 = vmax.f32 %v3639, 0.0
        %v3955 = vmax.f32 %v3643, 0.0
        %v3956 = vmax.f32 %v3645, 0.0
        %v3957 = vmax.f32 %v3647, 0.0
        %v3958 = vmax.f32 %v3649, 0.0
        %v3959 = vmax.f32 %v3653, 0.0
        %v3960 = vmax.f32 %v3655, 0.0
        %v3961 = vmax.f32 %v3657, 0.0
        %v3962 = vmax.f32 %v3659, 0.0
        %v3963 = vmax.f32 %v3663, 0.0
        %v3964 = vmax.f32 %v3665, 0.0
        %v3965 = vmax.f32 %v3667, 0.0
        %v3966 = vmax.f32 %v3669, 0.0
        %v3967 = vmax.f32 %v3673, 0.0
        %v3968 = vmax.f32 %v3675, 0.0
        %v3969 = vmax.f32 %v3677, 0.0
        %v3970 = vmax.f32 %v3679, 0.0
        %v3971 = vmax.f32 %v3683, 0.0
        %v3972 = vmax.f32 %v3685, 0.0
        %v3973 = vmax.f32 %v3687, 0.0
        %v3974 = vmax.f32 %v3689, 0.0
        %v3975 = vmax.f32 %v3693, 0.0
        %v3976 = vmax.f32 %v3695, 0.0
        %v3977 = vmax.f32 %v3697, 0.0
        %v3978 = vmax.f32 %v3699, 0.0
        %v3979 = vmax.f32 %v3703, 0.0
        %v3980 = vmax.f32 %v3705, 0.0
        %v3981 = vmax.f32 %v3707, 0.0
        %v3982 = vmax.f32 %v3709, 0.0
        %v3983 = vmax.f32 %v3713, 0.0
        %v3984 = vmax.f32 %v3715, 0.0
        %v3985 = vmax.f32 %v3717, 0.0
        %v3986 = vmax.f32 %v3719, 0.0
        %v3987 = vmax.f32 %v3723, 0.0
        %v3988 = vmax.f32 %v3725, 0.0
        %v3989 = vmax.f32 %v3727, 0.0
        %v3990 = vmax.f32 %v3729, 0.0
        %v3991 = vmax.f32 %v3733, 0.0
        %v3992 = vmax.f32 %v3735, 0.0
        %v3993 = vmax.f32 %v3737, 0.0
        %v3994 = vmax.f32 %v3739, 0.0
        %v3995 = vmax.f32 %v3743, 0.0
        %v3996 = vmax.f32 %v3745, 0.0
        %v3997 = vmax.f32 %v3747, 0.0
        %v3998 = vmax.f32 %v3749, 0.0
        %v3999 = vmax.f32 %v3753, 0.0
        %v4000 = vmax.f32 %v3755, 0.0
        %v4001 = vmax.f32 %v3757, 0.0
        %v4002 = vmax.f32 %v3759, 0.0
        %v4003 = vmax.f32 %v3763, 0.0
        %v4004 = vmax.f32 %v3765, 0.0
        %v4005 = vmax.f32 %v3767, 0.0
        %v4006 = vmax.f32 %v3769, 0.0
        %v4007 = vmax.f32 %v3773, 0.0
        %v4008 = vmax.f32 %v3775, 0.0
        %v4009 = vmax.f32 %v3777, 0.0
        %v4010 = vmax.f32 %v3779, 0.0
        %v4011 = vmax.f32 %v3783, 0.0
        %v4012 = vmax.f32 %v3785, 0.0
        %v4013 = vmax.f32 %v3787, 0.0
        %v4014 = vmax.f32 %v3789, 0.0
        %v4015 = vmax.f32 %v3793, 0.0
        %v4016 = vmax.f32 %v3795, 0.0
        %v4017 = vmax.f32 %v3797, 0.0
        %v4018 = vmax.f32 %v3799, 0.0
        %v4019 = vmax.f32 %v3803, 0.0
        %v4020 = vmax.f32 %v3805, 0.0
        %v4021 = vmax.f32 %v3807, 0.0
        %v4022 = vmax.f32 %v3809, 0.0
        %v4023 = vmax.f32 %v3813, 0.0
        %v4024 = vmax.f32 %v3815, 0.0
        %v4025 = vmax.f32 %v3817, 0.0
        %v4026 = vmax.f32 %v3819, 0.0
        %v4027 = vmax.f32 %v3823, 0.0
        %v4028 = vmax.f32 %v3825, 0.0
        %v4029 = vmax.f32 %v3827, 0.0
        %v4030 = vmax.f32 %v3829, 0.0
        %v4031 = vmax.f32 %v3833, 0.0
        %v4032 = vmax.f32 %v3835, 0.0
        %v4033 = vmax.f32 %v3837, 0.0
        %v4034 = vmax.f32 %v3839, 0.0
        %v4035 = vmax.f32 %v3843, 0.0
        %v4036 = vmax.f32 %v3845, 0.0
        %v4037 = vmax.f32 %v3847, 0.0
        %v4038 = vmax.f32 %v3849, 0.0
        %v4039 = vmax.f32 %v3853, 0.0
        %v4040 = vmax.f32 %v3855, 0.0
        %v4041 = vmax.f32 %v3857, 0.0
        %v4042 = vmax.f32 %v3859, 0.0
        %v4043 = vmax.f32 %v3863, 0.0
        %v4044 = vmax.f32 %v3865, 0.0
        %v4045 = vmax.f32 %v3867, 0.0
        %v4046 = vmax.f32 %v3869, 0.0
        %v4047 = vmax.f32 %v3873, 0.0
        %v4048 = vmax.f32 %v3875, 0.0
        %v4049 = vmax.f32 %v3877, 0.0
        %v4050 = vmax.f32 %v3879, 0.0
        %v4051 = vmax.f32 %v3883, 0.0
        %v4052 = vmax.f32 %v3885, 0.0
        %v4053 = vmax.f32 %v3887, 0.0
        %v4054 = vmax.f32 %v3889, 0.0
        %v4055 = vmax.f32 %v3893, 0.0
        %v4056 = vmax.f32 %v3895, 0.0
        %v4057 = vmax.f32 %v3897, 0.0
        %v4058 = vmax.f32 %v3899, 0.0
        %v4059 = vmax.f32 %v3903, 0.0
        %v4060 = vmax.f32 %v3905, 0.0
        %v4061 = vmax.f32 %v3907, 0.0
        %v4062 = vmax.f32 %v3909, 0.0
        %v4063 = vmax.f32 %v3913, 0.0
        %v4064 = vmax.f32 %v3915, 0.0
        %v4065 = vmax.f32 %v3917, 0.0
        %v4066 = vmax.f32 %v3919, 0.0
        %v4067 = vmax.f32 %v3923, 0.0
        %v4068 = vmax.f32 %v3925, 0.0
        %v4069 = vmax.f32 %v3927, 0.0
        %v4070 = vmax.f32 %v3929, 0.0
        %v4071 = vmax.f32 %v3933, 0.0
        %v4072 = vmax.f32 %v3935, 0.0
        %v4073 = vmax.f32 %v3937, 0.0
        %v4074 = vmax.f32 %v3939, 0.0
        %v4075 = vmax.f32 %v3943, 0.0
        %v4076 = vmax.f32 %v3945, 0.0
        %v4077 = vmax.f32 %v3947, 0.0
        %v4078 = vmax.f32 %v3949, 0.0
        %v4079 = vpack.c.bf16 %v3953, %v3951
        %v4080 = vpack.c.bf16 %v3954, %v3952
        %v4081 = vpack.c.bf16 %v3957, %v3955
        %v4082 = vpack.c.bf16 %v3958, %v3956
        %v4083 = vpack.c.bf16 %v3961, %v3959
        %v4084 = vpack.c.bf16 %v3962, %v3960
        %v4085 = vpack.c.bf16 %v3965, %v3963
        %v4086 = vpack.c.bf16 %v3966, %v3964
        %v4087 = vpack.c.bf16 %v3969, %v3967
        %v4088 = vpack.c.bf16 %v3970, %v3968
        %v4089 = vpack.c.bf16 %v3973, %v3971
        %v4090 = vpack.c.bf16 %v3974, %v3972
        %v4091 = vpack.c.bf16 %v3977, %v3975
        %v4092 = vpack.c.bf16 %v3978, %v3976
        %v4093 = vpack.c.bf16 %v3981, %v3979
        %v4094 = vpack.c.bf16 %v3982, %v3980
        %v4095 = vpack.c.bf16 %v3985, %v3983
        %v4096 = vpack.c.bf16 %v3986, %v3984
        %v4097 = vpack.c.bf16 %v3989, %v3987
        %v4098 = vpack.c.bf16 %v3990, %v3988
        %v4099 = vpack.c.bf16 %v3993, %v3991
        %v4100 = vpack.c.bf16 %v3994, %v3992
        %v4101 = vpack.c.bf16 %v3997, %v3995
        %v4102 = vpack.c.bf16 %v3998, %v3996
        %v4103 = vpack.c.bf16 %v4001, %v3999
        %v4104 = vpack.c.bf16 %v4002, %v4000
        %v4105 = vpack.c.bf16 %v4005, %v4003
        %v4106 = vpack.c.bf16 %v4006, %v4004
        %v4107 = vpack.c.bf16 %v4009, %v4007
        %v4108 = vpack.c.bf16 %v4010, %v4008
        %v4109 = vpack.c.bf16 %v4013, %v4011
        %v4110 = vpack.c.bf16 %v4014, %v4012
        %v4111 = vpack.c.bf16 %v4017, %v4015
        %v4112 = vpack.c.bf16 %v4018, %v4016
        %v4113 = vpack.c.bf16 %v4021, %v4019
        %v4114 = vpack.c.bf16 %v4022, %v4020
        %v4115 = vpack.c.bf16 %v4025, %v4023
        %v4116 = vpack.c.bf16 %v4026, %v4024
        %v4117 = vpack.c.bf16 %v4029, %v4027
        %v4118 = vpack.c.bf16 %v4030, %v4028
        %v4119 = vpack.c.bf16 %v4033, %v4031
        %v4120 = vpack.c.bf16 %v4034, %v4032
        %v4121 = vpack.c.bf16 %v4037, %v4035
        %v4122 = vpack.c.bf16 %v4038, %v4036
        %v4123 = vpack.c.bf16 %v4041, %v4039
        %v4124 = vpack.c.bf16 %v4042, %v4040
        %v4125 = vpack.c.bf16 %v4045, %v4043
        %v4126 = vpack.c.bf16 %v4046, %v4044
        %v4127 = vpack.c.bf16 %v4049, %v4047
        %v4128 = vpack.c.bf16 %v4050, %v4048
        %v4129 = vpack.c.bf16 %v4053, %v4051
        %v4130 = vpack.c.bf16 %v4054, %v4052
        %v4131 = vpack.c.bf16 %v4057, %v4055
        %v4132 = vpack.c.bf16 %v4058, %v4056
        %v4133 = vpack.c.bf16 %v4061, %v4059
        %v4134 = vpack.c.bf16 %v4062, %v4060
        %v4135 = vpack.c.bf16 %v4065, %v4063
        %v4136 = vpack.c.bf16 %v4066, %v4064
        %v4137 = vpack.c.bf16 %v4069, %v4067
        %v4138 = vpack.c.bf16 %v4070, %v4068
        %v4139 = vpack.c.bf16 %v4073, %v4071
        %v4140 = vpack.c.bf16 %v4074, %v4072
        %v4141 = vpack.c.bf16 %v4077, %v4075
        %v4142 = vpack.c.bf16 %v4078, %v4076
        %v4207 = vunpack.c.l.b16 %v4079
        %v4208 = vunpack.c.l.b16 %v4080
        %v4209 = vunpack.c.h.b16 %v4079
        %v4210 = vunpack.c.h.b16 %v4080
        %v4211 = vunpack.c.l.b16 %v4081
        %v4212 = vunpack.c.l.b16 %v4082
        %v4213 = vunpack.c.h.b16 %v4081
        %v4214 = vunpack.c.h.b16 %v4082
        %v4215 = vunpack.c.l.b16 %v4083
        %v4216 = vunpack.c.l.b16 %v4084
        %v4217 = vunpack.c.h.b16 %v4083
        %v4218 = vunpack.c.h.b16 %v4084
        %v4219 = vunpack.c.l.b16 %v4085
        %v4220 = vunpack.c.l.b16 %v4086
        %v4221 = vunpack.c.h.b16 %v4085
        %v4222 = vunpack.c.h.b16 %v4086
        %v4223 = vunpack.c.l.b16 %v4087
        %v4224 = vunpack.c.l.b16 %v4088
        %v4225 = vunpack.c.h.b16 %v4087
        %v4226 = vunpack.c.h.b16 %v4088
        %v4227 = vunpack.c.l.b16 %v4089
        %v4228 = vunpack.c.l.b16 %v4090
        %v4229 = vunpack.c.h.b16 %v4089
        %v4230 = vunpack.c.h.b16 %v4090
        %v4231 = vunpack.c.l.b16 %v4091
        %v4232 = vunpack.c.l.b16 %v4092
        %v4233 = vunpack.c.h.b16 %v4091
        %v4234 = vunpack.c.h.b16 %v4092
        %v4235 = vunpack.c.l.b16 %v4093
        %v4236 = vunpack.c.l.b16 %v4094
        %v4237 = vunpack.c.h.b16 %v4093
        %v4238 = vunpack.c.h.b16 %v4094
        %v4239 = vunpack.c.l.b16 %v4095
        %v4240 = vunpack.c.l.b16 %v4096
        %v4241 = vunpack.c.h.b16 %v4095
        %v4242 = vunpack.c.h.b16 %v4096
        %v4243 = vunpack.c.l.b16 %v4097
        %v4244 = vunpack.c.l.b16 %v4098
        %v4245 = vunpack.c.h.b16 %v4097
        %v4246 = vunpack.c.h.b16 %v4098
        %v4247 = vunpack.c.l.b16 %v4099
        %v4248 = vunpack.c.l.b16 %v4100
        %v4249 = vunpack.c.h.b16 %v4099
        %v4250 = vunpack.c.h.b16 %v4100
        %v4251 = vunpack.c.l.b16 %v4101
        %v4252 = vunpack.c.l.b16 %v4102
        %v4253 = vunpack.c.h.b16 %v4101
        %v4254 = vunpack.c.h.b16 %v4102
        %v4255 = vunpack.c.l.b16 %v4103
        %v4256 = vunpack.c.l.b16 %v4104
        %v4257 = vunpack.c.h.b16 %v4103
        %v4258 = vunpack.c.h.b16 %v4104
        %v4259 = vunpack.c.l.b16 %v4105
        %v4260 = vunpack.c.l.b16 %v4106
        %v4261 = vunpack.c.h.b16 %v4105
        %v4262 = vunpack.c.h.b16 %v4106
        %v4263 = vunpack.c.l.b16 %v4107
        %v4264 = vunpack.c.l.b16 %v4108
        %v4265 = vunpack.c.h.b16 %v4107
        %v4266 = vunpack.c.h.b16 %v4108
        %v4267 = vunpack.c.l.b16 %v4109
        %v4268 = vunpack.c.l.b16 %v4110
        %v4269 = vunpack.c.h.b16 %v4109
        %v4270 = vunpack.c.h.b16 %v4110
        %v4271 = vunpack.c.l.b16 %v4111
        %v4272 = vunpack.c.l.b16 %v4112
        %v4273 = vunpack.c.h.b16 %v4111
        %v4274 = vunpack.c.h.b16 %v4112
        %v4275 = vunpack.c.l.b16 %v4113
        %v4276 = vunpack.c.l.b16 %v4114
        %v4277 = vunpack.c.h.b16 %v4113
        %v4278 = vunpack.c.h.b16 %v4114
        %v4279 = vunpack.c.l.b16 %v4115
        %v4280 = vunpack.c.l.b16 %v4116
        %v4281 = vunpack.c.h.b16 %v4115
        %v4282 = vunpack.c.h.b16 %v4116
        %v4283 = vunpack.c.l.b16 %v4117
        %v4284 = vunpack.c.l.b16 %v4118
        %v4285 = vunpack.c.h.b16 %v4117
        %v4286 = vunpack.c.h.b16 %v4118
        %v4287 = vunpack.c.l.b16 %v4119
        %v4288 = vunpack.c.l.b16 %v4120
        %v4289 = vunpack.c.h.b16 %v4119
        %v4290 = vunpack.c.h.b16 %v4120
        %v4291 = vunpack.c.l.b16 %v4121
        %v4292 = vunpack.c.l.b16 %v4122
        %v4293 = vunpack.c.h.b16 %v4121
        %v4294 = vunpack.c.h.b16 %v4122
        %v4295 = vunpack.c.l.b16 %v4123
        %v4296 = vunpack.c.l.b16 %v4124
        %v4297 = vunpack.c.h.b16 %v4123
        %v4298 = vunpack.c.h.b16 %v4124
        %v4299 = vunpack.c.l.b16 %v4125
        %v4300 = vunpack.c.l.b16 %v4126
        %v4301 = vunpack.c.h.b16 %v4125
        %v4302 = vunpack.c.h.b16 %v4126
        %v4303 = vunpack.c.l.b16 %v4127
        %v4304 = vunpack.c.l.b16 %v4128
        %v4305 = vunpack.c.h.b16 %v4127
        %v4306 = vunpack.c.h.b16 %v4128
        %v4307 = vunpack.c.l.b16 %v4129
        %v4308 = vunpack.c.l.b16 %v4130
        %v4309 = vunpack.c.h.b16 %v4129
        %v4310 = vunpack.c.h.b16 %v4130
        %v4311 = vunpack.c.l.b16 %v4131
        %v4312 = vunpack.c.l.b16 %v4132
        %v4313 = vunpack.c.h.b16 %v4131
        %v4314 = vunpack.c.h.b16 %v4132
        %v4315 = vunpack.c.l.b16 %v4133
        %v4316 = vunpack.c.l.b16 %v4134
        %v4317 = vunpack.c.h.b16 %v4133
        %v4318 = vunpack.c.h.b16 %v4134
        %v4319 = vunpack.c.l.b16 %v4135
        %v4320 = vunpack.c.l.b16 %v4136
        %v4321 = vunpack.c.h.b16 %v4135
        %v4322 = vunpack.c.h.b16 %v4136
        %v4323 = vunpack.c.l.b16 %v4137
        %v4324 = vunpack.c.l.b16 %v4138
        %v4325 = vunpack.c.h.b16 %v4137
        %v4326 = vunpack.c.h.b16 %v4138
        %v4327 = vunpack.c.l.b16 %v4139
        %v4328 = vunpack.c.l.b16 %v4140
        %v4329 = vunpack.c.h.b16 %v4139
        %v4330 = vunpack.c.h.b16 %v4140
        %v4331 = vunpack.c.l.b16 %v4141
        %v4332 = vunpack.c.l.b16 %v4142
        %v4333 = vunpack.c.h.b16 %v4141
        %v4334 = vunpack.c.h.b16 %v4142
        %v4335 = vpack.c.b16 %v4208, %v4207
        %v4336 = vpack.c.b16 %v4210, %v4209
        %v4337 = vpack.c.b16 %v4212, %v4211
        %v4338 = vpack.c.b16 %v4214, %v4213
        %v4339 = vpack.c.b16 %v4216, %v4215
        %v4340 = vpack.c.b16 %v4218, %v4217
        %v4341 = vpack.c.b16 %v4220, %v4219
        %v4342 = vpack.c.b16 %v4222, %v4221
        %v4343 = vpack.c.b16 %v4224, %v4223
        %v4344 = vpack.c.b16 %v4226, %v4225
        %v4345 = vpack.c.b16 %v4228, %v4227
        %v4346 = vpack.c.b16 %v4230, %v4229
        %v4347 = vpack.c.b16 %v4232, %v4231
        %v4348 = vpack.c.b16 %v4234, %v4233
        %v4349 = vpack.c.b16 %v4236, %v4235
        %v4350 = vpack.c.b16 %v4238, %v4237
        %v4351 = vpack.c.b16 %v4240, %v4239
        %v4352 = vpack.c.b16 %v4242, %v4241
        %v4353 = vpack.c.b16 %v4244, %v4243
        %v4354 = vpack.c.b16 %v4246, %v4245
        %v4355 = vpack.c.b16 %v4248, %v4247
        %v4356 = vpack.c.b16 %v4250, %v4249
        %v4357 = vpack.c.b16 %v4252, %v4251
        %v4358 = vpack.c.b16 %v4254, %v4253
        %v4359 = vpack.c.b16 %v4256, %v4255
        %v4360 = vpack.c.b16 %v4258, %v4257
        %v4361 = vpack.c.b16 %v4260, %v4259
        %v4362 = vpack.c.b16 %v4262, %v4261
        %v4363 = vpack.c.b16 %v4264, %v4263
        %v4364 = vpack.c.b16 %v4266, %v4265
        %v4365 = vpack.c.b16 %v4268, %v4267
        %v4366 = vpack.c.b16 %v4270, %v4269
        %v4367 = vpack.c.b16 %v4272, %v4271
        %v4368 = vpack.c.b16 %v4274, %v4273
        %v4369 = vpack.c.b16 %v4276, %v4275
        %v4370 = vpack.c.b16 %v4278, %v4277
        %v4371 = vpack.c.b16 %v4280, %v4279
        %v4372 = vpack.c.b16 %v4282, %v4281
        %v4373 = vpack.c.b16 %v4284, %v4283
        %v4374 = vpack.c.b16 %v4286, %v4285
        %v4375 = vpack.c.b16 %v4288, %v4287
        %v4376 = vpack.c.b16 %v4290, %v4289
        %v4377 = vpack.c.b16 %v4292, %v4291
        %v4378 = vpack.c.b16 %v4294, %v4293
        %v4379 = vpack.c.b16 %v4296, %v4295
        %v4380 = vpack.c.b16 %v4298, %v4297
        %v4381 = vpack.c.b16 %v4300, %v4299
        %v4382 = vpack.c.b16 %v4302, %v4301
        %v4383 = vpack.c.b16 %v4304, %v4303
        %v4384 = vpack.c.b16 %v4306, %v4305
        %v4385 = vpack.c.b16 %v4308, %v4307
        %v4386 = vpack.c.b16 %v4310, %v4309
        %v4387 = vpack.c.b16 %v4312, %v4311
        %v4388 = vpack.c.b16 %v4314, %v4313
        %v4389 = vpack.c.b16 %v4316, %v4315
        %v4390 = vpack.c.b16 %v4318, %v4317
        %v4391 = vpack.c.b16 %v4320, %v4319
        %v4392 = vpack.c.b16 %v4322, %v4321
        %v4393 = vpack.c.b16 %v4324, %v4323
        %v4394 = vpack.c.b16 %v4326, %v4325
        %v4395 = vpack.c.b16 %v4328, %v4327
        %v4396 = vpack.c.b16 %v4330, %v4329
        %v4397 = vpack.c.b16 %v4332, %v4331
        %v4398 = vpack.c.b16 %v4334, %v4333
        %4463 = vst [vmem:[%s294] sm:$0xff] %v4335
        %4464 = vst [vmem:[%s294 + $0x8] sm:$0xff] %v4336
        %4465 = vst [vmem:[%s294 + $0x10] sm:$0xff] %v4337
        %4466 = vst [vmem:[%s294 + $0x18] sm:$0xff] %v4338
        %4467 = vst [vmem:[%s294 + $0x20] sm:$0xff] %v4339
        %4468 = vst [vmem:[%s294 + $0x28] sm:$0xff] %v4340
        %4469 = vst [vmem:[%s294 + $0x30] sm:$0xff] %v4341
        %4470 = vst [vmem:[%s294 + $0x38] sm:$0xff] %v4342
        %4471 = vst [vmem:[%s294 + $0x40] sm:$0xff] %v4343
        %4472 = vst [vmem:[%s294 + $0x48] sm:$0xff] %v4344
        %4473 = vst [vmem:[%s294 + $0x50] sm:$0xff] %v4345
        %4474 = vst [vmem:[%s294 + $0x58] sm:$0xff] %v4346
        %4475 = vst [vmem:[%s294 + $0x60] sm:$0xff] %v4347
        %4476 = vst [vmem:[%s294 + $0x68] sm:$0xff] %v4348
        %4477 = vst [vmem:[%s294 + $0x70] sm:$0xff] %v4349
        %4478 = vst [vmem:[%s294 + $0x78] sm:$0xff] %v4350
        %4479 = vst [vmem:[%s294 + $0x80] sm:$0xff] %v4351
        %4480 = vst [vmem:[%s294 + $0x88] sm:$0xff] %v4352
        %4481 = vst [vmem:[%s294 + $0x90] sm:$0xff] %v4353
        %4482 = vst [vmem:[%s294 + $0x98] sm:$0xff] %v4354
        %4483 = vst [vmem:[%s294 + $0xa0] sm:$0xff] %v4355
        %4484 = vst [vmem:[%s294 + $0xa8] sm:$0xff] %v4356
        %4485 = vst [vmem:[%s294 + $0xb0] sm:$0xff] %v4357
        %4486 = vst [vmem:[%s294 + $0xb8] sm:$0xff] %v4358
        %4487 = vst [vmem:[%s294 + $0xc0] sm:$0xff] %v4359
        %4488 = vst [vmem:[%s294 + $0xc8] sm:$0xff] %v4360
        %4489 = vst [vmem:[%s294 + $0xd0] sm:$0xff] %v4361
        %4490 = vst [vmem:[%s294 + $0xd8] sm:$0xff] %v4362
        %4491 = vst [vmem:[%s294 + $0xe0] sm:$0xff] %v4363
        %4492 = vst [vmem:[%s294 + $0xe8] sm:$0xff] %v4364
        %4493 = vst [vmem:[%s294 + $0xf0] sm:$0xff] %v4365
        %4494 = vst [vmem:[%s294 + $0xf8] sm:$0xff] %v4366
        %4495 = vst [vmem:[%s294 + $0x100] sm:$0xff] %v4367
        %4496 = vst [vmem:[%s294 + $0x108] sm:$0xff] %v4368
        %4497 = vst [vmem:[%s294 + $0x110] sm:$0xff] %v4369
        %4498 = vst [vmem:[%s294 + $0x118] sm:$0xff] %v4370
        %4499 = vst [vmem:[%s294 + $0x120] sm:$0xff] %v4371
        %4500 = vst [vmem:[%s294 + $0x128] sm:$0xff] %v4372
        %4501 = vst [vmem:[%s294 + $0x130] sm:$0xff] %v4373
        %4502 = vst [vmem:[%s294 + $0x138] sm:$0xff] %v4374
        %4503 = vst [vmem:[%s294 + $0x140] sm:$0xff] %v4375
        %4504 = vst [vmem:[%s294 + $0x148] sm:$0xff] %v4376
        %4505 = vst [vmem:[%s294 + $0x150] sm:$0xff] %v4377
        %4506 = vst [vmem:[%s294 + $0x158] sm:$0xff] %v4378
        %4507 = vst [vmem:[%s294 + $0x160] sm:$0xff] %v4379
        %4508 = vst [vmem:[%s294 + $0x168] sm:$0xff] %v4380
        %4509 = vst [vmem:[%s294 + $0x170] sm:$0xff] %v4381
        %4510 = vst [vmem:[%s294 + $0x178] sm:$0xff] %v4382
        %4511 = vst [vmem:[%s294 + $0x180] sm:$0xff] %v4383
        %4512 = vst [vmem:[%s294 + $0x188] sm:$0xff] %v4384
        %4513 = vst [vmem:[%s294 + $0x190] sm:$0xff] %v4385
        %4514 = vst [vmem:[%s294 + $0x198] sm:$0xff] %v4386
        %4515 = vst [vmem:[%s294 + $0x1a0] sm:$0xff] %v4387
        %4516 = vst [vmem:[%s294 + $0x1a8] sm:$0xff] %v4388
        %4517 = vst [vmem:[%s294 + $0x1b0] sm:$0xff] %v4389
        %4518 = vst [vmem:[%s294 + $0x1b8] sm:$0xff] %v4390
        %4519 = vst [vmem:[%s294 + $0x1c0] sm:$0xff] %v4391
        %4520 = vst [vmem:[%s294 + $0x1c8] sm:$0xff] %v4392
        %4521 = vst [vmem:[%s294 + $0x1d0] sm:$0xff] %v4393
        %4522 = vst [vmem:[%s294 + $0x1d8] sm:$0xff] %v4394
        %4523 = vst [vmem:[%s294 + $0x1e0] sm:$0xff] %v4395
        %4524 = vst [vmem:[%s294 + $0x1e8] sm:$0xff] %v4396
        %4525 = vst [vmem:[%s294 + $0x1f0] sm:$0xff] %v4397
        %4526 = vst [vmem:[%s294 + $0x1f8] sm:$0xff] %v4398
        %v4527 = vld [vmem:[%s3] sm:$0x3]
        %v4529 = vlaneseq
        %v4530 = vshrl.u32 %v4529, 7
        %v4531 = vsub.s32 0, %v4530
        %v4532 = vrot.slane %v4527, %v4531
        %v4533 = vlaneseq
        %v4534 = vshrl.u32 %v4533, 7
        %v4535 = vsub.s32 1, %v4534
        %v4536 = vrot.slane %v4527, %v4535
        %v4539 = vmul.f32 %v3951, %v4532
        %v4540 = vmul.f32 %v3952, %v4536
        %v4541 = vmul.f32 %v3953, %v4532
        %v4542 = vmul.f32 %v3954, %v4536
        %v4543 = vmul.f32 %v3955, %v4532
        %v4544 = vmul.f32 %v3956, %v4536
        %v4545 = vmul.f32 %v3957, %v4532
        %v4546 = vmul.f32 %v3958, %v4536
        %v4547 = vmul.f32 %v3959, %v4532
        %v4548 = vmul.f32 %v3960, %v4536
        %v4549 = vmul.f32 %v3961, %v4532
        %v4550 = vmul.f32 %v3962, %v4536
        %v4551 = vmul.f32 %v3963, %v4532
        %v4552 = vmul.f32 %v3964, %v4536
        %v4553 = vmul.f32 %v3965, %v4532
        %v4554 = vmul.f32 %v3966, %v4536
        %v4555 = vmul.f32 %v3967, %v4532
        %v4556 = vmul.f32 %v3968, %v4536
        %v4557 = vmul.f32 %v3969, %v4532
        %v4558 = vmul.f32 %v3970, %v4536
        %v4559 = vmul.f32 %v3971, %v4532
        %v4560 = vmul.f32 %v3972, %v4536
        %v4561 = vmul.f32 %v3973, %v4532
        %v4562 = vmul.f32 %v3974, %v4536
        %v4563 = vmul.f32 %v3975, %v4532
        %v4564 = vmul.f32 %v3976, %v4536
        %v4565 = vmul.f32 %v3977, %v4532
        %v4566 = vmul.f32 %v3978, %v4536
        %v4567 = vmul.f32 %v3979, %v4532
        %v4568 = vmul.f32 %v3980, %v4536
        %v4569 = vmul.f32 %v3981, %v4532
        %v4570 = vmul.f32 %v3982, %v4536
        %v4571 = vmul.f32 %v3983, %v4532
        %v4572 = vmul.f32 %v3984, %v4536
        %v4573 = vmul.f32 %v3985, %v4532
        %v4574 = vmul.f32 %v3986, %v4536
        %v4575 = vmul.f32 %v3987, %v4532
        %v4576 = vmul.f32 %v3988, %v4536
        %v4577 = vmul.f32 %v3989, %v4532
        %v4578 = vmul.f32 %v3990, %v4536
        %v4579 = vmul.f32 %v3991, %v4532
        %v4580 = vmul.f32 %v3992, %v4536
        %v4581 = vmul.f32 %v3993, %v4532
        %v4582 = vmul.f32 %v3994, %v4536
        %v4583 = vmul.f32 %v3995, %v4532
        %v4584 = vmul.f32 %v3996, %v4536
        %v4585 = vmul.f32 %v3997, %v4532
        %v4586 = vmul.f32 %v3998, %v4536
        %v4587 = vmul.f32 %v3999, %v4532
        %v4588 = vmul.f32 %v4000, %v4536
        %v4589 = vmul.f32 %v4001, %v4532
        %v4590 = vmul.f32 %v4002, %v4536
        %v4591 = vmul.f32 %v4003, %v4532
        %v4592 = vmul.f32 %v4004, %v4536
        %v4593 = vmul.f32 %v4005, %v4532
        %v4594 = vmul.f32 %v4006, %v4536
        %v4595 = vmul.f32 %v4007, %v4532
        %v4596 = vmul.f32 %v4008, %v4536
        %v4597 = vmul.f32 %v4009, %v4532
        %v4598 = vmul.f32 %v4010, %v4536
        %v4599 = vmul.f32 %v4011, %v4532
        %v4600 = vmul.f32 %v4012, %v4536
        %v4601 = vmul.f32 %v4013, %v4532
        %v4602 = vmul.f32 %v4014, %v4536
        %v4603 = vmul.f32 %v4015, %v4532
        %v4604 = vmul.f32 %v4016, %v4536
        %v4605 = vmul.f32 %v4017, %v4532
        %v4606 = vmul.f32 %v4018, %v4536
        %v4607 = vmul.f32 %v4019, %v4532
        %v4608 = vmul.f32 %v4020, %v4536
        %v4609 = vmul.f32 %v4021, %v4532
        %v4610 = vmul.f32 %v4022, %v4536
        %v4611 = vmul.f32 %v4023, %v4532
        %v4612 = vmul.f32 %v4024, %v4536
        %v4613 = vmul.f32 %v4025, %v4532
        %v4614 = vmul.f32 %v4026, %v4536
        %v4615 = vmul.f32 %v4027, %v4532
        %v4616 = vmul.f32 %v4028, %v4536
        %v4617 = vmul.f32 %v4029, %v4532
        %v4618 = vmul.f32 %v4030, %v4536
        %v4619 = vmul.f32 %v4031, %v4532
        %v4620 = vmul.f32 %v4032, %v4536
        %v4621 = vmul.f32 %v4033, %v4532
        %v4622 = vmul.f32 %v4034, %v4536
        %v4623 = vmul.f32 %v4035, %v4532
        %v4624 = vmul.f32 %v4036, %v4536
        %v4625 = vmul.f32 %v4037, %v4532
        %v4626 = vmul.f32 %v4038, %v4536
        %v4627 = vmul.f32 %v4039, %v4532
        %v4628 = vmul.f32 %v4040, %v4536
        %v4629 = vmul.f32 %v4041, %v4532
        %v4630 = vmul.f32 %v4042, %v4536
        %v4631 = vmul.f32 %v4043, %v4532
        %v4632 = vmul.f32 %v4044, %v4536
        %v4633 = vmul.f32 %v4045, %v4532
        %v4634 = vmul.f32 %v4046, %v4536
        %v4635 = vmul.f32 %v4047, %v4532
        %v4636 = vmul.f32 %v4048, %v4536
        %v4637 = vmul.f32 %v4049, %v4532
        %v4638 = vmul.f32 %v4050, %v4536
        %v4639 = vmul.f32 %v4051, %v4532
        %v4640 = vmul.f32 %v4052, %v4536
        %v4641 = vmul.f32 %v4053, %v4532
        %v4642 = vmul.f32 %v4054, %v4536
        %v4643 = vmul.f32 %v4055, %v4532
        %v4644 = vmul.f32 %v4056, %v4536
        %v4645 = vmul.f32 %v4057, %v4532
        %v4646 = vmul.f32 %v4058, %v4536
        %v4647 = vmul.f32 %v4059, %v4532
        %v4648 = vmul.f32 %v4060, %v4536
        %v4649 = vmul.f32 %v4061, %v4532
        %v4650 = vmul.f32 %v4062, %v4536
        %v4651 = vmul.f32 %v4063, %v4532
        %v4652 = vmul.f32 %v4064, %v4536
        %v4653 = vmul.f32 %v4065, %v4532
        %v4654 = vmul.f32 %v4066, %v4536
        %v4655 = vmul.f32 %v4067, %v4532
        %v4656 = vmul.f32 %v4068, %v4536
        %v4657 = vmul.f32 %v4069, %v4532
        %v4658 = vmul.f32 %v4070, %v4536
        %v4659 = vmul.f32 %v4071, %v4532
        %v4660 = vmul.f32 %v4072, %v4536
        %v4661 = vmul.f32 %v4073, %v4532
        %v4662 = vmul.f32 %v4074, %v4536
        %v4663 = vmul.f32 %v4075, %v4532
        %v4664 = vmul.f32 %v4076, %v4536
        %v4665 = vmul.f32 %v4077, %v4532
        %v4666 = vmul.f32 %v4078, %v4536
        %v4667 = vadd.f32 %v4539, %v4540
        %4668 = vadd.xlane.f32.xlu0 %v4667
        %v4669 = vpop.xlane.xlu0 %4668
        %v4670 = vadd.f32 %v4541, %v4542
        %4671 = vadd.xlane.f32.xlu0 %v4670
        %v4672 = vpop.xlane.xlu0 %4671
        %v4673 = vadd.f32 %v4543, %v4544
        %4674 = vadd.xlane.f32.xlu0 %v4673
        %v4675 = vpop.xlane.xlu0 %4674
        %v4676 = vadd.f32 %v4545, %v4546
        %4677 = vadd.xlane.f32.xlu0 %v4676
        %v4678 = vpop.xlane.xlu0 %4677
        %v4679 = vadd.f32 %v4547, %v4548
        %4680 = vadd.xlane.f32.xlu0 %v4679
        %v4681 = vpop.xlane.xlu0 %4680
        %v4682 = vadd.f32 %v4549, %v4550
        %4683 = vadd.xlane.f32.xlu0 %v4682
        %v4684 = vpop.xlane.xlu0 %4683
        %v4685 = vadd.f32 %v4551, %v4552
        %4686 = vadd.xlane.f32.xlu0 %v4685
        %v4687 = vpop.xlane.xlu0 %4686
        %v4688 = vadd.f32 %v4553, %v4554
        %4689 = vadd.xlane.f32.xlu0 %v4688
        %v4690 = vpop.xlane.xlu0 %4689
        %v4691 = vadd.f32 %v4555, %v4556
        %4692 = vadd.xlane.f32.xlu0 %v4691
        %v4693 = vpop.xlane.xlu0 %4692
        %v4694 = vadd.f32 %v4557, %v4558
        %4695 = vadd.xlane.f32.xlu0 %v4694
        %v4696 = vpop.xlane.xlu0 %4695
        %v4697 = vadd.f32 %v4559, %v4560
        %4698 = vadd.xlane.f32.xlu0 %v4697
        %v4699 = vpop.xlane.xlu0 %4698
        %v4700 = vadd.f32 %v4561, %v4562
        %4701 = vadd.xlane.f32.xlu0 %v4700
        %v4702 = vpop.xlane.xlu0 %4701
        %v4703 = vadd.f32 %v4563, %v4564
        %4704 = vadd.xlane.f32.xlu0 %v4703
        %v4705 = vpop.xlane.xlu0 %4704
        %v4706 = vadd.f32 %v4565, %v4566
        %4707 = vadd.xlane.f32.xlu0 %v4706
        %v4708 = vpop.xlane.xlu0 %4707
        %v4709 = vadd.f32 %v4567, %v4568
        %4710 = vadd.xlane.f32.xlu0 %v4709
        %v4711 = vpop.xlane.xlu0 %4710
        %v4712 = vadd.f32 %v4569, %v4570
        %4713 = vadd.xlane.f32.xlu0 %v4712
        %v4714 = vpop.xlane.xlu0 %4713
        %v4715 = vadd.f32 %v4571, %v4572
        %4716 = vadd.xlane.f32.xlu0 %v4715
        %v4717 = vpop.xlane.xlu0 %4716
        %v4718 = vadd.f32 %v4573, %v4574
        %4719 = vadd.xlane.f32.xlu0 %v4718
        %v4720 = vpop.xlane.xlu0 %4719
        %v4721 = vadd.f32 %v4575, %v4576
        %4722 = vadd.xlane.f32.xlu0 %v4721
        %v4723 = vpop.xlane.xlu0 %4722
        %v4724 = vadd.f32 %v4577, %v4578
        %4725 = vadd.xlane.f32.xlu0 %v4724
        %v4726 = vpop.xlane.xlu0 %4725
        %v4727 = vadd.f32 %v4579, %v4580
        %4728 = vadd.xlane.f32.xlu0 %v4727
        %v4729 = vpop.xlane.xlu0 %4728
        %v4730 = vadd.f32 %v4581, %v4582
        %4731 = vadd.xlane.f32.xlu0 %v4730
        %v4732 = vpop.xlane.xlu0 %4731
        %v4733 = vadd.f32 %v4583, %v4584
        %4734 = vadd.xlane.f32.xlu0 %v4733
        %v4735 = vpop.xlane.xlu0 %4734
        %v4736 = vadd.f32 %v4585, %v4586
        %4737 = vadd.xlane.f32.xlu0 %v4736
        %v4738 = vpop.xlane.xlu0 %4737
        %v4739 = vadd.f32 %v4587, %v4588
        %4740 = vadd.xlane.f32.xlu0 %v4739
        %v4741 = vpop.xlane.xlu0 %4740
        %v4742 = vadd.f32 %v4589, %v4590
        %4743 = vadd.xlane.f32.xlu0 %v4742
        %v4744 = vpop.xlane.xlu0 %4743
        %v4745 = vadd.f32 %v4591, %v4592
        %4746 = vadd.xlane.f32.xlu0 %v4745
        %v4747 = vpop.xlane.xlu0 %4746
        %v4748 = vadd.f32 %v4593, %v4594
        %4749 = vadd.xlane.f32.xlu0 %v4748
        %v4750 = vpop.xlane.xlu0 %4749
        %v4751 = vadd.f32 %v4595, %v4596
        %4752 = vadd.xlane.f32.xlu0 %v4751
        %v4753 = vpop.xlane.xlu0 %4752
        %v4754 = vadd.f32 %v4597, %v4598
        %4755 = vadd.xlane.f32.xlu0 %v4754
        %v4756 = vpop.xlane.xlu0 %4755
        %v4757 = vadd.f32 %v4599, %v4600
        %4758 = vadd.xlane.f32.xlu0 %v4757
        %v4759 = vpop.xlane.xlu0 %4758
        %v4760 = vadd.f32 %v4601, %v4602
        %4761 = vadd.xlane.f32.xlu0 %v4760
        %v4762 = vpop.xlane.xlu0 %4761
        %v4763 = vadd.f32 %v4603, %v4604
        %4764 = vadd.xlane.f32.xlu0 %v4763
        %v4765 = vpop.xlane.xlu0 %4764
        %v4766 = vadd.f32 %v4605, %v4606
        %4767 = vadd.xlane.f32.xlu0 %v4766
        %v4768 = vpop.xlane.xlu0 %4767
        %v4769 = vadd.f32 %v4607, %v4608
        %4770 = vadd.xlane.f32.xlu0 %v4769
        %v4771 = vpop.xlane.xlu0 %4770
        %v4772 = vadd.f32 %v4609, %v4610
        %4773 = vadd.xlane.f32.xlu0 %v4772
        %v4774 = vpop.xlane.xlu0 %4773
        %v4775 = vadd.f32 %v4611, %v4612
        %4776 = vadd.xlane.f32.xlu0 %v4775
        %v4777 = vpop.xlane.xlu0 %4776
        %v4778 = vadd.f32 %v4613, %v4614
        %4779 = vadd.xlane.f32.xlu0 %v4778
        %v4780 = vpop.xlane.xlu0 %4779
        %v4781 = vadd.f32 %v4615, %v4616
        %4782 = vadd.xlane.f32.xlu0 %v4781
        %v4783 = vpop.xlane.xlu0 %4782
        %v4784 = vadd.f32 %v4617, %v4618
        %4785 = vadd.xlane.f32.xlu0 %v4784
        %v4786 = vpop.xlane.xlu0 %4785
        %v4787 = vadd.f32 %v4619, %v4620
        %4788 = vadd.xlane.f32.xlu0 %v4787
        %v4789 = vpop.xlane.xlu0 %4788
        %v4790 = vadd.f32 %v4621, %v4622
        %4791 = vadd.xlane.f32.xlu0 %v4790
        %v4792 = vpop.xlane.xlu0 %4791
        %v4793 = vadd.f32 %v4623, %v4624
        %4794 = vadd.xlane.f32.xlu0 %v4793
        %v4795 = vpop.xlane.xlu0 %4794
        %v4796 = vadd.f32 %v4625, %v4626
        %4797 = vadd.xlane.f32.xlu0 %v4796
        %v4798 = vpop.xlane.xlu0 %4797
        %v4799 = vadd.f32 %v4627, %v4628
        %4800 = vadd.xlane.f32.xlu0 %v4799
        %v4801 = vpop.xlane.xlu0 %4800
        %v4802 = vadd.f32 %v4629, %v4630
        %4803 = vadd.xlane.f32.xlu0 %v4802
        %v4804 = vpop.xlane.xlu0 %4803
        %v4805 = vadd.f32 %v4631, %v4632
        %4806 = vadd.xlane.f32.xlu0 %v4805
        %v4807 = vpop.xlane.xlu0 %4806
        %v4808 = vadd.f32 %v4633, %v4634
        %4809 = vadd.xlane.f32.xlu0 %v4808
        %v4810 = vpop.xlane.xlu0 %4809
        %v4811 = vadd.f32 %v4635, %v4636
        %4812 = vadd.xlane.f32.xlu0 %v4811
        %v4813 = vpop.xlane.xlu0 %4812
        %v4814 = vadd.f32 %v4637, %v4638
        %4815 = vadd.xlane.f32.xlu0 %v4814
        %v4816 = vpop.xlane.xlu0 %4815
        %v4817 = vadd.f32 %v4639, %v4640
        %4818 = vadd.xlane.f32.xlu0 %v4817
        %v4819 = vpop.xlane.xlu0 %4818
        %v4820 = vadd.f32 %v4641, %v4642
        %4821 = vadd.xlane.f32.xlu0 %v4820
        %v4822 = vpop.xlane.xlu0 %4821
        %v4823 = vadd.f32 %v4643, %v4644
        %4824 = vadd.xlane.f32.xlu0 %v4823
        %v4825 = vpop.xlane.xlu0 %4824
        %v4826 = vadd.f32 %v4645, %v4646
        %4827 = vadd.xlane.f32.xlu0 %v4826
        %v4828 = vpop.xlane.xlu0 %4827
        %v4829 = vadd.f32 %v4647, %v4648
        %4830 = vadd.xlane.f32.xlu0 %v4829
        %v4831 = vpop.xlane.xlu0 %4830
        %v4832 = vadd.f32 %v4649, %v4650
        %4833 = vadd.xlane.f32.xlu0 %v4832
        %v4834 = vpop.xlane.xlu0 %4833
        %v4835 = vadd.f32 %v4651, %v4652
        %4836 = vadd.xlane.f32.xlu0 %v4835
        %v4837 = vpop.xlane.xlu0 %4836
        %v4838 = vadd.f32 %v4653, %v4654
        %4839 = vadd.xlane.f32.xlu0 %v4838
        %v4840 = vpop.xlane.xlu0 %4839
        %v4841 = vadd.f32 %v4655, %v4656
        %4842 = vadd.xlane.f32.xlu0 %v4841
        %v4843 = vpop.xlane.xlu0 %4842
        %v4844 = vadd.f32 %v4657, %v4658
        %4845 = vadd.xlane.f32.xlu0 %v4844
        %v4846 = vpop.xlane.xlu0 %4845
        %v4847 = vadd.f32 %v4659, %v4660
        %4848 = vadd.xlane.f32.xlu0 %v4847
        %v4849 = vpop.xlane.xlu0 %4848
        %v4850 = vadd.f32 %v4661, %v4662
        %4851 = vadd.xlane.f32.xlu0 %v4850
        %v4852 = vpop.xlane.xlu0 %4851
        %v4853 = vadd.f32 %v4663, %v4664
        %4854 = vadd.xlane.f32.xlu0 %v4853
        %v4855 = vpop.xlane.xlu0 %4854
        %v4856 = vadd.f32 %v4665, %v4666
        %4857 = vadd.xlane.f32.xlu0 %v4856
        %v4858 = vpop.xlane.xlu0 %4857
        %s4859 = sld [smem:[#allocation2]]
        %v4860 = vstv %s4859
        %v4861 = vadd.f32 %v4669, %v4860
        %v4862 = vadd.f32 %v4672, %v4860
        %v4863 = vadd.f32 %v4675, %v4860
        %v4864 = vadd.f32 %v4678, %v4860
        %v4865 = vadd.f32 %v4681, %v4860
        %v4866 = vadd.f32 %v4684, %v4860
        %v4867 = vadd.f32 %v4687, %v4860
        %v4868 = vadd.f32 %v4690, %v4860
        %v4869 = vadd.f32 %v4693, %v4860
        %v4870 = vadd.f32 %v4696, %v4860
        %v4871 = vadd.f32 %v4699, %v4860
        %v4872 = vadd.f32 %v4702, %v4860
        %v4873 = vadd.f32 %v4705, %v4860
        %v4874 = vadd.f32 %v4708, %v4860
        %v4875 = vadd.f32 %v4711, %v4860
        %v4876 = vadd.f32 %v4714, %v4860
        %v4877 = vadd.f32 %v4717, %v4860
        %v4878 = vadd.f32 %v4720, %v4860
        %v4879 = vadd.f32 %v4723, %v4860
        %v4880 = vadd.f32 %v4726, %v4860
        %v4881 = vadd.f32 %v4729, %v4860
        %v4882 = vadd.f32 %v4732, %v4860
        %v4883 = vadd.f32 %v4735, %v4860
        %v4884 = vadd.f32 %v4738, %v4860
        %v4885 = vadd.f32 %v4741, %v4860
        %v4886 = vadd.f32 %v4744, %v4860
        %v4887 = vadd.f32 %v4747, %v4860
        %v4888 = vadd.f32 %v4750, %v4860
        %v4889 = vadd.f32 %v4753, %v4860
        %v4890 = vadd.f32 %v4756, %v4860
        %v4891 = vadd.f32 %v4759, %v4860
        %v4892 = vadd.f32 %v4762, %v4860
        %v4893 = vadd.f32 %v4765, %v4860
        %v4894 = vadd.f32 %v4768, %v4860
        %v4895 = vadd.f32 %v4771, %v4860
        %v4896 = vadd.f32 %v4774, %v4860
        %v4897 = vadd.f32 %v4777, %v4860
        %v4898 = vadd.f32 %v4780, %v4860
        %v4899 = vadd.f32 %v4783, %v4860
        %v4900 = vadd.f32 %v4786, %v4860
        %v4901 = vadd.f32 %v4789, %v4860
        %v4902 = vadd.f32 %v4792, %v4860
        %v4903 = vadd.f32 %v4795, %v4860
        %v4904 = vadd.f32 %v4798, %v4860
        %v4905 = vadd.f32 %v4801, %v4860
        %v4906 = vadd.f32 %v4804, %v4860
        %v4907 = vadd.f32 %v4807, %v4860
        %v4908 = vadd.f32 %v4810, %v4860
        %v4909 = vadd.f32 %v4813, %v4860
        %v4910 = vadd.f32 %v4816, %v4860
        %v4911 = vadd.f32 %v4819, %v4860
        %v4912 = vadd.f32 %v4822, %v4860
        %v4913 = vadd.f32 %v4825, %v4860
        %v4914 = vadd.f32 %v4828, %v4860
        %v4915 = vadd.f32 %v4831, %v4860
        %v4916 = vadd.f32 %v4834, %v4860
        %v4917 = vadd.f32 %v4837, %v4860
        %v4918 = vadd.f32 %v4840, %v4860
        %v4919 = vadd.f32 %v4843, %v4860
        %v4920 = vadd.f32 %v4846, %v4860
        %v4921 = vadd.f32 %v4849, %v4860
        %v4922 = vadd.f32 %v4852, %v4860
        %v4923 = vadd.f32 %v4855, %v4860
        %v4924 = vadd.f32 %v4858, %v4860
        %vm4925 = vcmask 7168
        %4926 = vst.msk [vmem:[%s300] sm:$0xff] %vm4925, %v4861
        %4927 = vst.msk [vmem:[%s300 + $0x8] sm:$0xff] %vm4925, %v4862
        %4928 = vst.msk [vmem:[%s300 + $0x10] sm:$0xff] %vm4925, %v4863
        %4929 = vst.msk [vmem:[%s300 + $0x18] sm:$0xff] %vm4925, %v4864
        %4930 = vst.msk [vmem:[%s300 + $0x20] sm:$0xff] %vm4925, %v4865
        %4931 = vst.msk [vmem:[%s300 + $0x28] sm:$0xff] %vm4925, %v4866
        %4932 = vst.msk [vmem:[%s300 + $0x30] sm:$0xff] %vm4925, %v4867
        %4933 = vst.msk [vmem:[%s300 + $0x38] sm:$0xff] %vm4925, %v4868
        %4934 = vst.msk [vmem:[%s300 + $0x40] sm:$0xff] %vm4925, %v4869
        %4935 = vst.msk [vmem:[%s300 + $0x48] sm:$0xff] %vm4925, %v4870
        %4936 = vst.msk [vmem:[%s300 + $0x50] sm:$0xff] %vm4925, %v4871
        %4937 = vst.msk [vmem:[%s300 + $0x58] sm:$0xff] %vm4925, %v4872
        %4938 = vst.msk [vmem:[%s300 + $0x60] sm:$0xff] %vm4925, %v4873
        %4939 = vst.msk [vmem:[%s300 + $0x68] sm:$0xff] %vm4925, %v4874
        %4940 = vst.msk [vmem:[%s300 + $0x70] sm:$0xff] %vm4925, %v4875
        %4941 = vst.msk [vmem:[%s300 + $0x78] sm:$0xff] %vm4925, %v4876
        %4942 = vst.msk [vmem:[%s300 + $0x80] sm:$0xff] %vm4925, %v4877
        %4943 = vst.msk [vmem:[%s300 + $0x88] sm:$0xff] %vm4925, %v4878
        %4944 = vst.msk [vmem:[%s300 + $0x90] sm:$0xff] %vm4925, %v4879
        %4945 = vst.msk [vmem:[%s300 + $0x98] sm:$0xff] %vm4925, %v4880
        %4946 = vst.msk [vmem:[%s300 + $0xa0] sm:$0xff] %vm4925, %v4881
        %4947 = vst.msk [vmem:[%s300 + $0xa8] sm:$0xff] %vm4925, %v4882
        %4948 = vst.msk [vmem:[%s300 + $0xb0] sm:$0xff] %vm4925, %v4883
        %4949 = vst.msk [vmem:[%s300 + $0xb8] sm:$0xff] %vm4925, %v4884
        %4950 = vst.msk [vmem:[%s300 + $0xc0] sm:$0xff] %vm4925, %v4885
        %4951 = vst.msk [vmem:[%s300 + $0xc8] sm:$0xff] %vm4925, %v4886
        %4952 = vst.msk [vmem:[%s300 + $0xd0] sm:$0xff] %vm4925, %v4887
        %4953 = vst.msk [vmem:[%s300 + $0xd8] sm:$0xff] %vm4925, %v4888
        %4954 = vst.msk [vmem:[%s300 + $0xe0] sm:$0xff] %vm4925, %v4889
        %4955 = vst.msk [vmem:[%s300 + $0xe8] sm:$0xff] %vm4925, %v4890
        %4956 = vst.msk [vmem:[%s300 + $0xf0] sm:$0xff] %vm4925, %v4891
        %4957 = vst.msk [vmem:[%s300 + $0xf8] sm:$0xff] %vm4925, %v4892
        %4958 = vst.msk [vmem:[%s300 + $0x100] sm:$0xff] %vm4925, %v4893
        %4959 = vst.msk [vmem:[%s300 + $0x108] sm:$0xff] %vm4925, %v4894
        %4960 = vst.msk [vmem:[%s300 + $0x110] sm:$0xff] %vm4925, %v4895
        %4961 = vst.msk [vmem:[%s300 + $0x118] sm:$0xff] %vm4925, %v4896
        %4962 = vst.msk [vmem:[%s300 + $0x120] sm:$0xff] %vm4925, %v4897
        %4963 = vst.msk [vmem:[%s300 + $0x128] sm:$0xff] %vm4925, %v4898
        %4964 = vst.msk [vmem:[%s300 + $0x130] sm:$0xff] %vm4925, %v4899
        %4965 = vst.msk [vmem:[%s300 + $0x138] sm:$0xff] %vm4925, %v4900
        %4966 = vst.msk [vmem:[%s300 + $0x140] sm:$0xff] %vm4925, %v4901
        %4967 = vst.msk [vmem:[%s300 + $0x148] sm:$0xff] %vm4925, %v4902
        %4968 = vst.msk [vmem:[%s300 + $0x150] sm:$0xff] %vm4925, %v4903
        %4969 = vst.msk [vmem:[%s300 + $0x158] sm:$0xff] %vm4925, %v4904
        %4970 = vst.msk [vmem:[%s300 + $0x160] sm:$0xff] %vm4925, %v4905
        %4971 = vst.msk [vmem:[%s300 + $0x168] sm:$0xff] %vm4925, %v4906
        %4972 = vst.msk [vmem:[%s300 + $0x170] sm:$0xff] %vm4925, %v4907
        %4973 = vst.msk [vmem:[%s300 + $0x178] sm:$0xff] %vm4925, %v4908
        %4974 = vst.msk [vmem:[%s300 + $0x180] sm:$0xff] %vm4925, %v4909
        %4975 = vst.msk [vmem:[%s300 + $0x188] sm:$0xff] %vm4925, %v4910
        %4976 = vst.msk [vmem:[%s300 + $0x190] sm:$0xff] %vm4925, %v4911
        %4977 = vst.msk [vmem:[%s300 + $0x198] sm:$0xff] %vm4925, %v4912
        %4978 = vst.msk [vmem:[%s300 + $0x1a0] sm:$0xff] %vm4925, %v4913
        %4979 = vst.msk [vmem:[%s300 + $0x1a8] sm:$0xff] %vm4925, %v4914
        %4980 = vst.msk [vmem:[%s300 + $0x1b0] sm:$0xff] %vm4925, %v4915
        %4981 = vst.msk [vmem:[%s300 + $0x1b8] sm:$0xff] %vm4925, %v4916
        %4982 = vst.msk [vmem:[%s300 + $0x1c0] sm:$0xff] %vm4925, %v4917
        %4983 = vst.msk [vmem:[%s300 + $0x1c8] sm:$0xff] %vm4925, %v4918
        %4984 = vst.msk [vmem:[%s300 + $0x1d0] sm:$0xff] %vm4925, %v4919
        %4985 = vst.msk [vmem:[%s300 + $0x1d8] sm:$0xff] %vm4925, %v4920
        %4986 = vst.msk [vmem:[%s300 + $0x1e0] sm:$0xff] %vm4925, %v4921
        %4987 = vst.msk [vmem:[%s300 + $0x1e8] sm:$0xff] %vm4925, %v4922
        %4988 = vst.msk [vmem:[%s300 + $0x1f0] sm:$0xff] %vm4925, %v4923
        %4989 = vst.msk [vmem:[%s300 + $0x1f8] sm:$0xff] %vm4925, %v4924
        %s4990 = sand.u32 %s144, 1
        %s4991 = scalar_lea.sflag [#allocation5], %s4990
        %s4992 = sand.u32 %s144, 1
        %s4993 = smul.addr %s4992, 512
        %s4994 = scalar_lea.vmem [#allocation8], %s4993
        %s4995 = sand.u32 %s170, 1
        %s4996 = sand.u32 %s170, 1
        %s4997 = smul.addr %s4996, 512
        %s4998 = scalar_lea.vmem [#allocation9], %s4997
        // Predicated region
        $region49: #{king_relative_nnue_forward.1} parent=39 // pred_check
          %p4999 = pneg %p154
        $region50: #{king_relative_nnue_forward.1} parent=39 // pred_check_branch
          %5001 = sbr.rel (%p4999) target = $region52
        $region51: #{king_relative_nnue_forward.1} parent=39 // pred_region
          %s5002 = smul.u32 64, %s26
          %s5003 = ssub.s32 130, %s5002
          %p5004 = scmp.lt.s32.totalorder %s5003, 64
          %s5005 = scalar_select %p5004, %s5003, 64
          %s5006 = smul.u32 64, %s5005
          %s5007 = smul.u32 %s5006, 2
          %s5009 = ssub.s32 8192, %s5007
          %5010 = vsyncadd %s4991, %s5009
          %p5011 = scmp.ne.s32.totalorder 0, %s5007
          %s5012 = smul.addr %s5002, 2
          %s5013 = smul.addr %s5012, 64
          %s5014 = scalar_lea.hbm %s5, %s5013
          %s5015 = smul.u32 8, %s5005
          %s5016 = sshll.u32 %s4994, 4
          %s5017 = int_to_ptr.vmem [resolvable:$true] %s5016
          %s5018 = sshll.u32 %s5015, 4
          %5022 = dma.vmem_to_hbm [thread:$0]  (%p5011), %s5017, %s5018, %s5014, %s4991, 128, 128, 8
        $region52: #{king_relative_nnue_forward.1} parent=39 // pred_fallthru
          _
        // Predicated region
        $region53: #{king_relative_nnue_forward.1} parent=39 // pred_check
          %p5023 = pneg %p180
        $region54: #{king_relative_nnue_forward.1} parent=39 // pred_check_branch
          %5025 = sbr.rel (%p5023) target = $region56
        $region55: #{king_relative_nnue_forward.1} parent=39 // pred_region
          %s5026 = smul.u32 64, %s26
          %s5027 = ssub.s32 130, %s5026
          %p5028 = scmp.lt.s32.totalorder %s5027, 64
          %s5029 = scalar_select %p5028, %s5027, 64
          %s5030 = smul.u32 128, %s5029
          %p5031 = scmp.ne.s32.totalorder 0, %s5030
          %s5032 = smul.addr %s5026, 8
          %s5033 = scalar_lea.vmem %s6, %s5032
          // Predicated region
          $region57: #{king_relative_nnue_forward.1} parent=55 // pred_check
            %p5034 = pneg %p5031
          $region58: #{king_relative_nnue_forward.1} parent=55 // pred_check_branch
            %5036 = sbr.rel (%p5034) target = $region60
          $region59: #{king_relative_nnue_forward.1} parent=55 // pred_region
            // Predicated region
            $region61: #{king_relative_nnue_forward.1} parent=59 // pred_check
              _
            $region62: #{king_relative_nnue_forward.1} parent=59 // pred_check_branch
              %5038 = sbr.rel (0) target = $region64
            $region63: #{king_relative_nnue_forward.1} parent=59 // pred_region
              // Predicated region
              $region83: #{king_relative_nnue_forward.1} parent=63 // pred_check
                _
              $region84: #{king_relative_nnue_forward.1} parent=63 // pred_check_branch
                %5214 = sbr.rel (0) target = $region86
              $region85: #{king_relative_nnue_forward.1} parent=63 // pred_region
                %s5215 = sshrl.u32 %s5029, 6
                // While loop
                $region87: #{king_relative_nnue_forward.1} parent=85 // loop_pre_header
                  _
                $region88: #{king_relative_nnue_forward.1} parent=85 // loop_header
                  %s5217 = sphi 0, %s5219
                  %p5218 = scmp.ge.s32.totalorder %s5217, %s5215
                  %s5222 = sphi 0, %s5355
                  %s5223 = sphi %s4998, %s5358
                  %s5224 = sphi %s5033, %s5359
                $region89: #{king_relative_nnue_forward.1} parent=85 // loop_header_branch
                  %5221 = sbr.rel (%p5218) target = $region93
                $region90: #{king_relative_nnue_forward.1} parent=85 // loop_body
                  %v5225 = vld [vmem:[%s5223] sm:$0xff]
                  %5226 = vst [vmem:[%s5224] sm:$0xff] %v5225
                  %v5227 = vld [vmem:[%s5223 + $0x8] sm:$0xff]
                  %5228 = vst [vmem:[%s5224 + $0x8] sm:$0xff] %v5227
                  %v5229 = vld [vmem:[%s5223 + $0x10] sm:$0xff]
                  %5230 = vst [vmem:[%s5224 + $0x10] sm:$0xff] %v5229
                  %v5231 = vld [vmem:[%s5223 + $0x18] sm:$0xff]
                  %5232 = vst [vmem:[%s5224 + $0x18] sm:$0xff] %v5231
                  %v5233 = vld [vmem:[%s5223 + $0x20] sm:$0xff]
                  %5234 = vst [vmem:[%s5224 + $0x20] sm:$0xff] %v5233
                  %v5235 = vld [vmem:[%s5223 + $0x28] sm:$0xff]
                  %5236 = vst [vmem:[%s5224 + $0x28] sm:$0xff] %v5235
                  %v5237 = vld [vmem:[%s5223 + $0x30] sm:$0xff]
                  %5238 = vst [vmem:[%s5224 + $0x30] sm:$0xff] %v5237
                  %v5239 = vld [vmem:[%s5223 + $0x38] sm:$0xff]
                  %5240 = vst [vmem:[%s5224 + $0x38] sm:$0xff] %v5239
                  %v5241 = vld [vmem:[%s5223 + $0x40] sm:$0xff]
                  %5242 = vst [vmem:[%s5224 + $0x40] sm:$0xff] %v5241
                  %v5243 = vld [vmem:[%s5223 + $0x48] sm:$0xff]
                  %5244 = vst [vmem:[%s5224 + $0x48] sm:$0xff] %v5243
                  %v5245 = vld [vmem:[%s5223 + $0x50] sm:$0xff]
                  %5246 = vst [vmem:[%s5224 + $0x50] sm:$0xff] %v5245
                  %v5247 = vld [vmem:[%s5223 + $0x58] sm:$0xff]
                  %5248 = vst [vmem:[%s5224 + $0x58] sm:$0xff] %v5247
                  %v5249 = vld [vmem:[%s5223 + $0x60] sm:$0xff]
                  %5250 = vst [vmem:[%s5224 + $0x60] sm:$0xff] %v5249
                  %v5251 = vld [vmem:[%s5223 + $0x68] sm:$0xff]
                  %5252 = vst [vmem:[%s5224 + $0x68] sm:$0xff] %v5251
                  %v5253 = vld [vmem:[%s5223 + $0x70] sm:$0xff]
                  %5254 = vst [vmem:[%s5224 + $0x70] sm:$0xff] %v5253
                  %v5255 = vld [vmem:[%s5223 + $0x78] sm:$0xff]
                  %5256 = vst [vmem:[%s5224 + $0x78] sm:$0xff] %v5255
                  %v5257 = vld [vmem:[%s5223 + $0x80] sm:$0xff]
                  %5258 = vst [vmem:[%s5224 + $0x80] sm:$0xff] %v5257
                  %v5259 = vld [vmem:[%s5223 + $0x88] sm:$0xff]
                  %5260 = vst [vmem:[%s5224 + $0x88] sm:$0xff] %v5259
                  %v5261 = vld [vmem:[%s5223 + $0x90] sm:$0xff]
                  %5262 = vst [vmem:[%s5224 + $0x90] sm:$0xff] %v5261
                  %v5263 = vld [vmem:[%s5223 + $0x98] sm:$0xff]
                  %5264 = vst [vmem:[%s5224 + $0x98] sm:$0xff] %v5263
                  %v5265 = vld [vmem:[%s5223 + $0xa0] sm:$0xff]
                  %5266 = vst [vmem:[%s5224 + $0xa0] sm:$0xff] %v5265
                  %v5267 = vld [vmem:[%s5223 + $0xa8] sm:$0xff]
                  %5268 = vst [vmem:[%s5224 + $0xa8] sm:$0xff] %v5267
                  %v5269 = vld [vmem:[%s5223 + $0xb0] sm:$0xff]
                  %5270 = vst [vmem:[%s5224 + $0xb0] sm:$0xff] %v5269
                  %v5271 = vld [vmem:[%s5223 + $0xb8] sm:$0xff]
                  %5272 = vst [vmem:[%s5224 + $0xb8] sm:$0xff] %v5271
                  %v5273 = vld [vmem:[%s5223 + $0xc0] sm:$0xff]
                  %5274 = vst [vmem:[%s5224 + $0xc0] sm:$0xff] %v5273
                  %v5275 = vld [vmem:[%s5223 + $0xc8] sm:$0xff]
                  %5276 = vst [vmem:[%s5224 + $0xc8] sm:$0xff] %v5275
                  %v5277 = vld [vmem:[%s5223 + $0xd0] sm:$0xff]
                  %5278 = vst [vmem:[%s5224 + $0xd0] sm:$0xff] %v5277
                  %v5279 = vld [vmem:[%s5223 + $0xd8] sm:$0xff]
                  %5280 = vst [vmem:[%s5224 + $0xd8] sm:$0xff] %v5279
                  %v5281 = vld [vmem:[%s5223 + $0xe0] sm:$0xff]
                  %5282 = vst [vmem:[%s5224 + $0xe0] sm:$0xff] %v5281
                  %v5283 = vld [vmem:[%s5223 + $0xe8] sm:$0xff]
                  %5284 = vst [vmem:[%s5224 + $0xe8] sm:$0xff] %v5283
                  %v5285 = vld [vmem:[%s5223 + $0xf0] sm:$0xff]
                  %5286 = vst [vmem:[%s5224 + $0xf0] sm:$0xff] %v5285
                  %v5287 = vld [vmem:[%s5223 + $0xf8] sm:$0xff]
                  %5288 = vst [vmem:[%s5224 + $0xf8] sm:$0xff] %v5287
                  %v5289 = vld [vmem:[%s5223 + $0x100] sm:$0xff]
                  %5290 = vst [vmem:[%s5224 + $0x100] sm:$0xff] %v5289
                  %v5291 = vld [vmem:[%s5223 + $0x108] sm:$0xff]
                  %5292 = vst [vmem:[%s5224 + $0x108] sm:$0xff] %v5291
                  %v5293 = vld [vmem:[%s5223 + $0x110] sm:$0xff]
                  %5294 = vst [vmem:[%s5224 + $0x110] sm:$0xff] %v5293
                  %v5295 = vld [vmem:[%s5223 + $0x118] sm:$0xff]
                  %5296 = vst [vmem:[%s5224 + $0x118] sm:$0xff] %v5295
                  %v5297 = vld [vmem:[%s5223 + $0x120] sm:$0xff]
                  %5298 = vst [vmem:[%s5224 + $0x120] sm:$0xff] %v5297
                  %v5299 = vld [vmem:[%s5223 + $0x128] sm:$0xff]
                  %5300 = vst [vmem:[%s5224 + $0x128] sm:$0xff] %v5299
                  %v5301 = vld [vmem:[%s5223 + $0x130] sm:$0xff]
                  %5302 = vst [vmem:[%s5224 + $0x130] sm:$0xff] %v5301
                  %v5303 = vld [vmem:[%s5223 + $0x138] sm:$0xff]
                  %5304 = vst [vmem:[%s5224 + $0x138] sm:$0xff] %v5303
                  %v5305 = vld [vmem:[%s5223 + $0x140] sm:$0xff]
                  %5306 = vst [vmem:[%s5224 + $0x140] sm:$0xff] %v5305
                  %v5307 = vld [vmem:[%s5223 + $0x148] sm:$0xff]
                  %5308 = vst [vmem:[%s5224 + $0x148] sm:$0xff] %v5307
                  %v5309 = vld [vmem:[%s5223 + $0x150] sm:$0xff]
                  %5310 = vst [vmem:[%s5224 + $0x150] sm:$0xff] %v5309
                  %v5311 = vld [vmem:[%s5223 + $0x158] sm:$0xff]
                  %5312 = vst [vmem:[%s5224 + $0x158] sm:$0xff] %v5311
                  %v5313 = vld [vmem:[%s5223 + $0x160] sm:$0xff]
                  %5314 = vst [vmem:[%s5224 + $0x160] sm:$0xff] %v5313
                  %v5315 = vld [vmem:[%s5223 + $0x168] sm:$0xff]
                  %5316 = vst [vmem:[%s5224 + $0x168] sm:$0xff] %v5315
                  %v5317 = vld [vmem:[%s5223 + $0x170] sm:$0xff]
                  %5318 = vst [vmem:[%s5224 + $0x170] sm:$0xff] %v5317
                  %v5319 = vld [vmem:[%s5223 + $0x178] sm:$0xff]
                  %5320 = vst [vmem:[%s5224 + $0x178] sm:$0xff] %v5319
                  %v5321 = vld [vmem:[%s5223 + $0x180] sm:$0xff]
                  %5322 = vst [vmem:[%s5224 + $0x180] sm:$0xff] %v5321
                  %v5323 = vld [vmem:[%s5223 + $0x188] sm:$0xff]
                  %5324 = vst [vmem:[%s5224 + $0x188] sm:$0xff] %v5323
                  %v5325 = vld [vmem:[%s5223 + $0x190] sm:$0xff]
                  %5326 = vst [vmem:[%s5224 + $0x190] sm:$0xff] %v5325
                  %v5327 = vld [vmem:[%s5223 + $0x198] sm:$0xff]
                  %5328 = vst [vmem:[%s5224 + $0x198] sm:$0xff] %v5327
                  %v5329 = vld [vmem:[%s5223 + $0x1a0] sm:$0xff]
                  %5330 = vst [vmem:[%s5224 + $0x1a0] sm:$0xff] %v5329
                  %v5331 = vld [vmem:[%s5223 + $0x1a8] sm:$0xff]
                  %5332 = vst [vmem:[%s5224 + $0x1a8] sm:$0xff] %v5331
                  %v5333 = vld [vmem:[%s5223 + $0x1b0] sm:$0xff]
                  %5334 = vst [vmem:[%s5224 + $0x1b0] sm:$0xff] %v5333
                  %v5335 = vld [vmem:[%s5223 + $0x1b8] sm:$0xff]
                  %5336 = vst [vmem:[%s5224 + $0x1b8] sm:$0xff] %v5335
                  %v5337 = vld [vmem:[%s5223 + $0x1c0] sm:$0xff]
                  %5338 = vst [vmem:[%s5224 + $0x1c0] sm:$0xff] %v5337
                  %v5339 = vld [vmem:[%s5223 + $0x1c8] sm:$0xff]
                  %5340 = vst [vmem:[%s5224 + $0x1c8] sm:$0xff] %v5339
                  %v5341 = vld [vmem:[%s5223 + $0x1d0] sm:$0xff]
                  %5342 = vst [vmem:[%s5224 + $0x1d0] sm:$0xff] %v5341
                  %v5343 = vld [vmem:[%s5223 + $0x1d8] sm:$0xff]
                  %5344 = vst [vmem:[%s5224 + $0x1d8] sm:$0xff] %v5343
                  %v5345 = vld [vmem:[%s5223 + $0x1e0] sm:$0xff]
                  %5346 = vst [vmem:[%s5224 + $0x1e0] sm:$0xff] %v5345
                  %v5347 = vld [vmem:[%s5223 + $0x1e8] sm:$0xff]
                  %5348 = vst [vmem:[%s5224 + $0x1e8] sm:$0xff] %v5347
                  %v5349 = vld [vmem:[%s5223 + $0x1f0] sm:$0xff]
                  %5350 = vst [vmem:[%s5224 + $0x1f0] sm:$0xff] %v5349
                  %v5351 = vld [vmem:[%s5223 + $0x1f8] sm:$0xff]
                  %5352 = vst [vmem:[%s5224 + $0x1f8] sm:$0xff] %v5351
                  %s5353 = sadd.s32 1, %s5222
                  %p5354 = scmp.ge.s32.totalorder %s5353, %s5215
                  %s5355 = scalar_select %p5354, 0, %s5353
                  %s5356 = smul.u32 %s5355, 512
                  %s5357 = smul.u32 %s5355, 512
                  %s5358 = scalar_lea.vmem %s4998, %s5356 [#allocation9]
                  %s5359 = scalar_lea.vmem %s5033, %s5357
                $region91: #{king_relative_nnue_forward.1} parent=85 // loop_footer
                  %s5219 = sadd.s32 %s5217, 1
                $region92: #{king_relative_nnue_forward.1} parent=85 // loop_footer_branch
                  %5216 = sbr.rel target = $region88
                $region93: #{king_relative_nnue_forward.1} parent=85 // loop_exit
                  _
                %s5360 = sshrl.u32 %s5029, 6
                %s5361 = sand.u32 %s5029, 63
                %s5362 = smul.u32 %s5360, 64
                %s5363 = smul.u32 8, %s5362
                %s5364 = scalar_lea.vmem %s4998, %s5363 [#allocation9]
                %s5365 = smul.u32 8, %s5362
                %s5366 = scalar_lea.vmem %s5033, %s5365
                // While loop
                $region94: #{king_relative_nnue_forward.1} parent=85 // loop_pre_header
                  _
                $region95: #{king_relative_nnue_forward.1} parent=85 // loop_header
                  %s5368 = sphi 0, %s5370
                  %p5369 = scmp.ge.s32.totalorder %s5368, %s5361
                  %s5373 = sphi 0, %s5380
                  %s5374 = sphi %s5364, %s5383
                  %s5375 = sphi %s5366, %s5384
                $region96: #{king_relative_nnue_forward.1} parent=85 // loop_header_branch
                  %5372 = sbr.rel (%p5369) target = $region100
                $region97: #{king_relative_nnue_forward.1} parent=85 // loop_body
                  %v5376 = vld [vmem:[%s5374] sm:$0xff]
                  %5377 = vst [vmem:[%s5375] sm:$0xff] %v5376
                  %s5378 = sadd.s32 1, %s5373
                  %p5379 = scmp.ge.s32.totalorder %s5378, %s5361
                  %s5380 = scalar_select %p5379, 0, %s5378
                  %s5381 = smul.u32 %s5380, 8
                  %s5382 = smul.u32 %s5380, 8
                  %s5383 = scalar_lea.vmem %s5364, %s5381 [#allocation9]
                  %s5384 = scalar_lea.vmem %s5366, %s5382
                $region98: #{king_relative_nnue_forward.1} parent=85 // loop_footer
                  %s5370 = sadd.s32 %s5368, 1
                $region99: #{king_relative_nnue_forward.1} parent=85 // loop_footer_branch
                  %5367 = sbr.rel target = $region95
                $region100: #{king_relative_nnue_forward.1} parent=85 // loop_exit
                  _
              $region86: #{king_relative_nnue_forward.1} parent=63 // pred_fallthru
                _
              // Predicated region
              $region101: #{king_relative_nnue_forward.1} parent=63 // pred_check
                _
              $region102: #{king_relative_nnue_forward.1} parent=63 // pred_check_branch
                %5386 = sbr.rel target = $region104
              $region103: #{king_relative_nnue_forward.1} parent=63 // pred_region
                _
              $region104: #{king_relative_nnue_forward.1} parent=63 // pred_fallthru
                _
            $region64: #{king_relative_nnue_forward.1} parent=59 // pred_fallthru
              _
            // Predicated region
            $region65: #{king_relative_nnue_forward.1} parent=59 // pred_check
              _
            $region66: #{king_relative_nnue_forward.1} parent=59 // pred_check_branch
              %5040 = sbr.rel target = $region68
            $region67: #{king_relative_nnue_forward.1} parent=59 // pred_region
              %s5042 = ssub.s32 256, 1
              %s5043 = sshrl.u32 %s5029, 6
              // While loop
              $region69: #{king_relative_nnue_forward.1} parent=67 // loop_pre_header
                _
              $region70: #{king_relative_nnue_forward.1} parent=67 // loop_header
                %s5045 = sphi 0, %s5047
                %p5046 = scmp.ge.s32.totalorder %s5045, %s5043
                %s5050 = sphi 0, %s5183
                %s5051 = sphi %s4998, %s5186
                %s5052 = sphi %s5033, %s5187
              $region71: #{king_relative_nnue_forward.1} parent=67 // loop_header_branch
                %5049 = sbr.rel (%p5046) target = $region75
              $region72: #{king_relative_nnue_forward.1} parent=67 // loop_body
                %v5053 = vld [vmem:[%s5051] sm:%s5042]
                %5054 = vst [vmem:[%s5052] sm:%s5042] %v5053
                %v5055 = vld [vmem:[%s5051 + $0x8] sm:%s5042]
                %5056 = vst [vmem:[%s5052 + $0x8] sm:%s5042] %v5055
                %v5057 = vld [vmem:[%s5051 + $0x10] sm:%s5042]
                %5058 = vst [vmem:[%s5052 + $0x10] sm:%s5042] %v5057
                %v5059 = vld [vmem:[%s5051 + $0x18] sm:%s5042]
                %5060 = vst [vmem:[%s5052 + $0x18] sm:%s5042] %v5059
                %v5061 = vld [vmem:[%s5051 + $0x20] sm:%s5042]
                %5062 = vst [vmem:[%s5052 + $0x20] sm:%s5042] %v5061
                %v5063 = vld [vmem:[%s5051 + $0x28] sm:%s5042]
                %5064 = vst [vmem:[%s5052 + $0x28] sm:%s5042] %v5063
                %v5065 = vld [vmem:[%s5051 + $0x30] sm:%s5042]
                %5066 = vst [vmem:[%s5052 + $0x30] sm:%s5042] %v5065
                %v5067 = vld [vmem:[%s5051 + $0x38] sm:%s5042]
                %5068 = vst [vmem:[%s5052 + $0x38] sm:%s5042] %v5067
                %v5069 = vld [vmem:[%s5051 + $0x40] sm:%s5042]
                %5070 = vst [vmem:[%s5052 + $0x40] sm:%s5042] %v5069
                %v5071 = vld [vmem:[%s5051 + $0x48] sm:%s5042]
                %5072 = vst [vmem:[%s5052 + $0x48] sm:%s5042] %v5071
                %v5073 = vld [vmem:[%s5051 + $0x50] sm:%s5042]
                %5074 = vst [vmem:[%s5052 + $0x50] sm:%s5042] %v5073
                %v5075 = vld [vmem:[%s5051 + $0x58] sm:%s5042]
                %5076 = vst [vmem:[%s5052 + $0x58] sm:%s5042] %v5075
                %v5077 = vld [vmem:[%s5051 + $0x60] sm:%s5042]
                %5078 = vst [vmem:[%s5052 + $0x60] sm:%s5042] %v5077
                %v5079 = vld [vmem:[%s5051 + $0x68] sm:%s5042]
                %5080 = vst [vmem:[%s5052 + $0x68] sm:%s5042] %v5079
                %v5081 = vld [vmem:[%s5051 + $0x70] sm:%s5042]
                %5082 = vst [vmem:[%s5052 + $0x70] sm:%s5042] %v5081
                %v5083 = vld [vmem:[%s5051 + $0x78] sm:%s5042]
                %5084 = vst [vmem:[%s5052 + $0x78] sm:%s5042] %v5083
                %v5085 = vld [vmem:[%s5051 + $0x80] sm:%s5042]
                %5086 = vst [vmem:[%s5052 + $0x80] sm:%s5042] %v5085
                %v5087 = vld [vmem:[%s5051 + $0x88] sm:%s5042]
                %5088 = vst [vmem:[%s5052 + $0x88] sm:%s5042] %v5087
                %v5089 = vld [vmem:[%s5051 + $0x90] sm:%s5042]
                %5090 = vst [vmem:[%s5052 + $0x90] sm:%s5042] %v5089
                %v5091 = vld [vmem:[%s5051 + $0x98] sm:%s5042]
                %5092 = vst [vmem:[%s5052 + $0x98] sm:%s5042] %v5091
                %v5093 = vld [vmem:[%s5051 + $0xa0] sm:%s5042]
                %5094 = vst [vmem:[%s5052 + $0xa0] sm:%s5042] %v5093
                %v5095 = vld [vmem:[%s5051 + $0xa8] sm:%s5042]
                %5096 = vst [vmem:[%s5052 + $0xa8] sm:%s5042] %v5095
                %v5097 = vld [vmem:[%s5051 + $0xb0] sm:%s5042]
                %5098 = vst [vmem:[%s5052 + $0xb0] sm:%s5042] %v5097
                %v5099 = vld [vmem:[%s5051 + $0xb8] sm:%s5042]
                %5100 = vst [vmem:[%s5052 + $0xb8] sm:%s5042] %v5099
                %v5101 = vld [vmem:[%s5051 + $0xc0] sm:%s5042]
                %5102 = vst [vmem:[%s5052 + $0xc0] sm:%s5042] %v5101
                %v5103 = vld [vmem:[%s5051 + $0xc8] sm:%s5042]
                %5104 = vst [vmem:[%s5052 + $0xc8] sm:%s5042] %v5103
                %v5105 = vld [vmem:[%s5051 + $0xd0] sm:%s5042]
                %5106 = vst [vmem:[%s5052 + $0xd0] sm:%s5042] %v5105
                %v5107 = vld [vmem:[%s5051 + $0xd8] sm:%s5042]
                %5108 = vst [vmem:[%s5052 + $0xd8] sm:%s5042] %v5107
                %v5109 = vld [vmem:[%s5051 + $0xe0] sm:%s5042]
                %5110 = vst [vmem:[%s5052 + $0xe0] sm:%s5042] %v5109
                %v5111 = vld [vmem:[%s5051 + $0xe8] sm:%s5042]
                %5112 = vst [vmem:[%s5052 + $0xe8] sm:%s5042] %v5111
                %v5113 = vld [vmem:[%s5051 + $0xf0] sm:%s5042]
                %5114 = vst [vmem:[%s5052 + $0xf0] sm:%s5042] %v5113
                %v5115 = vld [vmem:[%s5051 + $0xf8] sm:%s5042]
                %5116 = vst [vmem:[%s5052 + $0xf8] sm:%s5042] %v5115
                %v5117 = vld [vmem:[%s5051 + $0x100] sm:%s5042]
                %5118 = vst [vmem:[%s5052 + $0x100] sm:%s5042] %v5117
                %v5119 = vld [vmem:[%s5051 + $0x108] sm:%s5042]
                %5120 = vst [vmem:[%s5052 + $0x108] sm:%s5042] %v5119
                %v5121 = vld [vmem:[%s5051 + $0x110] sm:%s5042]
                %5122 = vst [vmem:[%s5052 + $0x110] sm:%s5042] %v5121
                %v5123 = vld [vmem:[%s5051 + $0x118] sm:%s5042]
                %5124 = vst [vmem:[%s5052 + $0x118] sm:%s5042] %v5123
                %v5125 = vld [vmem:[%s5051 + $0x120] sm:%s5042]
                %5126 = vst [vmem:[%s5052 + $0x120] sm:%s5042] %v5125
                %v5127 = vld [vmem:[%s5051 + $0x128] sm:%s5042]
                %5128 = vst [vmem:[%s5052 + $0x128] sm:%s5042] %v5127
                %v5129 = vld [vmem:[%s5051 + $0x130] sm:%s5042]
                %5130 = vst [vmem:[%s5052 + $0x130] sm:%s5042] %v5129
                %v5131 = vld [vmem:[%s5051 + $0x138] sm:%s5042]
                %5132 = vst [vmem:[%s5052 + $0x138] sm:%s5042] %v5131
                %v5133 = vld [vmem:[%s5051 + $0x140] sm:%s5042]
                %5134 = vst [vmem:[%s5052 + $0x140] sm:%s5042] %v5133
                %v5135 = vld [vmem:[%s5051 + $0x148] sm:%s5042]
                %5136 = vst [vmem:[%s5052 + $0x148] sm:%s5042] %v5135
                %v5137 = vld [vmem:[%s5051 + $0x150] sm:%s5042]
                %5138 = vst [vmem:[%s5052 + $0x150] sm:%s5042] %v5137
                %v5139 = vld [vmem:[%s5051 + $0x158] sm:%s5042]
                %5140 = vst [vmem:[%s5052 + $0x158] sm:%s5042] %v5139
                %v5141 = vld [vmem:[%s5051 + $0x160] sm:%s5042]
                %5142 = vst [vmem:[%s5052 + $0x160] sm:%s5042] %v5141
                %v5143 = vld [vmem:[%s5051 + $0x168] sm:%s5042]
                %5144 = vst [vmem:[%s5052 + $0x168] sm:%s5042] %v5143
                %v5145 = vld [vmem:[%s5051 + $0x170] sm:%s5042]
                %5146 = vst [vmem:[%s5052 + $0x170] sm:%s5042] %v5145
                %v5147 = vld [vmem:[%s5051 + $0x178] sm:%s5042]
                %5148 = vst [vmem:[%s5052 + $0x178] sm:%s5042] %v5147
                %v5149 = vld [vmem:[%s5051 + $0x180] sm:%s5042]
                %5150 = vst [vmem:[%s5052 + $0x180] sm:%s5042] %v5149
                %v5151 = vld [vmem:[%s5051 + $0x188] sm:%s5042]
                %5152 = vst [vmem:[%s5052 + $0x188] sm:%s5042] %v5151
                %v5153 = vld [vmem:[%s5051 + $0x190] sm:%s5042]
                %5154 = vst [vmem:[%s5052 + $0x190] sm:%s5042] %v5153
                %v5155 = vld [vmem:[%s5051 + $0x198] sm:%s5042]
                %5156 = vst [vmem:[%s5052 + $0x198] sm:%s5042] %v5155
                %v5157 = vld [vmem:[%s5051 + $0x1a0] sm:%s5042]
                %5158 = vst [vmem:[%s5052 + $0x1a0] sm:%s5042] %v5157
                %v5159 = vld [vmem:[%s5051 + $0x1a8] sm:%s5042]
                %5160 = vst [vmem:[%s5052 + $0x1a8] sm:%s5042] %v5159
                %v5161 = vld [vmem:[%s5051 + $0x1b0] sm:%s5042]
                %5162 = vst [vmem:[%s5052 + $0x1b0] sm:%s5042] %v5161
                %v5163 = vld [vmem:[%s5051 + $0x1b8] sm:%s5042]
                %5164 = vst [vmem:[%s5052 + $0x1b8] sm:%s5042] %v5163
                %v5165 = vld [vmem:[%s5051 + $0x1c0] sm:%s5042]
                %5166 = vst [vmem:[%s5052 + $0x1c0] sm:%s5042] %v5165
                %v5167 = vld [vmem:[%s5051 + $0x1c8] sm:%s5042]
                %5168 = vst [vmem:[%s5052 + $0x1c8] sm:%s5042] %v5167
                %v5169 = vld [vmem:[%s5051 + $0x1d0] sm:%s5042]
                %5170 = vst [vmem:[%s5052 + $0x1d0] sm:%s5042] %v5169
                %v5171 = vld [vmem:[%s5051 + $0x1d8] sm:%s5042]
                %5172 = vst [vmem:[%s5052 + $0x1d8] sm:%s5042] %v5171
                %v5173 = vld [vmem:[%s5051 + $0x1e0] sm:%s5042]
                %5174 = vst [vmem:[%s5052 + $0x1e0] sm:%s5042] %v5173
                %v5175 = vld [vmem:[%s5051 + $0x1e8] sm:%s5042]
                %5176 = vst [vmem:[%s5052 + $0x1e8] sm:%s5042] %v5175
                %v5177 = vld [vmem:[%s5051 + $0x1f0] sm:%s5042]
                %5178 = vst [vmem:[%s5052 + $0x1f0] sm:%s5042] %v5177
                %v5179 = vld [vmem:[%s5051 + $0x1f8] sm:%s5042]
                %5180 = vst [vmem:[%s5052 + $0x1f8] sm:%s5042] %v5179
                %s5181 = sadd.s32 1, %s5050
                %p5182 = scmp.ge.s32.totalorder %s5181, %s5043
                %s5183 = scalar_select %p5182, 0, %s5181
                %s5184 = smul.u32 %s5183, 512
                %s5185 = smul.u32 %s5183, 512
                %s5186 = scalar_lea.vmem %s4998, %s5184 [#allocation9]
                %s5187 = scalar_lea.vmem %s5033, %s5185
              $region73: #{king_relative_nnue_forward.1} parent=67 // loop_footer
                %s5047 = sadd.s32 %s5045, 1
              $region74: #{king_relative_nnue_forward.1} parent=67 // loop_footer_branch
                %5044 = sbr.rel target = $region70
              $region75: #{king_relative_nnue_forward.1} parent=67 // loop_exit
                _
              %s5188 = sshrl.u32 %s5029, 6
              %s5189 = sand.u32 %s5029, 63
              %s5190 = smul.u32 %s5188, 64
              %s5191 = smul.u32 8, %s5190
              %s5192 = scalar_lea.vmem %s4998, %s5191 [#allocation9]
              %s5193 = smul.u32 8, %s5190
              %s5194 = scalar_lea.vmem %s5033, %s5193
              // While loop
              $region76: #{king_relative_nnue_forward.1} parent=67 // loop_pre_header
                _
              $region77: #{king_relative_nnue_forward.1} parent=67 // loop_header
                %s5196 = sphi 0, %s5198
                %p5197 = scmp.ge.s32.totalorder %s5196, %s5189
                %s5201 = sphi 0, %s5208
                %s5202 = sphi %s5192, %s5211
                %s5203 = sphi %s5194, %s5212
              $region78: #{king_relative_nnue_forward.1} parent=67 // loop_header_branch
                %5200 = sbr.rel (%p5197) target = $region82
              $region79: #{king_relative_nnue_forward.1} parent=67 // loop_body
                %v5204 = vld [vmem:[%s5202] sm:%s5042]
                %5205 = vst [vmem:[%s5203] sm:%s5042] %v5204
                %s5206 = sadd.s32 1, %s5201
                %p5207 = scmp.ge.s32.totalorder %s5206, %s5189
                %s5208 = scalar_select %p5207, 0, %s5206
                %s5209 = smul.u32 %s5208, 8
                %s5210 = smul.u32 %s5208, 8
                %s5211 = scalar_lea.vmem %s5192, %s5209 [#allocation9]
                %s5212 = scalar_lea.vmem %s5194, %s5210
              $region80: #{king_relative_nnue_forward.1} parent=67 // loop_footer
                %s5198 = sadd.s32 %s5196, 1
              $region81: #{king_relative_nnue_forward.1} parent=67 // loop_footer_branch
                %5195 = sbr.rel target = $region77
              $region82: #{king_relative_nnue_forward.1} parent=67 // loop_exit
                _
            $region68: #{king_relative_nnue_forward.1} parent=59 // pred_fallthru
              _
          $region60: #{king_relative_nnue_forward.1} parent=55 // pred_fallthru
            _
          %5387 = vnop
        $region56: #{king_relative_nnue_forward.1} parent=39 // pred_fallthru
          _
      $region40: #{king_relative_nnue_forward.1} parent=5 // pred_fallthru
        _
      %p5388 = scmp.le.s32.totalorder 2, %s21
      // Predicated region
      $region105: #{king_relative_nnue_forward.1} parent=5 // pred_check
        %p5389 = pneg %p5388
      $region106: #{king_relative_nnue_forward.1} parent=5 // pred_check_branch
        %5391 = sbr.rel (%p5389) target = $region108
      $region107: #{king_relative_nnue_forward.1} parent=5 // pred_region
        %s5392 = ssub.s32 %s21, 2
        // Predicated region
        $region109: #{king_relative_nnue_forward.1} parent=107 // pred_check
          %p5393 = pneg %p160
        $region110: #{king_relative_nnue_forward.1} parent=107 // pred_check_branch
          %5395 = sbr.rel (%p5393) target = $region112
        $region111: #{king_relative_nnue_forward.1} parent=107 // pred_region
          %s5396 = sand.u32 %s145, 1
          %s5397 = scalar_lea.sflag [#allocation5], %s5396
          %s5398 = sand.u32 %s145, 1
          %s5399 = smul.addr %s5398, 512
          %s5400 = scalar_lea.vmem [#allocation8], %s5399
          %5401 = dma.done %s5397, 8192
        $region112: #{king_relative_nnue_forward.1} parent=107 // pred_fallthru
          _
        // Predicated region
        $region113: #{king_relative_nnue_forward.1} parent=107 // pred_check
          %p5402 = pneg %p186
        $region114: #{king_relative_nnue_forward.1} parent=107 // pred_check_branch
          %5404 = sbr.rel (%p5402) target = $region116
        $region115: #{king_relative_nnue_forward.1} parent=107 // pred_region
          %s5405 = sand.u32 %s171, 1
          %s5406 = sand.u32 %s171, 1
          %s5407 = smul.addr %s5406, 512
          %s5408 = scalar_lea.vmem [#allocation9], %s5407
        $region116: #{king_relative_nnue_forward.1} parent=107 // pred_fallthru
          _
      $region108: #{king_relative_nnue_forward.1} parent=5 // pred_fallthru
        _
    $region6: #{king_relative_nnue_forward.1} parent=1 // loop_footer
      %s25 = sadd.s32 1, %s21
    $region7: #{king_relative_nnue_forward.1} parent=1 // loop_footer_branch
      %20 = sbr.rel target = $region3
    $region8: #{king_relative_nnue_forward.1} parent=1 // loop_exit
      _
    %5409 = vsyncpa [#allocation4], 1
    %s5410 = scalar_lea.sflag [#allocation4], 1
    %5411 = vsyncpa %s5410, 1
    %5412 = vsyncpa [#allocation7], 1
    %5413 = vsyncpa [#allocation5], 1
    %s5414 = scalar_lea.sflag [#allocation5], 1
    %5415 = vsyncpa %s5414, 1

</llo_original>
